<compile_context>
chip_gen: v7x
topology: tpu7x:2x2x1
jax: 0.10.0
libtpu: 0.0.40
codegen_flags: <defaults>
</compile_context>

<pallas_src>
import functools

import jax
import jax.numpy as jnp
import numpy as np
from jax import lax
from jax.experimental import pallas as pl
from jax.experimental.pallas import tpu as pltpu

BN_EPS = 1e-5


# ---------------------------------------------------------------------------
# Parameters: synthetic init (PyTorch layout) + one-time kernel-layout prep.
# ---------------------------------------------------------------------------

def init_protein_cnn_params(key, embedding_dim, num_filters, kernel_size):
    """Deterministic synthetic parameters matching the PyTorch module's shapes."""
    in_ch = [embedding_dim] + list(num_filters)
    layer_dims = [
        (1280,     in_ch[1], kernel_size[0]),   # conv1: in_channels hardcoded to 1280
        (in_ch[1], in_ch[2], kernel_size[1]),
        (in_ch[2], in_ch[3], kernel_size[2]),
    ]
    params = []
    for (ci, co, k) in layer_dims:
        key, k1, k2, k3, k4, k5, k6 = jax.random.split(key, 7)
        bound = 1.0 / np.sqrt(ci * k)
        params.append(dict(
            w=jax.random.uniform(k1, (co, ci, k), jnp.float32, -bound, bound),  # (Co,Ci,K)
            b=jax.random.uniform(k2, (co,), jnp.float32, -bound, bound),
            gamma=1.0 + 0.1 * jax.random.normal(k3, (co,), jnp.float32),
            beta=0.1 * jax.random.normal(k4, (co,), jnp.float32),
            mean=0.1 * jax.random.normal(k5, (co,), jnp.float32),
            var=jnp.abs(1.0 + 0.1 * jax.random.normal(k6, (co,), jnp.float32)),
        ))
    return params


def prepare_params(params):
    """One-time prep (hoisted out of the hot path):
       - conv weights flattened to the im2col layout (K*C_in, C_out) in bf16,
       - BN running stats folded to an affine scale/shift,
       - conv bias / BN scale / BN shift stacked into one (3, C_out) f32 operand."""
    prepped = []
    for p in params:
        w = jnp.asarray(p["w"], jnp.float32)             # PyTorch (C_out, C_in, K)
        c_out, c_in, k = (int(d) for d in w.shape)
        w_kio = jnp.transpose(w, (2, 1, 0))              # (K, C_in, C_out)
        w_flat = w_kio.reshape(k * c_in, c_out)          # row k*C_in+ci = tap k, chan ci

        scale = p["gamma"] * lax.rsqrt(p["var"] + BN_EPS)
        shift = p["beta"] - p["mean"] * scale
        eps = jnp.stack([p["b"], scale, shift], axis=0)  # (3, C_out)

        prepped.append(dict(
            K=k, c_in=c_in, c_out=c_out,
            w=w_flat.astype(jnp.bfloat16),
            eps=eps.astype(jnp.float32),
        ))
    return prepped


# ---------------------------------------------------------------------------
# Fused kernel: (im2col conv + bias + ReLU + BN) x3 in one pallas_call body.
# ---------------------------------------------------------------------------

def _make_kernel(layer_ks):
    """layer_ks: static tuple of conv kernel sizes, one per layer."""
    n_layers = len(layer_ks)

    def kernel(x_ref, *refs):
        o_ref = refs[-1]
        prefs = refs[:-1]                     # [w_0, eps_0, w_1, eps_1, ...]
        m = x_ref.shape[0]                    # static tile rows (bt * seq_len)

        act_bf = x_ref[...]                   # bf16 (m, C_in0): MXU operand
        act32 = act_bf.astype(jnp.float32)    # f32 copy for robust sublane rolls
        out = None
        for li, K in enumerate(layer_ks):
            w_ref = prefs[2 * li]             # (K*C_in, C_out) bf16, im2col layout
            e_ref = prefs[2 * li + 1]         # (3, C_out) f32: bias / BN scale / BN shift

            # im2col LHS: lane-block k holds the activation shifted UP by k rows,
            #   lhs[r, k*C_in + ci] = act[(r + k) % m, ci].
            # pltpu.roll follows jnp.roll semantics, so shift = m - k.  Shifts run
            # on the XLU (never the MXU), and rows that wrap around the tile or
            # cross into the next batch element only ever feed output rows inside
            # the valid-conv shrinkage region (each layer shrinks the valid length
            # by exactly its tap reach K-1); the wrapper slices those rows off.
            pieces = [act_bf]
            for k in range(1, K):
                pieces.append(
                    pltpu.roll(act32, shift=m - k, axis=0).astype(jnp.bfloat16))
            lhs = pieces[0] if K == 1 else jnp.concatenate(pieces, axis=-1)

            # One deep MXU matmul per layer (f32 accumulation).
            acc = jnp.dot(lhs, w_ref[...], preferred_element_type=jnp.float32)

            # conv bias + ReLU + eval-mode BatchNorm affine, all f32 on the VPU.
            e = e_ref[...]
            out = jnp.maximum(acc + e[0:1, :], 0.0) * e[1:2, :] + e[2:3, :]

            if li + 1 < n_layers:
                act32 = out                              # f32 for the next rolls
                act_bf = out.astype(jnp.bfloat16)        # bf16 MXU operand, no HBM trip

        o_ref[...] = out.astype(o_ref.dtype)

    return kernel


def _pick_batch_tile(batch, seq_len, target_rows=512):
    """Rows per grid step = bt * seq_len.  Pick the SMALLEST bt (dividing batch,
    16-row aligned) that gives the MXU at least `target_rows` LHS rows per step.
    If no split reaches that, keep the whole batch in ONE tile — never force-split
    a tiny problem across grid steps / TensorCores (per-step overhead and MXU row
    under-utilization cost more than megacore parallelism returns)."""
    for bt in range(1, batch):
        m = bt * seq_len
        if batch % bt == 0 and m % 16 == 0 and m >= target_rows:
            return bt
    return batch      # single block == full array dims (always a legal BlockSpec)


def protein_cnn_forward(v, prepped, *, target_rows=512):
    """Fused Pallas forward of ProteinCNN for 3-D input (B, L, embedding_dim)."""
    v = jnp.asarray(v, jnp.float32)
    assert v.ndim == 3  # TODO(synk): 2-D input branch (v.unsqueeze(-1)) not implemented
    batch, seq_len, c_in0 = v.shape
    assert c_in0 == prepped[0]["c_in"], "conv1 hardcodes 1280 input channels"

    shrink = sum(p["K"] - 1 for p in prepped)
    l_out = seq_len - shrink
    assert l_out >= 1, "sequence shorter than the total conv footprint"
    c_out = prepped[-1]["c_out"]

    bt = _pick_batch_tile(batch, seq_len, target_rows)
    grid_b = batch // bt
    m = bt * seq_len

    x_flat = v.reshape(batch * seq_len, c_in0).astype(jnp.bfloat16)

    def const_map(ndim):
        zeros = (0,) * ndim
        return lambda i: zeros

    inputs = [x_flat]
    in_specs = [pl.BlockSpec((m, c_in0), lambda i: (i, 0))]
    layer_ks = []
    for p in prepped:
        for a in (p["w"], p["eps"]):
            inputs.append(a)
            # Constant index_map -> fetched into VMEM once, reused across the grid.
            # (pipeline_mode=pl.Buffered(1) would single-buffer them and save
            #  ~1.5 MiB more; kept on the battle-tested default here.)
            in_specs.append(pl.BlockSpec(a.shape, const_map(a.ndim)))
        layer_ks.append(p["K"])

    # Advisory cost hint for XLA's scheduler.
    flops = sum(2 * batch * seq_len * p["K"] * p["c_in"] * p["c_out"] for p in prepped)
    param_bytes = sum(int(a.size) * a.dtype.itemsize for a in inputs[1:])
    bytes_accessed = int(x_flat.size) * 2 + param_bytes + batch * seq_len * c_out * 4

    # Precise VMEM plan: x/out blocks double-buffered, params double-buffered
    # (fetched once), plus the largest per-layer im2col temporaries.  Capped at
    # 48 MiB so v7x's 64 MiB physical VMEM keeps headroom for Mosaic scratch.
    x_block, out_block = m * c_in0 * 2, m * c_out * 4
    temp = 0
    for p in prepped:
        temp = max(temp, m * p["K"] * p["c_in"] * 2      # bf16 im2col LHS
                   + 2 * m * p["c_in"] * 4               # f32 act + one rolled copy
                   + m * p["c_out"] * 4)                 # f32 accumulator
    need = 2 * (x_block + out_block) + 2 * param_bytes + temp + (4 << 20)
    if need > (48 << 20):
        # TODO(synk): L-tiled grid with a sum(K_i-1)-row halo for long sequences.
        raise NotImplementedError("sequence too long for a single L block per tile")
    vmem_limit = int(min(48 << 20, max(need, 32 << 20)))

    out_flat = pl.pallas_call(
        _make_kernel(tuple(layer_ks)),
        out_shape=jax.ShapeDtypeStruct((batch * seq_len, c_out), jnp.float32),
        grid_spec=pltpu.PrefetchScalarGridSpec(
            num_scalar_prefetch=0,
            grid=(grid_b,),
            in_specs=in_specs,
            out_specs=pl.BlockSpec((m, c_out), lambda i: (i, 0)),
        ),
        compiler_params=pltpu.CompilerParams(
            dimension_semantics=("parallel",),
            vmem_limit_bytes=vmem_limit,
        ),
        cost_estimate=pl.CostEstimate(
            flops=int(flops), transcendentals=0, bytes_accessed=int(bytes_accessed)),
    )(*inputs)

    # Per-batch rows [l_out, seq_len) are garbage from the valid-conv shrinkage
    # (this is exactly where roll-wraparound / cross-batch rows land) — drop them.
    x3 = out_flat.reshape(batch, seq_len, c_out)[:, :l_out, :]
    # Reproduce PyTorch's `v.view(B, L, -1)` applied to the NCL-contiguous tensor:
    # transpose back to NCL, then raw reshape (a pure memory reinterpretation,
    # exactly as the PyTorch module does).
    return jnp.reshape(jnp.transpose(x3, (0, 2, 1)), (batch, l_out, c_out))


# ---------------------------------------------------------------------------
# Pure-JAX f32 reference with identical semantics, for correctness checking.
# ---------------------------------------------------------------------------

def reference_forward(v, params):
    x = jnp.asarray(v, jnp.float32)
    for p in params:
        K = p["w"].shape[2]
        L_out = x.shape[1] - K + 1
        w_kio = jnp.transpose(p["w"], (2, 1, 0))
        acc = sum(x[:, k:k + L_out, :] @ w_kio[k] for k in range(K)) + p["b"]
        acc = jnp.maximum(acc, 0.0)
        scale = p["gamma"] / jnp.sqrt(p["var"] + BN_EPS)
        shift = p["beta"] - p["mean"] * scale
        x = acc * scale + shift
    B, L3, C3 = x.shape
    return jnp.reshape(jnp.transpose(x, (0, 2, 1)), (B, L3, C3))


if __name__ == "__main__":
    key = jax.random.PRNGKey(0)
    emb = 1280                               # conv1 hardcodes 1280 input channels
    num_filters = [128, 128, 128]
    kernel_size = [3, 6, 9]

    kp, kx1, kx2 = jax.random.split(key, 3)
    params = init_protein_cnn_params(kp, emb, num_filters, kernel_size)
    prepped = prepare_params(params)         # one-time layout/BN-fold prep

    l_out = 32 - sum(k - 1 for k in kernel_size)     # 32 - 2 - 5 - 8 = 17

    # Case 1: small batch -> whole batch in one M tile, single grid step.
    v1 = jax.random.normal(kx1, (2, 32, emb), jnp.float32)
    fwd1 = jax.jit(functools.partial(protein_cnn_forward, prepped=prepped))
    out1 = jax.block_until_ready(fwd1(v1))
    ref1 = reference_forward(v1, params)
    assert out1.shape == (2, l_out, num_filters[-1]), out1.shape
    # bf16 matmul operands (f32 accumulation/epilogue) -> looser tolerance than f32.
    np.testing.assert_allclose(np.asarray(out1), np.asarray(ref1), rtol=2e-2, atol=2e-2)

    # Case 2 (review's correctness concern): several batch elements packed per M
    # tile AND >1 grid step, exercising the cross-batch / wraparound shrinkage
    # invariant of the rolled im2col (batch=8, bt=4 -> m=128, grid=2).
    v2 = jax.random.normal(kx2, (8, 32, emb), jnp.float32)
    fwd2 = jax.jit(functools.partial(protein_cnn_forward, prepped=prepped,
                                     target_rows=128))
    out2 = jax.block_until_ready(fwd2(v2))
    ref2 = reference_forward(v2, params)
    assert out2.shape == (8, l_out, num_filters[-1]), out2.shape
    np.testing.assert_allclose(np.asarray(out2), np.asarray(ref2), rtol=2e-2, atol=2e-2)

    print("KERNEL_OK")
</pallas_src>

<mosaic_0001>
module attributes {stable_mosaic.version = 11 : i64} {
  func.func @kernel(%arg0: i32, %arg1: memref<64x1280xbf16, #tpu.memory_space<vmem>>, %arg2: memref<3840x128xbf16, #tpu.memory_space<vmem>>, %arg3: memref<3x128xf32, #tpu.memory_space<vmem>>, %arg4: memref<768x128xbf16, #tpu.memory_space<vmem>>, %arg5: memref<3x128xf32, #tpu.memory_space<vmem>>, %arg6: memref<1152x128xbf16, #tpu.memory_space<vmem>>, %arg7: memref<3x128xf32, #tpu.memory_space<vmem>>, %arg8: memref<64x128xf32, #tpu.memory_space<vmem>>) attributes {dimension_semantics = [#tpu.dimension_semantics<parallel>], iteration_bounds = array<i64: 1>, scalar_prefetch = 0 : i64, scratch_operands = 0 : i64, tpu.core_type = #tpu.core_type<tc>, window_params = [{transform_indices = @transform_0, window_bounds = array<i64: 64, 1280>}, {pipeline_mode = #tpu.pipeline_mode<synchronous>, transform_indices = @transform_1, window_bounds = array<i64: 3840, 128>}, {pipeline_mode = #tpu.pipeline_mode<synchronous>, transform_indices = @transform_2, window_bounds = array<i64: 3, 128>}, {pipeline_mode = #tpu.pipeline_mode<synchronous>, transform_indices = @transform_3, window_bounds = array<i64: 768, 128>}, {pipeline_mode = #tpu.pipeline_mode<synchronous>, transform_indices = @transform_4, window_bounds = array<i64: 3, 128>}, {pipeline_mode = #tpu.pipeline_mode<synchronous>, transform_indices = @transform_5, window_bounds = array<i64: 1152, 128>}, {pipeline_mode = #tpu.pipeline_mode<synchronous>, transform_indices = @transform_6, window_bounds = array<i64: 3, 128>}, {transform_indices = @transform_7, window_bounds = array<i64: 64, 128>}]} {
    %c0 = arith.constant 0 : index
    %c0_0 = arith.constant 0 : index
    %0 = vector.load %arg1[%c0, %c0_0] : memref<64x1280xbf16, #tpu.memory_space<vmem>>, vector<64x1280xbf16>
    %1 = arith.extf %0 : vector<64x1280xbf16> to vector<64x1280xf32>
    %c63_i32 = arith.constant 63 : i32
    %2 = tpu.dynamic_rotate %1 by %c63_i32 dim 0 : vector<64x1280xf32>, i32 -> vector<64x1280xf32>
    %3 = arith.truncf %2 : vector<64x1280xf32> to vector<64x1280xbf16>
    %c62_i32 = arith.constant 62 : i32
    %4 = tpu.dynamic_rotate %1 by %c62_i32 dim 0 : vector<64x1280xf32>, i32 -> vector<64x1280xf32>
    %5 = arith.truncf %4 : vector<64x1280xf32> to vector<64x1280xbf16>
    %6 = tpu.concatenate %0, %3, %5 in 1 : vector<64x1280xbf16>, vector<64x1280xbf16>, vector<64x1280xbf16> -> vector<64x3840xbf16>
    %c0_1 = arith.constant 0 : index
    %c0_2 = arith.constant 0 : index
    %7 = vector.load %arg2[%c0_1, %c0_2] : memref<3840x128xbf16, #tpu.memory_space<vmem>>, vector<3840x128xbf16>
    %cst = arith.constant dense<0.000000e+00> : vector<64x128xf32>
    %8 = tpu.matmul %6, %7, %cst {dimension_numbers = #tpu.dot_dimension_numbers<[1], [0], [0], [1], [0, 0, 1, 1], [], []>} : vector<64x3840xbf16>, vector<3840x128xbf16>, vector<64x128xf32> -> vector<64x128xf32>
    %c0_3 = arith.constant 0 : index
    %c0_4 = arith.constant 0 : index
    %9 = vector.load %arg3[%c0_3, %c0_4] : memref<3x128xf32, #tpu.memory_space<vmem>>, vector<3x128xf32>
    %10 = vector.extract_strided_slice %9 {offsets = [0, 0], sizes = [1, 128], strides = [1, 1]} : vector<3x128xf32> to vector<1x128xf32>
    %11 = vector.broadcast %10 : vector<1x128xf32> to vector<64x128xf32>
    %12 = arith.addf %8, %11 : vector<64x128xf32>
    %cst_5 = arith.constant 0.000000e+00 : f32
    %13 = vector.broadcast %cst_5 : f32 to vector<64x128xf32>
    %14 = arith.maximumf %12, %13 : vector<64x128xf32>
    %15 = vector.extract_strided_slice %9 {offsets = [1, 0], sizes = [1, 128], strides = [1, 1]} : vector<3x128xf32> to vector<1x128xf32>
    %16 = vector.broadcast %15 : vector<1x128xf32> to vector<64x128xf32>
    %17 = arith.mulf %14, %16 : vector<64x128xf32>
    %18 = vector.extract_strided_slice %9 {offsets = [2, 0], sizes = [1, 128], strides = [1, 1]} : vector<3x128xf32> to vector<1x128xf32>
    %19 = vector.broadcast %18 : vector<1x128xf32> to vector<64x128xf32>
    %20 = arith.addf %17, %19 : vector<64x128xf32>
    %21 = arith.truncf %20 : vector<64x128xf32> to vector<64x128xbf16>
    %c63_i32_6 = arith.constant 63 : i32
    %22 = tpu.dynamic_rotate %20 by %c63_i32_6 dim 0 : vector<64x128xf32>, i32 -> vector<64x128xf32>
    %23 = arith.truncf %22 : vector<64x128xf32> to vector<64x128xbf16>
    %c62_i32_7 = arith.constant 62 : i32
    %24 = tpu.dynamic_rotate %20 by %c62_i32_7 dim 0 : vector<64x128xf32>, i32 -> vector<64x128xf32>
    %25 = arith.truncf %24 : vector<64x128xf32> to vector<64x128xbf16>
    %c61_i32 = arith.constant 61 : i32
    %26 = tpu.dynamic_rotate %20 by %c61_i32 dim 0 : vector<64x128xf32>, i32 -> vector<64x128xf32>
    %27 = arith.truncf %26 : vector<64x128xf32> to vector<64x128xbf16>
    %c60_i32 = arith.constant 60 : i32
    %28 = tpu.dynamic_rotate %20 by %c60_i32 dim 0 : vector<64x128xf32>, i32 -> vector<64x128xf32>
    %29 = arith.truncf %28 : vector<64x128xf32> to vector<64x128xbf16>
    %c59_i32 = arith.constant 59 : i32
    %30 = tpu.dynamic_rotate %20 by %c59_i32 dim 0 : vector<64x128xf32>, i32 -> vector<64x128xf32>
    %31 = arith.truncf %30 : vector<64x128xf32> to vector<64x128xbf16>
    %32 = tpu.concatenate %21, %23, %25, %27, %29, %31 in 1 : vector<64x128xbf16>, vector<64x128xbf16>, vector<64x128xbf16>, vector<64x128xbf16>, vector<64x128xbf16>, vector<64x128xbf16> -> vector<64x768xbf16>
    %c0_8 = arith.constant 0 : index
    %c0_9 = arith.constant 0 : index
    %33 = vector.load %arg4[%c0_8, %c0_9] : memref<768x128xbf16, #tpu.memory_space<vmem>>, vector<768x128xbf16>
    %cst_10 = arith.constant dense<0.000000e+00> : vector<64x128xf32>
    %34 = tpu.matmul %32, %33, %cst_10 {dimension_numbers = #tpu.dot_dimension_numbers<[1], [0], [0], [1], [0, 0, 1, 1], [], []>} : vector<64x768xbf16>, vector<768x128xbf16>, vector<64x128xf32> -> vector<64x128xf32>
    %c0_11 = arith.constant 0 : index
    %c0_12 = arith.constant 0 : index
    %35 = vector.load %arg5[%c0_11, %c0_12] : memref<3x128xf32, #tpu.memory_space<vmem>>, vector<3x128xf32>
    %36 = vector.extract_strided_slice %35 {offsets = [0, 0], sizes = [1, 128], strides = [1, 1]} : vector<3x128xf32> to vector<1x128xf32>
    %37 = vector.broadcast %36 : vector<1x128xf32> to vector<64x128xf32>
    %38 = arith.addf %34, %37 : vector<64x128xf32>
    %cst_13 = arith.constant 0.000000e+00 : f32
    %39 = vector.broadcast %cst_13 : f32 to vector<64x128xf32>
    %40 = arith.maximumf %38, %39 : vector<64x128xf32>
    %41 = vector.extract_strided_slice %35 {offsets = [1, 0], sizes = [1, 128], strides = [1, 1]} : vector<3x128xf32> to vector<1x128xf32>
    %42 = vector.broadcast %41 : vector<1x128xf32> to vector<64x128xf32>
    %43 = arith.mulf %40, %42 : vector<64x128xf32>
    %44 = vector.extract_strided_slice %35 {offsets = [2, 0], sizes = [1, 128], strides = [1, 1]} : vector<3x128xf32> to vector<1x128xf32>
    %45 = vector.broadcast %44 : vector<1x128xf32> to vector<64x128xf32>
    %46 = arith.addf %43, %45 : vector<64x128xf32>
    %47 = arith.truncf %46 : vector<64x128xf32> to vector<64x128xbf16>
    %c63_i32_14 = arith.constant 63 : i32
    %48 = tpu.dynamic_rotate %46 by %c63_i32_14 dim 0 : vector<64x128xf32>, i32 -> vector<64x128xf32>
    %49 = arith.truncf %48 : vector<64x128xf32> to vector<64x128xbf16>
    %c62_i32_15 = arith.constant 62 : i32
    %50 = tpu.dynamic_rotate %46 by %c62_i32_15 dim 0 : vector<64x128xf32>, i32 -> vector<64x128xf32>
    %51 = arith.truncf %50 : vector<64x128xf32> to vector<64x128xbf16>
    %c61_i32_16 = arith.constant 61 : i32
    %52 = tpu.dynamic_rotate %46 by %c61_i32_16 dim 0 : vector<64x128xf32>, i32 -> vector<64x128xf32>
    %53 = arith.truncf %52 : vector<64x128xf32> to vector<64x128xbf16>
    %c60_i32_17 = arith.constant 60 : i32
    %54 = tpu.dynamic_rotate %46 by %c60_i32_17 dim 0 : vector<64x128xf32>, i32 -> vector<64x128xf32>
    %55 = arith.truncf %54 : vector<64x128xf32> to vector<64x128xbf16>
    %c59_i32_18 = arith.constant 59 : i32
    %56 = tpu.dynamic_rotate %46 by %c59_i32_18 dim 0 : vector<64x128xf32>, i32 -> vector<64x128xf32>
    %57 = arith.truncf %56 : vector<64x128xf32> to vector<64x128xbf16>
    %c58_i32 = arith.constant 58 : i32
    %58 = tpu.dynamic_rotate %46 by %c58_i32 dim 0 : vector<64x128xf32>, i32 -> vector<64x128xf32>
    %59 = arith.truncf %58 : vector<64x128xf32> to vector<64x128xbf16>
    %c57_i32 = arith.constant 57 : i32
    %60 = tpu.dynamic_rotate %46 by %c57_i32 dim 0 : vector<64x128xf32>, i32 -> vector<64x128xf32>
    %61 = arith.truncf %60 : vector<64x128xf32> to vector<64x128xbf16>
    %c56_i32 = arith.constant 56 : i32
    %62 = tpu.dynamic_rotate %46 by %c56_i32 dim 0 : vector<64x128xf32>, i32 -> vector<64x128xf32>
    %63 = arith.truncf %62 : vector<64x128xf32> to vector<64x128xbf16>
    %64 = tpu.concatenate %47, %49, %51, %53, %55, %57, %59, %61, %63 in 1 : vector<64x128xbf16>, vector<64x128xbf16>, vector<64x128xbf16>, vector<64x128xbf16>, vector<64x128xbf16>, vector<64x128xbf16>, vector<64x128xbf16>, vector<64x128xbf16>, vector<64x128xbf16> -> vector<64x1152xbf16>
    %c0_19 = arith.constant 0 : index
    %c0_20 = arith.constant 0 : index
    %65 = vector.load %arg6[%c0_19, %c0_20] : memref<1152x128xbf16, #tpu.memory_space<vmem>>, vector<1152x128xbf16>
    %cst_21 = arith.constant dense<0.000000e+00> : vector<64x128xf32>
    %66 = tpu.matmul %64, %65, %cst_21 {dimension_numbers = #tpu.dot_dimension_numbers<[1], [0], [0], [1], [0, 0, 1, 1], [], []>} : vector<64x1152xbf16>, vector<1152x128xbf16>, vector<64x128xf32> -> vector<64x128xf32>
    %c0_22 = arith.constant 0 : index
    %c0_23 = arith.constant 0 : index
    %67 = vector.load %arg7[%c0_22, %c0_23] : memref<3x128xf32, #tpu.memory_space<vmem>>, vector<3x128xf32>
    %68 = vector.extract_strided_slice %67 {offsets = [0, 0], sizes = [1, 128], strides = [1, 1]} : vector<3x128xf32> to vector<1x128xf32>
    %69 = vector.broadcast %68 : vector<1x128xf32> to vector<64x128xf32>
    %70 = arith.addf %66, %69 : vector<64x128xf32>
    %cst_24 = arith.constant 0.000000e+00 : f32
    %71 = vector.broadcast %cst_24 : f32 to vector<64x128xf32>
    %72 = arith.maximumf %70, %71 : vector<64x128xf32>
    %73 = vector.extract_strided_slice %67 {offsets = [1, 0], sizes = [1, 128], strides = [1, 1]} : vector<3x128xf32> to vector<1x128xf32>
    %74 = vector.broadcast %73 : vector<1x128xf32> to vector<64x128xf32>
    %75 = arith.mulf %72, %74 : vector<64x128xf32>
    %76 = vector.extract_strided_slice %67 {offsets = [2, 0], sizes = [1, 128], strides = [1, 1]} : vector<3x128xf32> to vector<1x128xf32>
    %77 = vector.broadcast %76 : vector<1x128xf32> to vector<64x128xf32>
    %78 = arith.addf %75, %77 : vector<64x128xf32>
    %c0_25 = arith.constant 0 : index
    %c0_26 = arith.constant 0 : index
    %79 = vector.load %arg8[%c0_25, %c0_26] : memref<64x128xf32, #tpu.memory_space<vmem>>, vector<64x128xf32>
    tpu.vector_store %arg8[%c0_25, %c0_26], %78 {strides = array<i32>} : memref<64x128xf32, #tpu.memory_space<vmem>>, vector<64x128xf32>,
    return
  }
  func.func @transform_0(%arg0: i32) -> (i32, i32) {
    %c0_i32 = arith.constant 0 : i32
    %c0_i32_0 = arith.constant 0 : i32
    return %arg0, %c0_i32 : i32, i32
  }
  func.func @transform_1(%arg0: i32) -> (i32, i32) {
    %c0_i32 = arith.constant 0 : i32
    %c0_i32_0 = arith.constant 0 : i32
    %c0_i32_1 = arith.constant 0 : i32
    return %c0_i32, %c0_i32_0 : i32, i32
  }
  func.func @transform_2(%arg0: i32) -> (i32, i32) {
    %c0_i32 = arith.constant 0 : i32
    %c0_i32_0 = arith.constant 0 : i32
    %c0_i32_1 = arith.constant 0 : i32
    return %c0_i32, %c0_i32_0 : i32, i32
  }
  func.func @transform_3(%arg0: i32) -> (i32, i32) {
    %c0_i32 = arith.constant 0 : i32
    %c0_i32_0 = arith.constant 0 : i32
    %c0_i32_1 = arith.constant 0 : i32
    return %c0_i32, %c0_i32_0 : i32, i32
  }
  func.func @transform_4(%arg0: i32) -> (i32, i32) {
    %c0_i32 = arith.constant 0 : i32
    %c0_i32_0 = arith.constant 0 : i32
    %c0_i32_1 = arith.constant 0 : i32
    return %c0_i32, %c0_i32_0 : i32, i32
  }
  func.func @transform_5(%arg0: i32) -> (i32, i32) {
    %c0_i32 = arith.constant 0 : i32
    %c0_i32_0 = arith.constant 0 : i32
    %c0_i32_1 = arith.constant 0 : i32
    return %c0_i32, %c0_i32_0 : i32, i32
  }
  func.func @transform_6(%arg0: i32) -> (i32, i32) {
    %c0_i32 = arith.constant 0 : i32
    %c0_i32_0 = arith.constant 0 : i32
    %c0_i32_1 = arith.constant 0 : i32
    return %c0_i32, %c0_i32_0 : i32, i32
  }
  func.func @transform_7(%arg0: i32) -> (i32, i32) {
    %c0_i32 = arith.constant 0 : i32
    %c0_i32_0 = arith.constant 0 : i32
    return %arg0, %c0_i32 : i32, i32
  }
}

</mosaic_0001>

<llo_original>
// kernel: protein_cnn_forward.1
$region0: #{protein_cnn_forward.1}
  #allocation0 [shape = 'u32[]', space=smem, size = 0x4, offset = 0x4, fixed_abs, tag = 'smem constant byte address 0x4 - core index']
  #allocation1 [shape = 'u32[144,128]{1,0:T(1,128)}', space=vmem, size = 0x12000, scoped, tag = 'internal scratch']
  %s0 = inlined_call_operand.vmem [shape: bf16[64,1280], index: 0, kind: input, shape index: {}]
  %s1 = inlined_call_operand.hbm [shape: bf16[3840,128], index: 1, kind: input, shape index: {}]
  %s2 = inlined_call_operand.vmem [shape: f32[3,128], index: 2, kind: input, shape index: {}]
  %s3 = inlined_call_operand.vmem [shape: bf16[768,128], index: 3, kind: input, shape index: {}]
  %s4 = inlined_call_operand.vmem [shape: f32[3,128], index: 4, kind: input, shape index: {}]
  %s5 = inlined_call_operand.vmem [shape: bf16[1152,128], index: 5, kind: input, shape index: {}]
  %s6 = inlined_call_operand.vmem [shape: f32[3,128], index: 6, kind: input, shape index: {}]
  %s7 = inlined_call_operand.vmem [shape: f32[64,128], index: 7, kind: output, shape index: {}]
  %s8 = sld [smem:[#allocation0]]
  $region42: #{protein_cnn_forward.1} parent=0
    _
  %s10 = ssub.s32 1, %s8
  %s11 = scalar_select 0, %s10, %s8
  $region1: #{protein_cnn_forward.1} parent=0
    #allocation2 [shape = 'u8[983040]{0}', space=vmem, size = 0xf0000, scoped, tag = 'input window, operand 1, single buffered']
    #allocation3 [shape = 's32[1]{0}', space=sflag, size = 0x4, scoped, tag = 'scoped memory for protein_cnn_forward.1']
    %12 = vsyncpa [#allocation3], 0
    // Predicated region
    $region2: #{protein_cnn_forward.1} parent=1 // pred_check
      _
    $region3: #{protein_cnn_forward.1} parent=1 // pred_check_branch
      %14 = sbr.rel (0) target = $region5
    $region4: #{protein_cnn_forward.1} parent=1 // pred_region
      _
    $region5: #{protein_cnn_forward.1} parent=1 // pred_fallthru
      _
    // Predicated region
    $region6: #{protein_cnn_forward.1} parent=1 // pred_check
      _
    $region7: #{protein_cnn_forward.1} parent=1 // pred_check_branch
      %16 = sbr.rel (0) target = $region9
    $region8: #{protein_cnn_forward.1} parent=1 // pred_region
      %s18 = ssub.s32 30720, 30720
      %19 = vsyncadd [#allocation3], %s18
      %s20 = sshll.u32 [#allocation2], 4
      %s21 = int_to_ptr.vmem [resolvable:$true] %s20
      %26 = dma.hbm_to_vmem [thread:$0]  %s1, 30720, %s21, [#allocation3], 64, 64, 4
    $region9: #{protein_cnn_forward.1} parent=1 // pred_fallthru
      _
    // Predicated region
    $region10: #{protein_cnn_forward.1} parent=1 // pred_check
      _
    $region11: #{protein_cnn_forward.1} parent=1 // pred_check_branch
      %28 = sbr.rel (0) target = $region13
    $region12: #{protein_cnn_forward.1} parent=1 // pred_region
      _
    $region13: #{protein_cnn_forward.1} parent=1 // pred_fallthru
      _
    // Predicated region
    $region14: #{protein_cnn_forward.1} parent=1 // pred_check
      _
    $region15: #{protein_cnn_forward.1} parent=1 // pred_check_branch
      %30 = sbr.rel (0) target = $region17
    $region16: #{protein_cnn_forward.1} parent=1 // pred_region
      _
    $region17: #{protein_cnn_forward.1} parent=1 // pred_fallthru
      _
    // Predicated region
    $region18: #{protein_cnn_forward.1} parent=1 // pred_check
      _
    $region19: #{protein_cnn_forward.1} parent=1 // pred_check_branch
      %32 = sbr.rel (0) target = $region21
    $region20: #{protein_cnn_forward.1} parent=1 // pred_region
      _
    $region21: #{protein_cnn_forward.1} parent=1 // pred_fallthru
      _
    // Predicated region
    $region22: #{protein_cnn_forward.1} parent=1 // pred_check
      _
    $region23: #{protein_cnn_forward.1} parent=1 // pred_check_branch
      %34 = sbr.rel (0) target = $region25
    $region24: #{protein_cnn_forward.1} parent=1 // pred_region
      _
    $region25: #{protein_cnn_forward.1} parent=1 // pred_fallthru
      _
    // Predicated region
    $region26: #{protein_cnn_forward.1} parent=1 // pred_check
      _
    $region27: #{protein_cnn_forward.1} parent=1 // pred_check_branch
      %36 = sbr.rel (0) target = $region29
    $region28: #{protein_cnn_forward.1} parent=1 // pred_region
      _
    $region29: #{protein_cnn_forward.1} parent=1 // pred_fallthru
      _
    // Predicated region
    $region30: #{protein_cnn_forward.1} parent=1 // pred_check
      _
    $region31: #{protein_cnn_forward.1} parent=1 // pred_check_branch
      %38 = sbr.rel (0) target = $region33
    $region32: #{protein_cnn_forward.1} parent=1 // pred_region
      %39 = dma.done [#allocation3], 30720
    $region33: #{protein_cnn_forward.1} parent=1 // pred_fallthru
      _
    %v41 = vld [vmem:[%s0] sm:$0xff]
    %v42 = vld [vmem:[%s0 + $0x8] sm:$0xff]
    %v43 = vld [vmem:[%s0 + $0x10] sm:$0xff]
    %v44 = vld [vmem:[%s0 + $0x18] sm:$0xff]
    %v45 = vld [vmem:[%s0 + $0x20] sm:$0xff]
    %v46 = vld [vmem:[%s0 + $0x28] sm:$0xff]
    %v47 = vld [vmem:[%s0 + $0x30] sm:$0xff]
    %v48 = vld [vmem:[%s0 + $0x38] sm:$0xff]
    %v49 = vld [vmem:[%s0 + $0x40] sm:$0xff]
    %v50 = vld [vmem:[%s0 + $0x48] sm:$0xff]
    %v51 = vld [vmem:[%s0 + $0x50] sm:$0xff]
    %v52 = vld [vmem:[%s0 + $0x58] sm:$0xff]
    %v53 = vld [vmem:[%s0 + $0x60] sm:$0xff]
    %v54 = vld [vmem:[%s0 + $0x68] sm:$0xff]
    %v55 = vld [vmem:[%s0 + $0x70] sm:$0xff]
    %v56 = vld [vmem:[%s0 + $0x78] sm:$0xff]
    %v57 = vld [vmem:[%s0 + $0x80] sm:$0xff]
    %v58 = vld [vmem:[%s0 + $0x88] sm:$0xff]
    %v59 = vld [vmem:[%s0 + $0x90] sm:$0xff]
    %v60 = vld [vmem:[%s0 + $0x98] sm:$0xff]
    %v61 = vld [vmem:[%s0 + $0xa0] sm:$0xff]
    %v62 = vld [vmem:[%s0 + $0xa8] sm:$0xff]
    %v63 = vld [vmem:[%s0 + $0xb0] sm:$0xff]
    %v64 = vld [vmem:[%s0 + $0xb8] sm:$0xff]
    %v65 = vld [vmem:[%s0 + $0xc0] sm:$0xff]
    %v66 = vld [vmem:[%s0 + $0xc8] sm:$0xff]
    %v67 = vld [vmem:[%s0 + $0xd0] sm:$0xff]
    %v68 = vld [vmem:[%s0 + $0xd8] sm:$0xff]
    %v69 = vld [vmem:[%s0 + $0xe0] sm:$0xff]
    %v70 = vld [vmem:[%s0 + $0xe8] sm:$0xff]
    %v71 = vld [vmem:[%s0 + $0xf0] sm:$0xff]
    %v72 = vld [vmem:[%s0 + $0xf8] sm:$0xff]
    %v73 = vld [vmem:[%s0 + $0x100] sm:$0xff]
    %v74 = vld [vmem:[%s0 + $0x108] sm:$0xff]
    %v75 = vld [vmem:[%s0 + $0x110] sm:$0xff]
    %v76 = vld [vmem:[%s0 + $0x118] sm:$0xff]
    %v77 = vld [vmem:[%s0 + $0x120] sm:$0xff]
    %v78 = vld [vmem:[%s0 + $0x128] sm:$0xff]
    %v79 = vld [vmem:[%s0 + $0x130] sm:$0xff]
    %v80 = vld [vmem:[%s0 + $0x138] sm:$0xff]
    %v81 = vunpack.c.l.bf16 %v41
    %v82 = vunpack.c.h.bf16 %v41
    %v83 = vunpack.c.l.bf16 %v42
    %v84 = vunpack.c.h.bf16 %v42
    %v85 = vunpack.c.l.bf16 %v43
    %v86 = vunpack.c.h.bf16 %v43
    %v87 = vunpack.c.l.bf16 %v44
    %v88 = vunpack.c.h.bf16 %v44
    %v89 = vunpack.c.l.bf16 %v45
    %v90 = vunpack.c.h.bf16 %v45
    %v91 = vunpack.c.l.bf16 %v46
    %v92 = vunpack.c.h.bf16 %v46
    %v93 = vunpack.c.l.bf16 %v47
    %v94 = vunpack.c.h.bf16 %v47
    %v95 = vunpack.c.l.bf16 %v48
    %v96 = vunpack.c.h.bf16 %v48
    %v97 = vunpack.c.l.bf16 %v49
    %v98 = vunpack.c.h.bf16 %v49
    %v99 = vunpack.c.l.bf16 %v50
    %v100 = vunpack.c.h.bf16 %v50
    %v101 = vunpack.c.l.bf16 %v51
    %v102 = vunpack.c.h.bf16 %v51
    %v103 = vunpack.c.l.bf16 %v52
    %v104 = vunpack.c.h.bf16 %v52
    %v105 = vunpack.c.l.bf16 %v53
    %v106 = vunpack.c.h.bf16 %v53
    %v107 = vunpack.c.l.bf16 %v54
    %v108 = vunpack.c.h.bf16 %v54
    %v109 = vunpack.c.l.bf16 %v55
    %v110 = vunpack.c.h.bf16 %v55
    %v111 = vunpack.c.l.bf16 %v56
    %v112 = vunpack.c.h.bf16 %v56
    %v113 = vunpack.c.l.bf16 %v57
    %v114 = vunpack.c.h.bf16 %v57
    %v115 = vunpack.c.l.bf16 %v58
    %v116 = vunpack.c.h.bf16 %v58
    %v117 = vunpack.c.l.bf16 %v59
    %v118 = vunpack.c.h.bf16 %v59
    %v119 = vunpack.c.l.bf16 %v60
    %v120 = vunpack.c.h.bf16 %v60
    %v121 = vunpack.c.l.bf16 %v61
    %v122 = vunpack.c.h.bf16 %v61
    %v123 = vunpack.c.l.bf16 %v62
    %v124 = vunpack.c.h.bf16 %v62
    %v125 = vunpack.c.l.bf16 %v63
    %v126 = vunpack.c.h.bf16 %v63
    %v127 = vunpack.c.l.bf16 %v64
    %v128 = vunpack.c.h.bf16 %v64
    %v129 = vunpack.c.l.bf16 %v65
    %v130 = vunpack.c.h.bf16 %v65
    %v131 = vunpack.c.l.bf16 %v66
    %v132 = vunpack.c.h.bf16 %v66
    %v133 = vunpack.c.l.bf16 %v67
    %v134 = vunpack.c.h.bf16 %v67
    %v135 = vunpack.c.l.bf16 %v68
    %v136 = vunpack.c.h.bf16 %v68
    %v137 = vunpack.c.l.bf16 %v69
    %v138 = vunpack.c.h.bf16 %v69
    %v139 = vunpack.c.l.bf16 %v70
    %v140 = vunpack.c.h.bf16 %v70
    %v141 = vunpack.c.l.bf16 %v71
    %v142 = vunpack.c.h.bf16 %v71
    %v143 = vunpack.c.l.bf16 %v72
    %v144 = vunpack.c.h.bf16 %v72
    %v145 = vunpack.c.l.bf16 %v73
    %v146 = vunpack.c.h.bf16 %v73
    %v147 = vunpack.c.l.bf16 %v74
    %v148 = vunpack.c.h.bf16 %v74
    %v149 = vunpack.c.l.bf16 %v75
    %v150 = vunpack.c.h.bf16 %v75
    %v151 = vunpack.c.l.bf16 %v76
    %v152 = vunpack.c.h.bf16 %v76
    %v153 = vunpack.c.l.bf16 %v77
    %v154 = vunpack.c.h.bf16 %v77
    %v155 = vunpack.c.l.bf16 %v78
    %v156 = vunpack.c.h.bf16 %v78
    %v157 = vunpack.c.l.bf16 %v79
    %v158 = vunpack.c.h.bf16 %v79
    %v159 = vunpack.c.l.bf16 %v80
    %v160 = vunpack.c.h.bf16 %v80
    %v161 = vrot.slane %v81, 1
    %v162 = vrot.slane %v82, 1
    %v163 = vrot.slane %v83, 1
    %v164 = vrot.slane %v84, 1
    %v165 = vrot.slane %v85, 1
    %v166 = vrot.slane %v86, 1
    %v167 = vrot.slane %v87, 1
    %v168 = vrot.slane %v88, 1
    %v169 = vrot.slane %v89, 1
    %v170 = vrot.slane %v90, 1
    %v171 = vrot.slane %v91, 1
    %v172 = vrot.slane %v92, 1
    %v173 = vrot.slane %v93, 1
    %v174 = vrot.slane %v94, 1
    %v175 = vrot.slane %v95, 1
    %v176 = vrot.slane %v96, 1
    %v177 = vrot.slane %v97, 1
    %v178 = vrot.slane %v98, 1
    %v179 = vrot.slane %v99, 1
    %v180 = vrot.slane %v100, 1
    %v181 = vrot.slane %v101, 1
    %v182 = vrot.slane %v102, 1
    %v183 = vrot.slane %v103, 1
    %v184 = vrot.slane %v104, 1
    %v185 = vrot.slane %v105, 1
    %v186 = vrot.slane %v106, 1
    %v187 = vrot.slane %v107, 1
    %v188 = vrot.slane %v108, 1
    %v189 = vrot.slane %v109, 1
    %v190 = vrot.slane %v110, 1
    %v191 = vrot.slane %v111, 1
    %v192 = vrot.slane %v112, 1
    %v193 = vrot.slane %v113, 1
    %v194 = vrot.slane %v114, 1
    %v195 = vrot.slane %v115, 1
    %v196 = vrot.slane %v116, 1
    %v197 = vrot.slane %v117, 1
    %v198 = vrot.slane %v118, 1
    %v199 = vrot.slane %v119, 1
    %v200 = vrot.slane %v120, 1
    %v201 = vrot.slane %v121, 1
    %v202 = vrot.slane %v122, 1
    %v203 = vrot.slane %v123, 1
    %v204 = vrot.slane %v124, 1
    %v205 = vrot.slane %v125, 1
    %v206 = vrot.slane %v126, 1
    %v207 = vrot.slane %v127, 1
    %v208 = vrot.slane %v128, 1
    %v209 = vrot.slane %v129, 1
    %v210 = vrot.slane %v130, 1
    %v211 = vrot.slane %v131, 1
    %v212 = vrot.slane %v132, 1
    %v213 = vrot.slane %v133, 1
    %v214 = vrot.slane %v134, 1
    %v215 = vrot.slane %v135, 1
    %v216 = vrot.slane %v136, 1
    %v217 = vrot.slane %v137, 1
    %v218 = vrot.slane %v138, 1
    %v219 = vrot.slane %v139, 1
    %v220 = vrot.slane %v140, 1
    %v221 = vrot.slane %v141, 1
    %v222 = vrot.slane %v142, 1
    %v223 = vrot.slane %v143, 1
    %v224 = vrot.slane %v144, 1
    %v225 = vrot.slane %v145, 1
    %v226 = vrot.slane %v146, 1
    %v227 = vrot.slane %v147, 1
    %v228 = vrot.slane %v148, 1
    %v229 = vrot.slane %v149, 1
    %v230 = vrot.slane %v150, 1
    %v231 = vrot.slane %v151, 1
    %v232 = vrot.slane %v152, 1
    %v233 = vrot.slane %v153, 1
    %v234 = vrot.slane %v154, 1
    %v235 = vrot.slane %v155, 1
    %v236 = vrot.slane %v156, 1
    %v237 = vrot.slane %v157, 1
    %v238 = vrot.slane %v158, 1
    %v239 = vrot.slane %v159, 1
    %v240 = vrot.slane %v160, 1
    %v241 = vlaneseq
    %v242 = vshrl.u32 %v241, 7
    %vm243 = vcmp.lt.s32.totalorder %v242, 7
    %v244 = vsel %vm243, %v221, %v231
    %v245 = vsel %vm243, %v222, %v232
    %v246 = vsel %vm243, %v223, %v233
    %v247 = vsel %vm243, %v224, %v234
    %v248 = vsel %vm243, %v225, %v235
    %v249 = vsel %vm243, %v226, %v236
    %v250 = vsel %vm243, %v227, %v237
    %v251 = vsel %vm243, %v228, %v238
    %v252 = vsel %vm243, %v229, %v239
    %v253 = vsel %vm243, %v230, %v240
    %v254 = vsel %vm243, %v211, %v221
    %v255 = vsel %vm243, %v212, %v222
    %v256 = vsel %vm243, %v213, %v223
    %v257 = vsel %vm243, %v214, %v224
    %v258 = vsel %vm243, %v215, %v225
    %v259 = vsel %vm243, %v216, %v226
    %v260 = vsel %vm243, %v217, %v227
    %v261 = vsel %vm243, %v218, %v228
    %v262 = vsel %vm243, %v219, %v229
    %v263 = vsel %vm243, %v220, %v230
    %v264 = vsel %vm243, %v201, %v211
    %v265 = vsel %vm243, %v202, %v212
    %v266 = vsel %vm243, %v203, %v213
    %v267 = vsel %vm243, %v204, %v214
    %v268 = vsel %vm243, %v205, %v215
    %v269 = vsel %vm243, %v206, %v216
    %v270 = vsel %vm243, %v207, %v217
    %v271 = vsel %vm243, %v208, %v218
    %v272 = vsel %vm243, %v209, %v219
    %v273 = vsel %vm243, %v210, %v220
    %v274 = vsel %vm243, %v191, %v201
    %v275 = vsel %vm243, %v192, %v202
    %v276 = vsel %vm243, %v193, %v203
    %v277 = vsel %vm243, %v194, %v204
    %v278 = vsel %vm243, %v195, %v205
    %v279 = vsel %vm243, %v196, %v206
    %v280 = vsel %vm243, %v197, %v207
    %v281 = vsel %vm243, %v198, %v208
    %v282 = vsel %vm243, %v199, %v209
    %v283 = vsel %vm243, %v200, %v210
    %v284 = vsel %vm243, %v181, %v191
    %v285 = vsel %vm243, %v182, %v192
    %v286 = vsel %vm243, %v183, %v193
    %v287 = vsel %vm243, %v184, %v194
    %v288 = vsel %vm243, %v185, %v195
    %v289 = vsel %vm243, %v186, %v196
    %v290 = vsel %vm243, %v187, %v197
    %v291 = vsel %vm243, %v188, %v198
    %v292 = vsel %vm243, %v189, %v199
    %v293 = vsel %vm243, %v190, %v200
    %v294 = vsel %vm243, %v171, %v181
    %v295 = vsel %vm243, %v172, %v182
    %v296 = vsel %vm243, %v173, %v183
    %v297 = vsel %vm243, %v174, %v184
    %v298 = vsel %vm243, %v175, %v185
    %v299 = vsel %vm243, %v176, %v186
    %v300 = vsel %vm243, %v177, %v187
    %v301 = vsel %vm243, %v178, %v188
    %v302 = vsel %vm243, %v179, %v189
    %v303 = vsel %vm243, %v180, %v190
    %v304 = vsel %vm243, %v161, %v171
    %v305 = vsel %vm243, %v162, %v172
    %v306 = vsel %vm243, %v163, %v173
    %v307 = vsel %vm243, %v164, %v174
    %v308 = vsel %vm243, %v165, %v175
    %v309 = vsel %vm243, %v166, %v176
    %v310 = vsel %vm243, %v167, %v177
    %v311 = vsel %vm243, %v168, %v178
    %v312 = vsel %vm243, %v169, %v179
    %v313 = vsel %vm243, %v170, %v180
    %v314 = vsel %vm243, %v231, %v161
    %v315 = vsel %vm243, %v232, %v162
    %v316 = vsel %vm243, %v233, %v163
    %v317 = vsel %vm243, %v234, %v164
    %v318 = vsel %vm243, %v235, %v165
    %v319 = vsel %vm243, %v236, %v166
    %v320 = vsel %vm243, %v237, %v167
    %v321 = vsel %vm243, %v238, %v168
    %v322 = vsel %vm243, %v239, %v169
    %v323 = vsel %vm243, %v240, %v170
    %v324 = vpack.c.bf16 %v294, %v304
    %v325 = vpack.c.bf16 %v295, %v305
    %v326 = vpack.c.bf16 %v296, %v306
    %v327 = vpack.c.bf16 %v297, %v307
    %v328 = vpack.c.bf16 %v298, %v308
    %v329 = vpack.c.bf16 %v299, %v309
    %v330 = vpack.c.bf16 %v300, %v310
    %v331 = vpack.c.bf16 %v301, %v311
    %v332 = vpack.c.bf16 %v302, %v312
    %v333 = vpack.c.bf16 %v303, %v313
    %v334 = vpack.c.bf16 %v274, %v284
    %v335 = vpack.c.bf16 %v275, %v285
    %v336 = vpack.c.bf16 %v276, %v286
    %v337 = vpack.c.bf16 %v277, %v287
    %v338 = vpack.c.bf16 %v278, %v288
    %v339 = vpack.c.bf16 %v279, %v289
    %v340 = vpack.c.bf16 %v280, %v290
    %v341 = vpack.c.bf16 %v281, %v291
    %v342 = vpack.c.bf16 %v282, %v292
    %v343 = vpack.c.bf16 %v283, %v293
    %v344 = vpack.c.bf16 %v254, %v264
    %v345 = vpack.c.bf16 %v255, %v265
    %v346 = vpack.c.bf16 %v256, %v266
    %v347 = vpack.c.bf16 %v257, %v267
    %v348 = vpack.c.bf16 %v258, %v268
    %v349 = vpack.c.bf16 %v259, %v269
    %v350 = vpack.c.bf16 %v260, %v270
    %v351 = vpack.c.bf16 %v261, %v271
    %v352 = vpack.c.bf16 %v262, %v272
    %v353 = vpack.c.bf16 %v263, %v273
    %v354 = vpack.c.bf16 %v314, %v244
    %v355 = vpack.c.bf16 %v315, %v245
    %v356 = vpack.c.bf16 %v316, %v246
    %v357 = vpack.c.bf16 %v317, %v247
    %v358 = vpack.c.bf16 %v318, %v248
    %v359 = vpack.c.bf16 %v319, %v249
    %v360 = vpack.c.bf16 %v320, %v250
    %v361 = vpack.c.bf16 %v321, %v251
    %v362 = vpack.c.bf16 %v322, %v252
    %v363 = vpack.c.bf16 %v323, %v253
    %v364 = vrot.slane %v81, 2
    %v365 = vrot.slane %v82, 2
    %v366 = vrot.slane %v83, 2
    %v367 = vrot.slane %v84, 2
    %v368 = vrot.slane %v85, 2
    %v369 = vrot.slane %v86, 2
    %v370 = vrot.slane %v87, 2
    %v371 = vrot.slane %v88, 2
    %v372 = vrot.slane %v89, 2
    %v373 = vrot.slane %v90, 2
    %v374 = vrot.slane %v91, 2
    %v375 = vrot.slane %v92, 2
    %v376 = vrot.slane %v93, 2
    %v377 = vrot.slane %v94, 2
    %v378 = vrot.slane %v95, 2
    %v379 = vrot.slane %v96, 2
    %v380 = vrot.slane %v97, 2
    %v381 = vrot.slane %v98, 2
    %v382 = vrot.slane %v99, 2
    %v383 = vrot.slane %v100, 2
    %v384 = vrot.slane %v101, 2
    %v385 = vrot.slane %v102, 2
    %v386 = vrot.slane %v103, 2
    %v387 = vrot.slane %v104, 2
    %v388 = vrot.slane %v105, 2
    %v389 = vrot.slane %v106, 2
    %v390 = vrot.slane %v107, 2
    %v391 = vrot.slane %v108, 2
    %v392 = vrot.slane %v109, 2
    %v393 = vrot.slane %v110, 2
    %v394 = vrot.slane %v111, 2
    %v395 = vrot.slane %v112, 2
    %v396 = vrot.slane %v113, 2
    %v397 = vrot.slane %v114, 2
    %v398 = vrot.slane %v115, 2
    %v399 = vrot.slane %v116, 2
    %v400 = vrot.slane %v117, 2
    %v401 = vrot.slane %v118, 2
    %v402 = vrot.slane %v119, 2
    %v403 = vrot.slane %v120, 2
    %v404 = vrot.slane %v121, 2
    %v405 = vrot.slane %v122, 2
    %v406 = vrot.slane %v123, 2
    %v407 = vrot.slane %v124, 2
    %v408 = vrot.slane %v125, 2
    %v409 = vrot.slane %v126, 2
    %v410 = vrot.slane %v127, 2
    %v411 = vrot.slane %v128, 2
    %v412 = vrot.slane %v129, 2
    %v413 = vrot.slane %v130, 2
    %v414 = vrot.slane %v131, 2
    %v415 = vrot.slane %v132, 2
    %v416 = vrot.slane %v133, 2
    %v417 = vrot.slane %v134, 2
    %v418 = vrot.slane %v135, 2
    %v419 = vrot.slane %v136, 2
    %v420 = vrot.slane %v137, 2
    %v421 = vrot.slane %v138, 2
    %v422 = vrot.slane %v139, 2
    %v423 = vrot.slane %v140, 2
    %v424 = vrot.slane %v141, 2
    %v425 = vrot.slane %v142, 2
    %v426 = vrot.slane %v143, 2
    %v427 = vrot.slane %v144, 2
    %v428 = vrot.slane %v145, 2
    %v429 = vrot.slane %v146, 2
    %v430 = vrot.slane %v147, 2
    %v431 = vrot.slane %v148, 2
    %v432 = vrot.slane %v149, 2
    %v433 = vrot.slane %v150, 2
    %v434 = vrot.slane %v151, 2
    %v435 = vrot.slane %v152, 2
    %v436 = vrot.slane %v153, 2
    %v437 = vrot.slane %v154, 2
    %v438 = vrot.slane %v155, 2
    %v439 = vrot.slane %v156, 2
    %v440 = vrot.slane %v157, 2
    %v441 = vrot.slane %v158, 2
    %v442 = vrot.slane %v159, 2
    %v443 = vrot.slane %v160, 2
    %vm444 = vcmp.lt.s32.totalorder %v242, 6
    %v445 = vsel %vm444, %v424, %v434
    %v446 = vsel %vm444, %v425, %v435
    %v447 = vsel %vm444, %v426, %v436
    %v448 = vsel %vm444, %v427, %v437
    %v449 = vsel %vm444, %v428, %v438
    %v450 = vsel %vm444, %v429, %v439
    %v451 = vsel %vm444, %v430, %v440
    %v452 = vsel %vm444, %v431, %v441
    %v453 = vsel %vm444, %v432, %v442
    %v454 = vsel %vm444, %v433, %v443
    %v455 = vsel %vm444, %v414, %v424
    %v456 = vsel %vm444, %v415, %v425
    %v457 = vsel %vm444, %v416, %v426
    %v458 = vsel %vm444, %v417, %v427
    %v459 = vsel %vm444, %v418, %v428
    %v460 = vsel %vm444, %v419, %v429
    %v461 = vsel %vm444, %v420, %v430
    %v462 = vsel %vm444, %v421, %v431
    %v463 = vsel %vm444, %v422, %v432
    %v464 = vsel %vm444, %v423, %v433
    %v465 = vsel %vm444, %v404, %v414
    %v466 = vsel %vm444, %v405, %v415
    %v467 = vsel %vm444, %v406, %v416
    %v468 = vsel %vm444, %v407, %v417
    %v469 = vsel %vm444, %v408, %v418
    %v470 = vsel %vm444, %v409, %v419
    %v471 = vsel %vm444, %v410, %v420
    %v472 = vsel %vm444, %v411, %v421
    %v473 = vsel %vm444, %v412, %v422
    %v474 = vsel %vm444, %v413, %v423
    %v475 = vsel %vm444, %v394, %v404
    %v476 = vsel %vm444, %v395, %v405
    %v477 = vsel %vm444, %v396, %v406
    %v478 = vsel %vm444, %v397, %v407
    %v479 = vsel %vm444, %v398, %v408
    %v480 = vsel %vm444, %v399, %v409
    %v481 = vsel %vm444, %v400, %v410
    %v482 = vsel %vm444, %v401, %v411
    %v483 = vsel %vm444, %v402, %v412
    %v484 = vsel %vm444, %v403, %v413
    %v485 = vsel %vm444, %v384, %v394
    %v486 = vsel %vm444, %v385, %v395
    %v487 = vsel %vm444, %v386, %v396
    %v488 = vsel %vm444, %v387, %v397
    %v489 = vsel %vm444, %v388, %v398
    %v490 = vsel %vm444, %v389, %v399
    %v491 = vsel %vm444, %v390, %v400
    %v492 = vsel %vm444, %v391, %v401
    %v493 = vsel %vm444, %v392, %v402
    %v494 = vsel %vm444, %v393, %v403
    %v495 = vsel %vm444, %v374, %v384
    %v496 = vsel %vm444, %v375, %v385
    %v497 = vsel %vm444, %v376, %v386
    %v498 = vsel %vm444, %v377, %v387
    %v499 = vsel %vm444, %v378, %v388
    %v500 = vsel %vm444, %v379, %v389
    %v501 = vsel %vm444, %v380, %v390
    %v502 = vsel %vm444, %v381, %v391
    %v503 = vsel %vm444, %v382, %v392
    %v504 = vsel %vm444, %v383, %v393
    %v505 = vsel %vm444, %v364, %v374
    %v506 = vsel %vm444, %v365, %v375
    %v507 = vsel %vm444, %v366, %v376
    %v508 = vsel %vm444, %v367, %v377
    %v509 = vsel %vm444, %v368, %v378
    %v510 = vsel %vm444, %v369, %v379
    %v511 = vsel %vm444, %v370, %v380
    %v512 = vsel %vm444, %v371, %v381
    %v513 = vsel %vm444, %v372, %v382
    %v514 = vsel %vm444, %v373, %v383
    %v515 = vsel %vm444, %v434, %v364
    %v516 = vsel %vm444, %v435, %v365
    %v517 = vsel %vm444, %v436, %v366
    %v518 = vsel %vm444, %v437, %v367
    %v519 = vsel %vm444, %v438, %v368
    %v520 = vsel %vm444, %v439, %v369
    %v521 = vsel %vm444, %v440, %v370
    %v522 = vsel %vm444, %v441, %v371
    %v523 = vsel %vm444, %v442, %v372
    %v524 = vsel %vm444, %v443, %v373
    %v525 = vpack.c.bf16 %v495, %v505
    %v526 = vpack.c.bf16 %v496, %v506
    %v527 = vpack.c.bf16 %v497, %v507
    %v528 = vpack.c.bf16 %v498, %v508
    %v529 = vpack.c.bf16 %v499, %v509
    %v530 = vpack.c.bf16 %v500, %v510
    %v531 = vpack.c.bf16 %v501, %v511
    %v532 = vpack.c.bf16 %v502, %v512
    %v533 = vpack.c.bf16 %v503, %v513
    %v534 = vpack.c.bf16 %v504, %v514
    %v535 = vpack.c.bf16 %v475, %v485
    %v536 = vpack.c.bf16 %v476, %v486
    %v537 = vpack.c.bf16 %v477, %v487
    %v538 = vpack.c.bf16 %v478, %v488
    %v539 = vpack.c.bf16 %v479, %v489
    %v540 = vpack.c.bf16 %v480, %v490
    %v541 = vpack.c.bf16 %v481, %v491
    %v542 = vpack.c.bf16 %v482, %v492
    %v543 = vpack.c.bf16 %v483, %v493
    %v544 = vpack.c.bf16 %v484, %v494
    %v545 = vpack.c.bf16 %v455, %v465
    %v546 = vpack.c.bf16 %v456, %v466
    %v547 = vpack.c.bf16 %v457, %v467
    %v548 = vpack.c.bf16 %v458, %v468
    %v549 = vpack.c.bf16 %v459, %v469
    %v550 = vpack.c.bf16 %v460, %v470
    %v551 = vpack.c.bf16 %v461, %v471
    %v552 = vpack.c.bf16 %v462, %v472
    %v553 = vpack.c.bf16 %v463, %v473
    %v554 = vpack.c.bf16 %v464, %v474
    %v555 = vpack.c.bf16 %v515, %v445
    %v556 = vpack.c.bf16 %v516, %v446
    %v557 = vpack.c.bf16 %v517, %v447
    %v558 = vpack.c.bf16 %v518, %v448
    %v559 = vpack.c.bf16 %v519, %v449
    %v560 = vpack.c.bf16 %v520, %v450
    %v561 = vpack.c.bf16 %v521, %v451
    %v562 = vpack.c.bf16 %v522, %v452
    %v563 = vpack.c.bf16 %v523, %v453
    %v564 = vpack.c.bf16 %v524, %v454
    %v605 = vunpack.c.l.b16 %v41
    %v606 = vunpack.c.h.b16 %v41
    %v607 = vunpack.c.l.b16 %v42
    %v608 = vunpack.c.h.b16 %v42
    %v609 = vunpack.c.l.b16 %v43
    %v610 = vunpack.c.h.b16 %v43
    %v611 = vunpack.c.l.b16 %v44
    %v612 = vunpack.c.h.b16 %v44
    %v613 = vunpack.c.l.b16 %v45
    %v614 = vunpack.c.h.b16 %v45
    %v615 = vunpack.c.l.b16 %v46
    %v616 = vunpack.c.h.b16 %v46
    %v617 = vunpack.c.l.b16 %v47
    %v618 = vunpack.c.h.b16 %v47
    %v619 = vunpack.c.l.b16 %v48
    %v620 = vunpack.c.h.b16 %v48
    %v621 = vunpack.c.l.b16 %v49
    %v622 = vunpack.c.h.b16 %v49
    %v623 = vunpack.c.l.b16 %v50
    %v624 = vunpack.c.h.b16 %v50
    %v625 = vunpack.c.l.b16 %v51
    %v626 = vunpack.c.h.b16 %v51
    %v627 = vunpack.c.l.b16 %v52
    %v628 = vunpack.c.h.b16 %v52
    %v629 = vunpack.c.l.b16 %v53
    %v630 = vunpack.c.h.b16 %v53
    %v631 = vunpack.c.l.b16 %v54
    %v632 = vunpack.c.h.b16 %v54
    %v633 = vunpack.c.l.b16 %v55
    %v634 = vunpack.c.h.b16 %v55
    %v635 = vunpack.c.l.b16 %v56
    %v636 = vunpack.c.h.b16 %v56
    %v637 = vunpack.c.l.b16 %v57
    %v638 = vunpack.c.h.b16 %v57
    %v639 = vunpack.c.l.b16 %v58
    %v640 = vunpack.c.h.b16 %v58
    %v641 = vunpack.c.l.b16 %v59
    %v642 = vunpack.c.h.b16 %v59
    %v643 = vunpack.c.l.b16 %v60
    %v644 = vunpack.c.h.b16 %v60
    %v645 = vunpack.c.l.b16 %v61
    %v646 = vunpack.c.h.b16 %v61
    %v647 = vunpack.c.l.b16 %v62
    %v648 = vunpack.c.h.b16 %v62
    %v649 = vunpack.c.l.b16 %v63
    %v650 = vunpack.c.h.b16 %v63
    %v651 = vunpack.c.l.b16 %v64
    %v652 = vunpack.c.h.b16 %v64
    %v653 = vunpack.c.l.b16 %v65
    %v654 = vunpack.c.h.b16 %v65
    %v655 = vunpack.c.l.b16 %v66
    %v656 = vunpack.c.h.b16 %v66
    %v657 = vunpack.c.l.b16 %v67
    %v658 = vunpack.c.h.b16 %v67
    %v659 = vunpack.c.l.b16 %v68
    %v660 = vunpack.c.h.b16 %v68
    %v661 = vunpack.c.l.b16 %v69
    %v662 = vunpack.c.h.b16 %v69
    %v663 = vunpack.c.l.b16 %v70
    %v664 = vunpack.c.h.b16 %v70
    %v665 = vunpack.c.l.b16 %v71
    %v666 = vunpack.c.h.b16 %v71
    %v667 = vunpack.c.l.b16 %v72
    %v668 = vunpack.c.h.b16 %v72
    %v669 = vunpack.c.l.b16 %v73
    %v670 = vunpack.c.h.b16 %v73
    %v671 = vunpack.c.l.b16 %v74
    %v672 = vunpack.c.h.b16 %v74
    %v673 = vunpack.c.l.b16 %v75
    %v674 = vunpack.c.h.b16 %v75
    %v675 = vunpack.c.l.b16 %v76
    %v676 = vunpack.c.h.b16 %v76
    %v677 = vunpack.c.l.b16 %v77
    %v678 = vunpack.c.h.b16 %v77
    %v679 = vunpack.c.l.b16 %v78
    %v680 = vunpack.c.h.b16 %v78
    %v681 = vunpack.c.l.b16 %v79
    %v682 = vunpack.c.h.b16 %v79
    %v683 = vunpack.c.l.b16 %v80
    %v684 = vunpack.c.h.b16 %v80
    %v685 = vpack.c.b16 %v615, %v605
    %v686 = vpack.c.b16 %v616, %v606
    %v687 = vpack.c.b16 %v617, %v607
    %v688 = vpack.c.b16 %v618, %v608
    %v689 = vpack.c.b16 %v619, %v609
    %v690 = vpack.c.b16 %v620, %v610
    %v691 = vpack.c.b16 %v621, %v611
    %v692 = vpack.c.b16 %v622, %v612
    %v693 = vpack.c.b16 %v623, %v613
    %v694 = vpack.c.b16 %v624, %v614
    %v695 = vpack.c.b16 %v635, %v625
    %v696 = vpack.c.b16 %v636, %v626
    %v697 = vpack.c.b16 %v637, %v627
    %v698 = vpack.c.b16 %v638, %v628
    %v699 = vpack.c.b16 %v639, %v629
    %v700 = vpack.c.b16 %v640, %v630
    %v701 = vpack.c.b16 %v641, %v631
    %v702 = vpack.c.b16 %v642, %v632
    %v703 = vpack.c.b16 %v643, %v633
    %v704 = vpack.c.b16 %v644, %v634
    %v705 = vpack.c.b16 %v655, %v645
    %v706 = vpack.c.b16 %v656, %v646
    %v707 = vpack.c.b16 %v657, %v647
    %v708 = vpack.c.b16 %v658, %v648
    %v709 = vpack.c.b16 %v659, %v649
    %v710 = vpack.c.b16 %v660, %v650
    %v711 = vpack.c.b16 %v661, %v651
    %v712 = vpack.c.b16 %v662, %v652
    %v713 = vpack.c.b16 %v663, %v653
    %v714 = vpack.c.b16 %v664, %v654
    %v715 = vpack.c.b16 %v675, %v665
    %v716 = vpack.c.b16 %v676, %v666
    %v717 = vpack.c.b16 %v677, %v667
    %v718 = vpack.c.b16 %v678, %v668
    %v719 = vpack.c.b16 %v679, %v669
    %v720 = vpack.c.b16 %v680, %v670
    %v721 = vpack.c.b16 %v681, %v671
    %v722 = vpack.c.b16 %v682, %v672
    %v723 = vpack.c.b16 %v683, %v673
    %v724 = vpack.c.b16 %v684, %v674
    %v765 = vld [vmem:[#allocation2] sm:$0xf]
    %v766 = vld [vmem:[#allocation2 + $0x4] sm:$0xf]
    %v767 = vld [vmem:[#allocation2 + $0x8] sm:$0xf]
    %v768 = vld [vmem:[#allocation2 + $0xc] sm:$0xf]
    %v769 = vld [vmem:[#allocation2 + $0x10] sm:$0xf]
    %v770 = vld [vmem:[#allocation2 + $0x14] sm:$0xf]
    %v771 = vld [vmem:[#allocation2 + $0x18] sm:$0xf]
    %v772 = vld [vmem:[#allocation2 + $0x1c] sm:$0xf]
    %v773 = vld [vmem:[#allocation2 + $0x20] sm:$0xf]
    %v774 = vld [vmem:[#allocation2 + $0x24] sm:$0xf]
    %v775 = vld [vmem:[#allocation2 + $0x28] sm:$0xf]
    %v776 = vld [vmem:[#allocation2 + $0x2c] sm:$0xf]
    %v777 = vld [vmem:[#allocation2 + $0x30] sm:$0xf]
    %v778 = vld [vmem:[#allocation2 + $0x34] sm:$0xf]
    %v779 = vld [vmem:[#allocation2 + $0x38] sm:$0xf]
    %v780 = vld [vmem:[#allocation2 + $0x3c] sm:$0xf]
    %v781 = vld [vmem:[#allocation2 + $0x40] sm:$0xf]
    %v782 = vld [vmem:[#allocation2 + $0x44] sm:$0xf]
    %v783 = vld [vmem:[#allocation2 + $0x48] sm:$0xf]
    %v784 = vld [vmem:[#allocation2 + $0x4c] sm:$0xf]
    %v785 = vld [vmem:[#allocation2 + $0x50] sm:$0xf]
    %v786 = vld [vmem:[#allocation2 + $0x54] sm:$0xf]
    %v787 = vld [vmem:[#allocation2 + $0x58] sm:$0xf]
    %v788 = vld [vmem:[#allocation2 + $0x5c] sm:$0xf]
    %v789 = vld [vmem:[#allocation2 + $0x60] sm:$0xf]
    %v790 = vld [vmem:[#allocation2 + $0x64] sm:$0xf]
    %v791 = vld [vmem:[#allocation2 + $0x68] sm:$0xf]
    %v792 = vld [vmem:[#allocation2 + $0x6c] sm:$0xf]
    %v793 = vld [vmem:[#allocation2 + $0x70] sm:$0xf]
    %v794 = vld [vmem:[#allocation2 + $0x74] sm:$0xf]
    %v795 = vld [vmem:[#allocation2 + $0x78] sm:$0xf]
    %v796 = vld [vmem:[#allocation2 + $0x7c] sm:$0xf]
    %v797 = vld [vmem:[#allocation2 + $0x80] sm:$0xf]
    %v798 = vld [vmem:[#allocation2 + $0x84] sm:$0xf]
    %v799 = vld [vmem:[#allocation2 + $0x88] sm:$0xf]
    %v800 = vld [vmem:[#allocation2 + $0x8c] sm:$0xf]
    %v801 = vld [vmem:[#allocation2 + $0x90] sm:$0xf]
    %v802 = vld [vmem:[#allocation2 + $0x94] sm:$0xf]
    %v803 = vld [vmem:[#allocation2 + $0x98] sm:$0xf]
    %v804 = vld [vmem:[#allocation2 + $0x9c] sm:$0xf]
    %v805 = vld [vmem:[#allocation2 + $0xa0] sm:$0xf]
    %v806 = vld [vmem:[#allocation2 + $0xa4] sm:$0xf]
    %v807 = vld [vmem:[#allocation2 + $0xa8] sm:$0xf]
    %v808 = vld [vmem:[#allocation2 + $0xac] sm:$0xf]
    %v809 = vld [vmem:[#allocation2 + $0xb0] sm:$0xf]
    %v810 = vld [vmem:[#allocation2 + $0xb4] sm:$0xf]
    %v811 = vld [vmem:[#allocation2 + $0xb8] sm:$0xf]
    %v812 = vld [vmem:[#allocation2 + $0xbc] sm:$0xf]
    %v813 = vld [vmem:[#allocation2 + $0xc0] sm:$0xf]
    %v814 = vld [vmem:[#allocation2 + $0xc4] sm:$0xf]
    %v815 = vld [vmem:[#allocation2 + $0xc8] sm:$0xf]
    %v816 = vld [vmem:[#allocation2 + $0xcc] sm:$0xf]
    %v817 = vld [vmem:[#allocation2 + $0xd0] sm:$0xf]
    %v818 = vld [vmem:[#allocation2 + $0xd4] sm:$0xf]
    %v819 = vld [vmem:[#allocation2 + $0xd8] sm:$0xf]
    %v820 = vld [vmem:[#allocation2 + $0xdc] sm:$0xf]
    %v821 = vld [vmem:[#allocation2 + $0xe0] sm:$0xf]
    %v822 = vld [vmem:[#allocation2 + $0xe4] sm:$0xf]
    %v823 = vld [vmem:[#allocation2 + $0xe8] sm:$0xf]
    %v824 = vld [vmem:[#allocation2 + $0xec] sm:$0xf]
    %v825 = vld [vmem:[#allocation2 + $0xf0] sm:$0xf]
    %v826 = vld [vmem:[#allocation2 + $0xf4] sm:$0xf]
    %v827 = vld [vmem:[#allocation2 + $0xf8] sm:$0xf]
    %v828 = vld [vmem:[#allocation2 + $0xfc] sm:$0xf]
    %v829 = vld [vmem:[#allocation2 + $0x100] sm:$0xf]
    %v830 = vld [vmem:[#allocation2 + $0x104] sm:$0xf]
    %v831 = vld [vmem:[#allocation2 + $0x108] sm:$0xf]
    %v832 = vld [vmem:[#allocation2 + $0x10c] sm:$0xf]
    %v833 = vld [vmem:[#allocation2 + $0x110] sm:$0xf]
    %v834 = vld [vmem:[#allocation2 + $0x114] sm:$0xf]
    %v835 = vld [vmem:[#allocation2 + $0x118] sm:$0xf]
    %v836 = vld [vmem:[#allocation2 + $0x11c] sm:$0xf]
    %v837 = vld [vmem:[#allocation2 + $0x120] sm:$0xf]
    %v838 = vld [vmem:[#allocation2 + $0x124] sm:$0xf]
    %v839 = vld [vmem:[#allocation2 + $0x128] sm:$0xf]
    %v840 = vld [vmem:[#allocation2 + $0x12c] sm:$0xf]
    %v841 = vld [vmem:[#allocation2 + $0x130] sm:$0xf]
    %v842 = vld [vmem:[#allocation2 + $0x134] sm:$0xf]
    %v843 = vld [vmem:[#allocation2 + $0x138] sm:$0xf]
    %v844 = vld [vmem:[#allocation2 + $0x13c] sm:$0xf]
    %v845 = vld [vmem:[#allocation2 + $0x140] sm:$0xf]
    %v846 = vld [vmem:[#allocation2 + $0x144] sm:$0xf]
    %v847 = vld [vmem:[#allocation2 + $0x148] sm:$0xf]
    %v848 = vld [vmem:[#allocation2 + $0x14c] sm:$0xf]
    %v849 = vld [vmem:[#allocation2 + $0x150] sm:$0xf]
    %v850 = vld [vmem:[#allocation2 + $0x154] sm:$0xf]
    %v851 = vld [vmem:[#allocation2 + $0x158] sm:$0xf]
    %v852 = vld [vmem:[#allocation2 + $0x15c] sm:$0xf]
    %v853 = vld [vmem:[#allocation2 + $0x160] sm:$0xf]
    %v854 = vld [vmem:[#allocation2 + $0x164] sm:$0xf]
    %v855 = vld [vmem:[#allocation2 + $0x168] sm:$0xf]
    %v856 = vld [vmem:[#allocation2 + $0x16c] sm:$0xf]
    %v857 = vld [vmem:[#allocation2 + $0x170] sm:$0xf]
    %v858 = vld [vmem:[#allocation2 + $0x174] sm:$0xf]
    %v859 = vld [vmem:[#allocation2 + $0x178] sm:$0xf]
    %v860 = vld [vmem:[#allocation2 + $0x17c] sm:$0xf]
    %v861 = vld [vmem:[#allocation2 + $0x180] sm:$0xf]
    %v862 = vld [vmem:[#allocation2 + $0x184] sm:$0xf]
    %v863 = vld [vmem:[#allocation2 + $0x188] sm:$0xf]
    %v864 = vld [vmem:[#allocation2 + $0x18c] sm:$0xf]
    %v865 = vld [vmem:[#allocation2 + $0x190] sm:$0xf]
    %v866 = vld [vmem:[#allocation2 + $0x194] sm:$0xf]
    %v867 = vld [vmem:[#allocation2 + $0x198] sm:$0xf]
    %v868 = vld [vmem:[#allocation2 + $0x19c] sm:$0xf]
    %v869 = vld [vmem:[#allocation2 + $0x1a0] sm:$0xf]
    %v870 = vld [vmem:[#allocation2 + $0x1a4] sm:$0xf]
    %v871 = vld [vmem:[#allocation2 + $0x1a8] sm:$0xf]
    %v872 = vld [vmem:[#allocation2 + $0x1ac] sm:$0xf]
    %v873 = vld [vmem:[#allocation2 + $0x1b0] sm:$0xf]
    %v874 = vld [vmem:[#allocation2 + $0x1b4] sm:$0xf]
    %v875 = vld [vmem:[#allocation2 + $0x1b8] sm:$0xf]
    %v876 = vld [vmem:[#allocation2 + $0x1bc] sm:$0xf]
    %v877 = vld [vmem:[#allocation2 + $0x1c0] sm:$0xf]
    %v878 = vld [vmem:[#allocation2 + $0x1c4] sm:$0xf]
    %v879 = vld [vmem:[#allocation2 + $0x1c8] sm:$0xf]
    %v880 = vld [vmem:[#allocation2 + $0x1cc] sm:$0xf]
    %v881 = vld [vmem:[#allocation2 + $0x1d0] sm:$0xf]
    %v882 = vld [vmem:[#allocation2 + $0x1d4] sm:$0xf]
    %v883 = vld [vmem:[#allocation2 + $0x1d8] sm:$0xf]
    %v884 = vld [vmem:[#allocation2 + $0x1dc] sm:$0xf]
    %v885 = vld [vmem:[#allocation2 + $0x1e0] sm:$0xf]
    %v886 = vld [vmem:[#allocation2 + $0x1e4] sm:$0xf]
    %v887 = vld [vmem:[#allocation2 + $0x1e8] sm:$0xf]
    %v888 = vld [vmem:[#allocation2 + $0x1ec] sm:$0xf]
    %v889 = vld [vmem:[#allocation2 + $0x1f0] sm:$0xf]
    %v890 = vld [vmem:[#allocation2 + $0x1f4] sm:$0xf]
    %v891 = vld [vmem:[#allocation2 + $0x1f8] sm:$0xf]
    %v892 = vld [vmem:[#allocation2 + $0x1fc] sm:$0xf]
    %v893 = vld [vmem:[#allocation2 + $0x200] sm:$0xf]
    %v894 = vld [vmem:[#allocation2 + $0x204] sm:$0xf]
    %v895 = vld [vmem:[#allocation2 + $0x208] sm:$0xf]
    %v896 = vld [vmem:[#allocation2 + $0x20c] sm:$0xf]
    %v897 = vld [vmem:[#allocation2 + $0x210] sm:$0xf]
    %v898 = vld [vmem:[#allocation2 + $0x214] sm:$0xf]
    %v899 = vld [vmem:[#allocation2 + $0x218] sm:$0xf]
    %v900 = vld [vmem:[#allocation2 + $0x21c] sm:$0xf]
    %v901 = vld [vmem:[#allocation2 + $0x220] sm:$0xf]
    %v902 = vld [vmem:[#allocation2 + $0x224] sm:$0xf]
    %v903 = vld [vmem:[#allocation2 + $0x228] sm:$0xf]
    %v904 = vld [vmem:[#allocation2 + $0x22c] sm:$0xf]
    %v905 = vld [vmem:[#allocation2 + $0x230] sm:$0xf]
    %v906 = vld [vmem:[#allocation2 + $0x234] sm:$0xf]
    %v907 = vld [vmem:[#allocation2 + $0x238] sm:$0xf]
    %v908 = vld [vmem:[#allocation2 + $0x23c] sm:$0xf]
    %v909 = vld [vmem:[#allocation2 + $0x240] sm:$0xf]
    %v910 = vld [vmem:[#allocation2 + $0x244] sm:$0xf]
    %v911 = vld [vmem:[#allocation2 + $0x248] sm:$0xf]
    %v912 = vld [vmem:[#allocation2 + $0x24c] sm:$0xf]
    %v913 = vld [vmem:[#allocation2 + $0x250] sm:$0xf]
    %v914 = vld [vmem:[#allocation2 + $0x254] sm:$0xf]
    %v915 = vld [vmem:[#allocation2 + $0x258] sm:$0xf]
    %v916 = vld [vmem:[#allocation2 + $0x25c] sm:$0xf]
    %v917 = vld [vmem:[#allocation2 + $0x260] sm:$0xf]
    %v918 = vld [vmem:[#allocation2 + $0x264] sm:$0xf]
    %v919 = vld [vmem:[#allocation2 + $0x268] sm:$0xf]
    %v920 = vld [vmem:[#allocation2 + $0x26c] sm:$0xf]
    %v921 = vld [vmem:[#allocation2 + $0x270] sm:$0xf]
    %v922 = vld [vmem:[#allocation2 + $0x274] sm:$0xf]
    %v923 = vld [vmem:[#allocation2 + $0x278] sm:$0xf]
    %v924 = vld [vmem:[#allocation2 + $0x27c] sm:$0xf]
    %v925 = vld [vmem:[#allocation2 + $0x280] sm:$0xf]
    %v926 = vld [vmem:[#allocation2 + $0x284] sm:$0xf]
    %v927 = vld [vmem:[#allocation2 + $0x288] sm:$0xf]
    %v928 = vld [vmem:[#allocation2 + $0x28c] sm:$0xf]
    %v929 = vld [vmem:[#allocation2 + $0x290] sm:$0xf]
    %v930 = vld [vmem:[#allocation2 + $0x294] sm:$0xf]
    %v931 = vld [vmem:[#allocation2 + $0x298] sm:$0xf]
    %v932 = vld [vmem:[#allocation2 + $0x29c] sm:$0xf]
    %v933 = vld [vmem:[#allocation2 + $0x2a0] sm:$0xf]
    %v934 = vld [vmem:[#allocation2 + $0x2a4] sm:$0xf]
    %v935 = vld [vmem:[#allocation2 + $0x2a8] sm:$0xf]
    %v936 = vld [vmem:[#allocation2 + $0x2ac] sm:$0xf]
    %v937 = vld [vmem:[#allocation2 + $0x2b0] sm:$0xf]
    %v938 = vld [vmem:[#allocation2 + $0x2b4] sm:$0xf]
    %v939 = vld [vmem:[#allocation2 + $0x2b8] sm:$0xf]
    %v940 = vld [vmem:[#allocation2 + $0x2bc] sm:$0xf]
    %v941 = vld [vmem:[#allocation2 + $0x2c0] sm:$0xf]
    %v942 = vld [vmem:[#allocation2 + $0x2c4] sm:$0xf]
    %v943 = vld [vmem:[#allocation2 + $0x2c8] sm:$0xf]
    %v944 = vld [vmem:[#allocation2 + $0x2cc] sm:$0xf]
    %v945 = vld [vmem:[#allocation2 + $0x2d0] sm:$0xf]
    %v946 = vld [vmem:[#allocation2 + $0x2d4] sm:$0xf]
    %v947 = vld [vmem:[#allocation2 + $0x2d8] sm:$0xf]
    %v948 = vld [vmem:[#allocation2 + $0x2dc] sm:$0xf]
    %v949 = vld [vmem:[#allocation2 + $0x2e0] sm:$0xf]
    %v950 = vld [vmem:[#allocation2 + $0x2e4] sm:$0xf]
    %v951 = vld [vmem:[#allocation2 + $0x2e8] sm:$0xf]
    %v952 = vld [vmem:[#allocation2 + $0x2ec] sm:$0xf]
    %v953 = vld [vmem:[#allocation2 + $0x2f0] sm:$0xf]
    %v954 = vld [vmem:[#allocation2 + $0x2f4] sm:$0xf]
    %v955 = vld [vmem:[#allocation2 + $0x2f8] sm:$0xf]
    %v956 = vld [vmem:[#allocation2 + $0x2fc] sm:$0xf]
    %v957 = vld [vmem:[#allocation2 + $0x300] sm:$0xf]
    %v958 = vld [vmem:[#allocation2 + $0x304] sm:$0xf]
    %v959 = vld [vmem:[#allocation2 + $0x308] sm:$0xf]
    %v960 = vld [vmem:[#allocation2 + $0x30c] sm:$0xf]
    %v961 = vld [vmem:[#allocation2 + $0x310] sm:$0xf]
    %v962 = vld [vmem:[#allocation2 + $0x314] sm:$0xf]
    %v963 = vld [vmem:[#allocation2 + $0x318] sm:$0xf]
    %v964 = vld [vmem:[#allocation2 + $0x31c] sm:$0xf]
    %v965 = vld [vmem:[#allocation2 + $0x320] sm:$0xf]
    %v966 = vld [vmem:[#allocation2 + $0x324] sm:$0xf]
    %v967 = vld [vmem:[#allocation2 + $0x328] sm:$0xf]
    %v968 = vld [vmem:[#allocation2 + $0x32c] sm:$0xf]
    %v969 = vld [vmem:[#allocation2 + $0x330] sm:$0xf]
    %v970 = vld [vmem:[#allocation2 + $0x334] sm:$0xf]
    %v971 = vld [vmem:[#allocation2 + $0x338] sm:$0xf]
    %v972 = vld [vmem:[#allocation2 + $0x33c] sm:$0xf]
    %v973 = vld [vmem:[#allocation2 + $0x340] sm:$0xf]
    %v974 = vld [vmem:[#allocation2 + $0x344] sm:$0xf]
    %v975 = vld [vmem:[#allocation2 + $0x348] sm:$0xf]
    %v976 = vld [vmem:[#allocation2 + $0x34c] sm:$0xf]
    %v977 = vld [vmem:[#allocation2 + $0x350] sm:$0xf]
    %v978 = vld [vmem:[#allocation2 + $0x354] sm:$0xf]
    %v979 = vld [vmem:[#allocation2 + $0x358] sm:$0xf]
    %v980 = vld [vmem:[#allocation2 + $0x35c] sm:$0xf]
    %v981 = vld [vmem:[#allocation2 + $0x360] sm:$0xf]
    %v982 = vld [vmem:[#allocation2 + $0x364] sm:$0xf]
    %v983 = vld [vmem:[#allocation2 + $0x368] sm:$0xf]
    %v984 = vld [vmem:[#allocation2 + $0x36c] sm:$0xf]
    %v985 = vld [vmem:[#allocation2 + $0x370] sm:$0xf]
    %v986 = vld [vmem:[#allocation2 + $0x374] sm:$0xf]
    %v987 = vld [vmem:[#allocation2 + $0x378] sm:$0xf]
    %v988 = vld [vmem:[#allocation2 + $0x37c] sm:$0xf]
    %v989 = vld [vmem:[#allocation2 + $0x380] sm:$0xf]
    %v990 = vld [vmem:[#allocation2 + $0x384] sm:$0xf]
    %v991 = vld [vmem:[#allocation2 + $0x388] sm:$0xf]
    %v992 = vld [vmem:[#allocation2 + $0x38c] sm:$0xf]
    %v993 = vld [vmem:[#allocation2 + $0x390] sm:$0xf]
    %v994 = vld [vmem:[#allocation2 + $0x394] sm:$0xf]
    %v995 = vld [vmem:[#allocation2 + $0x398] sm:$0xf]
    %v996 = vld [vmem:[#allocation2 + $0x39c] sm:$0xf]
    %v997 = vld [vmem:[#allocation2 + $0x3a0] sm:$0xf]
    %v998 = vld [vmem:[#allocation2 + $0x3a4] sm:$0xf]
    %v999 = vld [vmem:[#allocation2 + $0x3a8] sm:$0xf]
    %v1000 = vld [vmem:[#allocation2 + $0x3ac] sm:$0xf]
    %v1001 = vld [vmem:[#allocation2 + $0x3b0] sm:$0xf]
    %v1002 = vld [vmem:[#allocation2 + $0x3b4] sm:$0xf]
    %v1003 = vld [vmem:[#allocation2 + $0x3b8] sm:$0xf]
    %v1004 = vld [vmem:[#allocation2 + $0x3bc] sm:$0xf]
    %v1005 = vld [vmem:[#allocation2 + $0x3c0] sm:$0xf]
    %v1006 = vld [vmem:[#allocation2 + $0x3c4] sm:$0xf]
    %v1007 = vld [vmem:[#allocation2 + $0x3c8] sm:$0xf]
    %v1008 = vld [vmem:[#allocation2 + $0x3cc] sm:$0xf]
    %v1009 = vld [vmem:[#allocation2 + $0x3d0] sm:$0xf]
    %v1010 = vld [vmem:[#allocation2 + $0x3d4] sm:$0xf]
    %v1011 = vld [vmem:[#allocation2 + $0x3d8] sm:$0xf]
    %v1012 = vld [vmem:[#allocation2 + $0x3dc] sm:$0xf]
    %v1013 = vld [vmem:[#allocation2 + $0x3e0] sm:$0xf]
    %v1014 = vld [vmem:[#allocation2 + $0x3e4] sm:$0xf]
    %v1015 = vld [vmem:[#allocation2 + $0x3e8] sm:$0xf]
    %v1016 = vld [vmem:[#allocation2 + $0x3ec] sm:$0xf]
    %v1017 = vld [vmem:[#allocation2 + $0x3f0] sm:$0xf]
    %v1018 = vld [vmem:[#allocation2 + $0x3f4] sm:$0xf]
    %v1019 = vld [vmem:[#allocation2 + $0x3f8] sm:$0xf]
    %v1020 = vld [vmem:[#allocation2 + $0x3fc] sm:$0xf]
    %v1021 = vld [vmem:[#allocation2 + $0x400] sm:$0xf]
    %v1022 = vld [vmem:[#allocation2 + $0x404] sm:$0xf]
    %v1023 = vld [vmem:[#allocation2 + $0x408] sm:$0xf]
    %v1024 = vld [vmem:[#allocation2 + $0x40c] sm:$0xf]
    %v1025 = vld [vmem:[#allocation2 + $0x410] sm:$0xf]
    %v1026 = vld [vmem:[#allocation2 + $0x414] sm:$0xf]
    %v1027 = vld [vmem:[#allocation2 + $0x418] sm:$0xf]
    %v1028 = vld [vmem:[#allocation2 + $0x41c] sm:$0xf]
    %v1029 = vld [vmem:[#allocation2 + $0x420] sm:$0xf]
    %v1030 = vld [vmem:[#allocation2 + $0x424] sm:$0xf]
    %v1031 = vld [vmem:[#allocation2 + $0x428] sm:$0xf]
    %v1032 = vld [vmem:[#allocation2 + $0x42c] sm:$0xf]
    %v1033 = vld [vmem:[#allocation2 + $0x430] sm:$0xf]
    %v1034 = vld [vmem:[#allocation2 + $0x434] sm:$0xf]
    %v1035 = vld [vmem:[#allocation2 + $0x438] sm:$0xf]
    %v1036 = vld [vmem:[#allocation2 + $0x43c] sm:$0xf]
    %v1037 = vld [vmem:[#allocation2 + $0x440] sm:$0xf]
    %v1038 = vld [vmem:[#allocation2 + $0x444] sm:$0xf]
    %v1039 = vld [vmem:[#allocation2 + $0x448] sm:$0xf]
    %v1040 = vld [vmem:[#allocation2 + $0x44c] sm:$0xf]
    %v1041 = vld [vmem:[#allocation2 + $0x450] sm:$0xf]
    %v1042 = vld [vmem:[#allocation2 + $0x454] sm:$0xf]
    %v1043 = vld [vmem:[#allocation2 + $0x458] sm:$0xf]
    %v1044 = vld [vmem:[#allocation2 + $0x45c] sm:$0xf]
    %v1045 = vld [vmem:[#allocation2 + $0x460] sm:$0xf]
    %v1046 = vld [vmem:[#allocation2 + $0x464] sm:$0xf]
    %v1047 = vld [vmem:[#allocation2 + $0x468] sm:$0xf]
    %v1048 = vld [vmem:[#allocation2 + $0x46c] sm:$0xf]
    %v1049 = vld [vmem:[#allocation2 + $0x470] sm:$0xf]
    %v1050 = vld [vmem:[#allocation2 + $0x474] sm:$0xf]
    %v1051 = vld [vmem:[#allocation2 + $0x478] sm:$0xf]
    %v1052 = vld [vmem:[#allocation2 + $0x47c] sm:$0xf]
    %v1053 = vld [vmem:[#allocation2 + $0x480] sm:$0xf]
    %v1054 = vld [vmem:[#allocation2 + $0x484] sm:$0xf]
    %v1055 = vld [vmem:[#allocation2 + $0x488] sm:$0xf]
    %v1056 = vld [vmem:[#allocation2 + $0x48c] sm:$0xf]
    %v1057 = vld [vmem:[#allocation2 + $0x490] sm:$0xf]
    %v1058 = vld [vmem:[#allocation2 + $0x494] sm:$0xf]
    %v1059 = vld [vmem:[#allocation2 + $0x498] sm:$0xf]
    %v1060 = vld [vmem:[#allocation2 + $0x49c] sm:$0xf]
    %v1061 = vld [vmem:[#allocation2 + $0x4a0] sm:$0xf]
    %v1062 = vld [vmem:[#allocation2 + $0x4a4] sm:$0xf]
    %v1063 = vld [vmem:[#allocation2 + $0x4a8] sm:$0xf]
    %v1064 = vld [vmem:[#allocation2 + $0x4ac] sm:$0xf]
    %v1065 = vld [vmem:[#allocation2 + $0x4b0] sm:$0xf]
    %v1066 = vld [vmem:[#allocation2 + $0x4b4] sm:$0xf]
    %v1067 = vld [vmem:[#allocation2 + $0x4b8] sm:$0xf]
    %v1068 = vld [vmem:[#allocation2 + $0x4bc] sm:$0xf]
    %v1069 = vld [vmem:[#allocation2 + $0x4c0] sm:$0xf]
    %v1070 = vld [vmem:[#allocation2 + $0x4c4] sm:$0xf]
    %v1071 = vld [vmem:[#allocation2 + $0x4c8] sm:$0xf]
    %v1072 = vld [vmem:[#allocation2 + $0x4cc] sm:$0xf]
    %v1073 = vld [vmem:[#allocation2 + $0x4d0] sm:$0xf]
    %v1074 = vld [vmem:[#allocation2 + $0x4d4] sm:$0xf]
    %v1075 = vld [vmem:[#allocation2 + $0x4d8] sm:$0xf]
    %v1076 = vld [vmem:[#allocation2 + $0x4dc] sm:$0xf]
    %v1077 = vld [vmem:[#allocation2 + $0x4e0] sm:$0xf]
    %v1078 = vld [vmem:[#allocation2 + $0x4e4] sm:$0xf]
    %v1079 = vld [vmem:[#allocation2 + $0x4e8] sm:$0xf]
    %v1080 = vld [vmem:[#allocation2 + $0x4ec] sm:$0xf]
    %v1081 = vld [vmem:[#allocation2 + $0x4f0] sm:$0xf]
    %v1082 = vld [vmem:[#allocation2 + $0x4f4] sm:$0xf]
    %v1083 = vld [vmem:[#allocation2 + $0x4f8] sm:$0xf]
    %v1084 = vld [vmem:[#allocation2 + $0x4fc] sm:$0xf]
    %v1085 = vld [vmem:[#allocation2 + $0x500] sm:$0xf]
    %v1086 = vld [vmem:[#allocation2 + $0x504] sm:$0xf]
    %v1087 = vld [vmem:[#allocation2 + $0x508] sm:$0xf]
    %v1088 = vld [vmem:[#allocation2 + $0x50c] sm:$0xf]
    %v1089 = vld [vmem:[#allocation2 + $0x510] sm:$0xf]
    %v1090 = vld [vmem:[#allocation2 + $0x514] sm:$0xf]
    %v1091 = vld [vmem:[#allocation2 + $0x518] sm:$0xf]
    %v1092 = vld [vmem:[#allocation2 + $0x51c] sm:$0xf]
    %v1093 = vld [vmem:[#allocation2 + $0x520] sm:$0xf]
    %v1094 = vld [vmem:[#allocation2 + $0x524] sm:$0xf]
    %v1095 = vld [vmem:[#allocation2 + $0x528] sm:$0xf]
    %v1096 = vld [vmem:[#allocation2 + $0x52c] sm:$0xf]
    %v1097 = vld [vmem:[#allocation2 + $0x530] sm:$0xf]
    %v1098 = vld [vmem:[#allocation2 + $0x534] sm:$0xf]
    %v1099 = vld [vmem:[#allocation2 + $0x538] sm:$0xf]
    %v1100 = vld [vmem:[#allocation2 + $0x53c] sm:$0xf]
    %v1101 = vld [vmem:[#allocation2 + $0x540] sm:$0xf]
    %v1102 = vld [vmem:[#allocation2 + $0x544] sm:$0xf]
    %v1103 = vld [vmem:[#allocation2 + $0x548] sm:$0xf]
    %v1104 = vld [vmem:[#allocation2 + $0x54c] sm:$0xf]
    %v1105 = vld [vmem:[#allocation2 + $0x550] sm:$0xf]
    %v1106 = vld [vmem:[#allocation2 + $0x554] sm:$0xf]
    %v1107 = vld [vmem:[#allocation2 + $0x558] sm:$0xf]
    %v1108 = vld [vmem:[#allocation2 + $0x55c] sm:$0xf]
    %v1109 = vld [vmem:[#allocation2 + $0x560] sm:$0xf]
    %v1110 = vld [vmem:[#allocation2 + $0x564] sm:$0xf]
    %v1111 = vld [vmem:[#allocation2 + $0x568] sm:$0xf]
    %v1112 = vld [vmem:[#allocation2 + $0x56c] sm:$0xf]
    %v1113 = vld [vmem:[#allocation2 + $0x570] sm:$0xf]
    %v1114 = vld [vmem:[#allocation2 + $0x574] sm:$0xf]
    %v1115 = vld [vmem:[#allocation2 + $0x578] sm:$0xf]
    %v1116 = vld [vmem:[#allocation2 + $0x57c] sm:$0xf]
    %v1117 = vld [vmem:[#allocation2 + $0x580] sm:$0xf]
    %v1118 = vld [vmem:[#allocation2 + $0x584] sm:$0xf]
    %v1119 = vld [vmem:[#allocation2 + $0x588] sm:$0xf]
    %v1120 = vld [vmem:[#allocation2 + $0x58c] sm:$0xf]
    %v1121 = vld [vmem:[#allocation2 + $0x590] sm:$0xf]
    %v1122 = vld [vmem:[#allocation2 + $0x594] sm:$0xf]
    %v1123 = vld [vmem:[#allocation2 + $0x598] sm:$0xf]
    %v1124 = vld [vmem:[#allocation2 + $0x59c] sm:$0xf]
    %v1125 = vld [vmem:[#allocation2 + $0x5a0] sm:$0xf]
    %v1126 = vld [vmem:[#allocation2 + $0x5a4] sm:$0xf]
    %v1127 = vld [vmem:[#allocation2 + $0x5a8] sm:$0xf]
    %v1128 = vld [vmem:[#allocation2 + $0x5ac] sm:$0xf]
    %v1129 = vld [vmem:[#allocation2 + $0x5b0] sm:$0xf]
    %v1130 = vld [vmem:[#allocation2 + $0x5b4] sm:$0xf]
    %v1131 = vld [vmem:[#allocation2 + $0x5b8] sm:$0xf]
    %v1132 = vld [vmem:[#allocation2 + $0x5bc] sm:$0xf]
    %v1133 = vld [vmem:[#allocation2 + $0x5c0] sm:$0xf]
    %v1134 = vld [vmem:[#allocation2 + $0x5c4] sm:$0xf]
    %v1135 = vld [vmem:[#allocation2 + $0x5c8] sm:$0xf]
    %v1136 = vld [vmem:[#allocation2 + $0x5cc] sm:$0xf]
    %v1137 = vld [vmem:[#allocation2 + $0x5d0] sm:$0xf]
    %v1138 = vld [vmem:[#allocation2 + $0x5d4] sm:$0xf]
    %v1139 = vld [vmem:[#allocation2 + $0x5d8] sm:$0xf]
    %v1140 = vld [vmem:[#allocation2 + $0x5dc] sm:$0xf]
    %v1141 = vld [vmem:[#allocation2 + $0x5e0] sm:$0xf]
    %v1142 = vld [vmem:[#allocation2 + $0x5e4] sm:$0xf]
    %v1143 = vld [vmem:[#allocation2 + $0x5e8] sm:$0xf]
    %v1144 = vld [vmem:[#allocation2 + $0x5ec] sm:$0xf]
    %v1145 = vld [vmem:[#allocation2 + $0x5f0] sm:$0xf]
    %v1146 = vld [vmem:[#allocation2 + $0x5f4] sm:$0xf]
    %v1147 = vld [vmem:[#allocation2 + $0x5f8] sm:$0xf]
    %v1148 = vld [vmem:[#allocation2 + $0x5fc] sm:$0xf]
    %v1149 = vld [vmem:[#allocation2 + $0x600] sm:$0xf]
    %v1150 = vld [vmem:[#allocation2 + $0x604] sm:$0xf]
    %v1151 = vld [vmem:[#allocation2 + $0x608] sm:$0xf]
    %v1152 = vld [vmem:[#allocation2 + $0x60c] sm:$0xf]
    %v1153 = vld [vmem:[#allocation2 + $0x610] sm:$0xf]
    %v1154 = vld [vmem:[#allocation2 + $0x614] sm:$0xf]
    %v1155 = vld [vmem:[#allocation2 + $0x618] sm:$0xf]
    %v1156 = vld [vmem:[#allocation2 + $0x61c] sm:$0xf]
    %v1157 = vld [vmem:[#allocation2 + $0x620] sm:$0xf]
    %v1158 = vld [vmem:[#allocation2 + $0x624] sm:$0xf]
    %v1159 = vld [vmem:[#allocation2 + $0x628] sm:$0xf]
    %v1160 = vld [vmem:[#allocation2 + $0x62c] sm:$0xf]
    %v1161 = vld [vmem:[#allocation2 + $0x630] sm:$0xf]
    %v1162 = vld [vmem:[#allocation2 + $0x634] sm:$0xf]
    %v1163 = vld [vmem:[#allocation2 + $0x638] sm:$0xf]
    %v1164 = vld [vmem:[#allocation2 + $0x63c] sm:$0xf]
    %v1165 = vld [vmem:[#allocation2 + $0x640] sm:$0xf]
    %v1166 = vld [vmem:[#allocation2 + $0x644] sm:$0xf]
    %v1167 = vld [vmem:[#allocation2 + $0x648] sm:$0xf]
    %v1168 = vld [vmem:[#allocation2 + $0x64c] sm:$0xf]
    %v1169 = vld [vmem:[#allocation2 + $0x650] sm:$0xf]
    %v1170 = vld [vmem:[#allocation2 + $0x654] sm:$0xf]
    %v1171 = vld [vmem:[#allocation2 + $0x658] sm:$0xf]
    %v1172 = vld [vmem:[#allocation2 + $0x65c] sm:$0xf]
    %v1173 = vld [vmem:[#allocation2 + $0x660] sm:$0xf]
    %v1174 = vld [vmem:[#allocation2 + $0x664] sm:$0xf]
    %v1175 = vld [vmem:[#allocation2 + $0x668] sm:$0xf]
    %v1176 = vld [vmem:[#allocation2 + $0x66c] sm:$0xf]
    %v1177 = vld [vmem:[#allocation2 + $0x670] sm:$0xf]
    %v1178 = vld [vmem:[#allocation2 + $0x674] sm:$0xf]
    %v1179 = vld [vmem:[#allocation2 + $0x678] sm:$0xf]
    %v1180 = vld [vmem:[#allocation2 + $0x67c] sm:$0xf]
    %v1181 = vld [vmem:[#allocation2 + $0x680] sm:$0xf]
    %v1182 = vld [vmem:[#allocation2 + $0x684] sm:$0xf]
    %v1183 = vld [vmem:[#allocation2 + $0x688] sm:$0xf]
    %v1184 = vld [vmem:[#allocation2 + $0x68c] sm:$0xf]
    %v1185 = vld [vmem:[#allocation2 + $0x690] sm:$0xf]
    %v1186 = vld [vmem:[#allocation2 + $0x694] sm:$0xf]
    %v1187 = vld [vmem:[#allocation2 + $0x698] sm:$0xf]
    %v1188 = vld [vmem:[#allocation2 + $0x69c] sm:$0xf]
    %v1189 = vld [vmem:[#allocation2 + $0x6a0] sm:$0xf]
    %v1190 = vld [vmem:[#allocation2 + $0x6a4] sm:$0xf]
    %v1191 = vld [vmem:[#allocation2 + $0x6a8] sm:$0xf]
    %v1192 = vld [vmem:[#allocation2 + $0x6ac] sm:$0xf]
    %v1193 = vld [vmem:[#allocation2 + $0x6b0] sm:$0xf]
    %v1194 = vld [vmem:[#allocation2 + $0x6b4] sm:$0xf]
    %v1195 = vld [vmem:[#allocation2 + $0x6b8] sm:$0xf]
    %v1196 = vld [vmem:[#allocation2 + $0x6bc] sm:$0xf]
    %v1197 = vld [vmem:[#allocation2 + $0x6c0] sm:$0xf]
    %v1198 = vld [vmem:[#allocation2 + $0x6c4] sm:$0xf]
    %v1199 = vld [vmem:[#allocation2 + $0x6c8] sm:$0xf]
    %v1200 = vld [vmem:[#allocation2 + $0x6cc] sm:$0xf]
    %v1201 = vld [vmem:[#allocation2 + $0x6d0] sm:$0xf]
    %v1202 = vld [vmem:[#allocation2 + $0x6d4] sm:$0xf]
    %v1203 = vld [vmem:[#allocation2 + $0x6d8] sm:$0xf]
    %v1204 = vld [vmem:[#allocation2 + $0x6dc] sm:$0xf]
    %v1205 = vld [vmem:[#allocation2 + $0x6e0] sm:$0xf]
    %v1206 = vld [vmem:[#allocation2 + $0x6e4] sm:$0xf]
    %v1207 = vld [vmem:[#allocation2 + $0x6e8] sm:$0xf]
    %v1208 = vld [vmem:[#allocation2 + $0x6ec] sm:$0xf]
    %v1209 = vld [vmem:[#allocation2 + $0x6f0] sm:$0xf]
    %v1210 = vld [vmem:[#allocation2 + $0x6f4] sm:$0xf]
    %v1211 = vld [vmem:[#allocation2 + $0x6f8] sm:$0xf]
    %v1212 = vld [vmem:[#allocation2 + $0x6fc] sm:$0xf]
    %v1213 = vld [vmem:[#allocation2 + $0x700] sm:$0xf]
    %v1214 = vld [vmem:[#allocation2 + $0x704] sm:$0xf]
    %v1215 = vld [vmem:[#allocation2 + $0x708] sm:$0xf]
    %v1216 = vld [vmem:[#allocation2 + $0x70c] sm:$0xf]
    %v1217 = vld [vmem:[#allocation2 + $0x710] sm:$0xf]
    %v1218 = vld [vmem:[#allocation2 + $0x714] sm:$0xf]
    %v1219 = vld [vmem:[#allocation2 + $0x718] sm:$0xf]
    %v1220 = vld [vmem:[#allocation2 + $0x71c] sm:$0xf]
    %v1221 = vld [vmem:[#allocation2 + $0x720] sm:$0xf]
    %v1222 = vld [vmem:[#allocation2 + $0x724] sm:$0xf]
    %v1223 = vld [vmem:[#allocation2 + $0x728] sm:$0xf]
    %v1224 = vld [vmem:[#allocation2 + $0x72c] sm:$0xf]
    %v1225 = vld [vmem:[#allocation2 + $0x730] sm:$0xf]
    %v1226 = vld [vmem:[#allocation2 + $0x734] sm:$0xf]
    %v1227 = vld [vmem:[#allocation2 + $0x738] sm:$0xf]
    %v1228 = vld [vmem:[#allocation2 + $0x73c] sm:$0xf]
    %v1229 = vld [vmem:[#allocation2 + $0x740] sm:$0xf]
    %v1230 = vld [vmem:[#allocation2 + $0x744] sm:$0xf]
    %v1231 = vld [vmem:[#allocation2 + $0x748] sm:$0xf]
    %v1232 = vld [vmem:[#allocation2 + $0x74c] sm:$0xf]
    %v1233 = vld [vmem:[#allocation2 + $0x750] sm:$0xf]
    %v1234 = vld [vmem:[#allocation2 + $0x754] sm:$0xf]
    %v1235 = vld [vmem:[#allocation2 + $0x758] sm:$0xf]
    %v1236 = vld [vmem:[#allocation2 + $0x75c] sm:$0xf]
    %v1237 = vld [vmem:[#allocation2 + $0x760] sm:$0xf]
    %v1238 = vld [vmem:[#allocation2 + $0x764] sm:$0xf]
    %v1239 = vld [vmem:[#allocation2 + $0x768] sm:$0xf]
    %v1240 = vld [vmem:[#allocation2 + $0x76c] sm:$0xf]
    %v1241 = vld [vmem:[#allocation2 + $0x770] sm:$0xf]
    %v1242 = vld [vmem:[#allocation2 + $0x774] sm:$0xf]
    %v1243 = vld [vmem:[#allocation2 + $0x778] sm:$0xf]
    %v1244 = vld [vmem:[#allocation2 + $0x77c] sm:$0xf]
    %v1245 = vld [vmem:[%s2] sm:$0x7]
    %v1246 = vlaneseq
    %v1247 = vshrl.u32 %v1246, 7
    %v1248 = vsub.s32 0, %v1247
    %v1249 = vrot.slane %v1245, %v1248
    %v1730 = vunpack.c.l.b16 %v765
    %v1731 = vunpack.c.l.b16 %v766
    %v1732 = vunpack.c.l.b16 %v767
    %v1733 = vunpack.c.l.b16 %v768
    %v1734 = vunpack.c.l.b16 %v769
    %v1735 = vunpack.c.l.b16 %v770
    %v1736 = vunpack.c.l.b16 %v771
    %v1737 = vunpack.c.l.b16 %v772
    %v1738 = vunpack.c.l.b16 %v773
    %v1739 = vunpack.c.l.b16 %v774
    %v1740 = vunpack.c.l.b16 %v775
    %v1741 = vunpack.c.l.b16 %v776
    %v1742 = vunpack.c.l.b16 %v777
    %v1743 = vunpack.c.l.b16 %v778
    %v1744 = vunpack.c.l.b16 %v779
    %v1745 = vunpack.c.l.b16 %v780
    %v1746 = vunpack.c.l.b16 %v781
    %v1747 = vunpack.c.l.b16 %v782
    %v1748 = vunpack.c.l.b16 %v783
    %v1749 = vunpack.c.l.b16 %v784
    %v1750 = vunpack.c.l.b16 %v785
    %v1751 = vunpack.c.l.b16 %v786
    %v1752 = vunpack.c.l.b16 %v787
    %v1753 = vunpack.c.l.b16 %v788
    %v1754 = vunpack.c.l.b16 %v789
    %v1755 = vunpack.c.l.b16 %v790
    %v1756 = vunpack.c.l.b16 %v791
    %v1757 = vunpack.c.l.b16 %v792
    %v1758 = vunpack.c.l.b16 %v793
    %v1759 = vunpack.c.l.b16 %v794
    %v1760 = vunpack.c.l.b16 %v795
    %v1761 = vunpack.c.l.b16 %v796
    %v1762 = vunpack.c.l.b16 %v797
    %v1763 = vunpack.c.l.b16 %v798
    %v1764 = vunpack.c.l.b16 %v799
    %v1765 = vunpack.c.l.b16 %v800
    %v1766 = vunpack.c.l.b16 %v801
    %v1767 = vunpack.c.l.b16 %v802
    %v1768 = vunpack.c.l.b16 %v803
    %v1769 = vunpack.c.l.b16 %v804
    %v1770 = vunpack.c.l.b16 %v805
    %v1771 = vunpack.c.l.b16 %v806
    %v1772 = vunpack.c.l.b16 %v807
    %v1773 = vunpack.c.l.b16 %v808
    %v1774 = vunpack.c.l.b16 %v809
    %v1775 = vunpack.c.l.b16 %v810
    %v1776 = vunpack.c.l.b16 %v811
    %v1777 = vunpack.c.l.b16 %v812
    %v1778 = vunpack.c.l.b16 %v813
    %v1779 = vunpack.c.l.b16 %v814
    %v1780 = vunpack.c.l.b16 %v815
    %v1781 = vunpack.c.l.b16 %v816
    %v1782 = vunpack.c.l.b16 %v817
    %v1783 = vunpack.c.l.b16 %v818
    %v1784 = vunpack.c.l.b16 %v819
    %v1785 = vunpack.c.l.b16 %v820
    %v1786 = vunpack.c.l.b16 %v821
    %v1787 = vunpack.c.l.b16 %v822
    %v1788 = vunpack.c.l.b16 %v823
    %v1789 = vunpack.c.l.b16 %v824
    %v1790 = vunpack.c.l.b16 %v825
    %v1791 = vunpack.c.l.b16 %v826
    %v1792 = vunpack.c.l.b16 %v827
    %v1793 = vunpack.c.l.b16 %v828
    %v1794 = vunpack.c.l.b16 %v829
    %v1795 = vunpack.c.l.b16 %v830
    %v1796 = vunpack.c.l.b16 %v831
    %v1797 = vunpack.c.l.b16 %v832
    %v1798 = vunpack.c.l.b16 %v833
    %v1799 = vunpack.c.l.b16 %v834
    %v1800 = vunpack.c.l.b16 %v835
    %v1801 = vunpack.c.l.b16 %v836
    %v1802 = vunpack.c.l.b16 %v837
    %v1803 = vunpack.c.l.b16 %v838
    %v1804 = vunpack.c.l.b16 %v839
    %v1805 = vunpack.c.l.b16 %v840
    %v1806 = vunpack.c.l.b16 %v841
    %v1807 = vunpack.c.l.b16 %v842
    %v1808 = vunpack.c.l.b16 %v843
    %v1809 = vunpack.c.l.b16 %v844
    %v1810 = vunpack.c.l.b16 %v845
    %v1811 = vunpack.c.l.b16 %v846
    %v1812 = vunpack.c.l.b16 %v847
    %v1813 = vunpack.c.l.b16 %v848
    %v1814 = vunpack.c.l.b16 %v849
    %v1815 = vunpack.c.l.b16 %v850
    %v1816 = vunpack.c.l.b16 %v851
    %v1817 = vunpack.c.l.b16 %v852
    %v1818 = vunpack.c.l.b16 %v853
    %v1819 = vunpack.c.l.b16 %v854
    %v1820 = vunpack.c.l.b16 %v855
    %v1821 = vunpack.c.l.b16 %v856
    %v1822 = vunpack.c.l.b16 %v857
    %v1823 = vunpack.c.l.b16 %v858
    %v1824 = vunpack.c.l.b16 %v859
    %v1825 = vunpack.c.l.b16 %v860
    %v1826 = vunpack.c.l.b16 %v861
    %v1827 = vunpack.c.l.b16 %v862
    %v1828 = vunpack.c.l.b16 %v863
    %v1829 = vunpack.c.l.b16 %v864
    %v1830 = vunpack.c.l.b16 %v865
    %v1831 = vunpack.c.l.b16 %v866
    %v1832 = vunpack.c.l.b16 %v867
    %v1833 = vunpack.c.l.b16 %v868
    %v1834 = vunpack.c.l.b16 %v869
    %v1835 = vunpack.c.l.b16 %v870
    %v1836 = vunpack.c.l.b16 %v871
    %v1837 = vunpack.c.l.b16 %v872
    %v1838 = vunpack.c.l.b16 %v873
    %v1839 = vunpack.c.l.b16 %v874
    %v1840 = vunpack.c.l.b16 %v875
    %v1841 = vunpack.c.l.b16 %v876
    %v1842 = vunpack.c.l.b16 %v877
    %v1843 = vunpack.c.l.b16 %v878
    %v1844 = vunpack.c.l.b16 %v879
    %v1845 = vunpack.c.l.b16 %v880
    %v1846 = vunpack.c.l.b16 %v881
    %v1847 = vunpack.c.l.b16 %v882
    %v1848 = vunpack.c.l.b16 %v883
    %v1849 = vunpack.c.l.b16 %v884
    %v1850 = vunpack.c.l.b16 %v885
    %v1851 = vunpack.c.l.b16 %v886
    %v1852 = vunpack.c.l.b16 %v887
    %v1853 = vunpack.c.l.b16 %v888
    %v1854 = vunpack.c.l.b16 %v889
    %v1855 = vunpack.c.l.b16 %v890
    %v1856 = vunpack.c.l.b16 %v891
    %v1857 = vunpack.c.l.b16 %v892
    %v1858 = vunpack.c.l.b16 %v893
    %v1859 = vunpack.c.l.b16 %v894
    %v1860 = vunpack.c.l.b16 %v895
    %v1861 = vunpack.c.l.b16 %v896
    %v1862 = vunpack.c.l.b16 %v897
    %v1863 = vunpack.c.l.b16 %v898
    %v1864 = vunpack.c.l.b16 %v899
    %v1865 = vunpack.c.l.b16 %v900
    %v1866 = vunpack.c.l.b16 %v901
    %v1867 = vunpack.c.l.b16 %v902
    %v1868 = vunpack.c.l.b16 %v903
    %v1869 = vunpack.c.l.b16 %v904
    %v1870 = vunpack.c.l.b16 %v905
    %v1871 = vunpack.c.l.b16 %v906
    %v1872 = vunpack.c.l.b16 %v907
    %v1873 = vunpack.c.l.b16 %v908
    %v1874 = vunpack.c.l.b16 %v909
    %v1875 = vunpack.c.l.b16 %v910
    %v1876 = vunpack.c.l.b16 %v911
    %v1877 = vunpack.c.l.b16 %v912
    %v1878 = vunpack.c.l.b16 %v913
    %v1879 = vunpack.c.l.b16 %v914
    %v1880 = vunpack.c.l.b16 %v915
    %v1881 = vunpack.c.l.b16 %v916
    %v1882 = vunpack.c.l.b16 %v917
    %v1883 = vunpack.c.l.b16 %v918
    %v1884 = vunpack.c.l.b16 %v919
    %v1885 = vunpack.c.l.b16 %v920
    %v1886 = vunpack.c.l.b16 %v921
    %v1887 = vunpack.c.l.b16 %v922
    %v1888 = vunpack.c.l.b16 %v923
    %v1889 = vunpack.c.l.b16 %v924
    %v1890 = vunpack.c.l.b16 %v925
    %v1891 = vunpack.c.l.b16 %v926
    %v1892 = vunpack.c.l.b16 %v927
    %v1893 = vunpack.c.l.b16 %v928
    %v1894 = vunpack.c.l.b16 %v929
    %v1895 = vunpack.c.l.b16 %v930
    %v1896 = vunpack.c.l.b16 %v931
    %v1897 = vunpack.c.l.b16 %v932
    %v1898 = vunpack.c.l.b16 %v933
    %v1899 = vunpack.c.l.b16 %v934
    %v1900 = vunpack.c.l.b16 %v935
    %v1901 = vunpack.c.l.b16 %v936
    %v1902 = vunpack.c.l.b16 %v937
    %v1903 = vunpack.c.l.b16 %v938
    %v1904 = vunpack.c.l.b16 %v939
    %v1905 = vunpack.c.l.b16 %v940
    %v1906 = vunpack.c.l.b16 %v941
    %v1907 = vunpack.c.l.b16 %v942
    %v1908 = vunpack.c.l.b16 %v943
    %v1909 = vunpack.c.l.b16 %v944
    %v1910 = vunpack.c.l.b16 %v945
    %v1911 = vunpack.c.l.b16 %v946
    %v1912 = vunpack.c.l.b16 %v947
    %v1913 = vunpack.c.l.b16 %v948
    %v1914 = vunpack.c.l.b16 %v949
    %v1915 = vunpack.c.l.b16 %v950
    %v1916 = vunpack.c.l.b16 %v951
    %v1917 = vunpack.c.l.b16 %v952
    %v1918 = vunpack.c.l.b16 %v953
    %v1919 = vunpack.c.l.b16 %v954
    %v1920 = vunpack.c.l.b16 %v955
    %v1921 = vunpack.c.l.b16 %v956
    %v1922 = vunpack.c.l.b16 %v957
    %v1923 = vunpack.c.l.b16 %v958
    %v1924 = vunpack.c.l.b16 %v959
    %v1925 = vunpack.c.l.b16 %v960
    %v1926 = vunpack.c.l.b16 %v961
    %v1927 = vunpack.c.l.b16 %v962
    %v1928 = vunpack.c.l.b16 %v963
    %v1929 = vunpack.c.l.b16 %v964
    %v1930 = vunpack.c.l.b16 %v965
    %v1931 = vunpack.c.l.b16 %v966
    %v1932 = vunpack.c.l.b16 %v967
    %v1933 = vunpack.c.l.b16 %v968
    %v1934 = vunpack.c.l.b16 %v969
    %v1935 = vunpack.c.l.b16 %v970
    %v1936 = vunpack.c.l.b16 %v971
    %v1937 = vunpack.c.l.b16 %v972
    %v1938 = vunpack.c.l.b16 %v973
    %v1939 = vunpack.c.l.b16 %v974
    %v1940 = vunpack.c.l.b16 %v975
    %v1941 = vunpack.c.l.b16 %v976
    %v1942 = vunpack.c.l.b16 %v977
    %v1943 = vunpack.c.l.b16 %v978
    %v1944 = vunpack.c.l.b16 %v979
    %v1945 = vunpack.c.l.b16 %v980
    %v1946 = vunpack.c.l.b16 %v981
    %v1947 = vunpack.c.l.b16 %v982
    %v1948 = vunpack.c.l.b16 %v983
    %v1949 = vunpack.c.l.b16 %v984
    %v1950 = vunpack.c.l.b16 %v985
    %v1951 = vunpack.c.l.b16 %v986
    %v1952 = vunpack.c.l.b16 %v987
    %v1953 = vunpack.c.l.b16 %v988
    %v1954 = vunpack.c.l.b16 %v989
    %v1955 = vunpack.c.l.b16 %v990
    %v1956 = vunpack.c.l.b16 %v991
    %v1957 = vunpack.c.l.b16 %v992
    %v1958 = vunpack.c.l.b16 %v993
    %v1959 = vunpack.c.l.b16 %v994
    %v1960 = vunpack.c.l.b16 %v995
    %v1961 = vunpack.c.l.b16 %v996
    %v1962 = vunpack.c.l.b16 %v997
    %v1963 = vunpack.c.l.b16 %v998
    %v1964 = vunpack.c.l.b16 %v999
    %v1965 = vunpack.c.l.b16 %v1000
    %v1966 = vunpack.c.l.b16 %v1001
    %v1967 = vunpack.c.l.b16 %v1002
    %v1968 = vunpack.c.l.b16 %v1003
    %v1969 = vunpack.c.l.b16 %v1004
    %v1970 = vunpack.c.l.b16 %v1005
    %v1971 = vunpack.c.l.b16 %v1006
    %v1972 = vunpack.c.l.b16 %v1007
    %v1973 = vunpack.c.l.b16 %v1008
    %v1974 = vunpack.c.l.b16 %v1009
    %v1975 = vunpack.c.l.b16 %v1010
    %v1976 = vunpack.c.l.b16 %v1011
    %v1977 = vunpack.c.l.b16 %v1012
    %v1978 = vunpack.c.l.b16 %v1013
    %v1979 = vunpack.c.l.b16 %v1014
    %v1980 = vunpack.c.l.b16 %v1015
    %v1981 = vunpack.c.l.b16 %v1016
    %v1982 = vunpack.c.l.b16 %v1017
    %v1983 = vunpack.c.l.b16 %v1018
    %v1984 = vunpack.c.l.b16 %v1019
    %v1985 = vunpack.c.l.b16 %v1020
    %v1986 = vunpack.c.l.b16 %v1021
    %v1987 = vunpack.c.l.b16 %v1022
    %v1988 = vunpack.c.l.b16 %v1023
    %v1989 = vunpack.c.l.b16 %v1024
    %v1990 = vunpack.c.l.b16 %v1025
    %v1991 = vunpack.c.l.b16 %v1026
    %v1992 = vunpack.c.l.b16 %v1027
    %v1993 = vunpack.c.l.b16 %v1028
    %v1994 = vunpack.c.l.b16 %v1029
    %v1995 = vunpack.c.l.b16 %v1030
    %v1996 = vunpack.c.l.b16 %v1031
    %v1997 = vunpack.c.l.b16 %v1032
    %v1998 = vunpack.c.l.b16 %v1033
    %v1999 = vunpack.c.l.b16 %v1034
    %v2000 = vunpack.c.l.b16 %v1035
    %v2001 = vunpack.c.l.b16 %v1036
    %v2002 = vunpack.c.l.b16 %v1037
    %v2003 = vunpack.c.l.b16 %v1038
    %v2004 = vunpack.c.l.b16 %v1039
    %v2005 = vunpack.c.l.b16 %v1040
    %v2006 = vunpack.c.l.b16 %v1041
    %v2007 = vunpack.c.l.b16 %v1042
    %v2008 = vunpack.c.l.b16 %v1043
    %v2009 = vunpack.c.l.b16 %v1044
    %v2010 = vunpack.c.l.b16 %v1045
    %v2011 = vunpack.c.l.b16 %v1046
    %v2012 = vunpack.c.l.b16 %v1047
    %v2013 = vunpack.c.l.b16 %v1048
    %v2014 = vunpack.c.l.b16 %v1049
    %v2015 = vunpack.c.l.b16 %v1050
    %v2016 = vunpack.c.l.b16 %v1051
    %v2017 = vunpack.c.l.b16 %v1052
    %v2018 = vunpack.c.l.b16 %v1053
    %v2019 = vunpack.c.l.b16 %v1054
    %v2020 = vunpack.c.l.b16 %v1055
    %v2021 = vunpack.c.l.b16 %v1056
    %v2022 = vunpack.c.l.b16 %v1057
    %v2023 = vunpack.c.l.b16 %v1058
    %v2024 = vunpack.c.l.b16 %v1059
    %v2025 = vunpack.c.l.b16 %v1060
    %v2026 = vunpack.c.l.b16 %v1061
    %v2027 = vunpack.c.l.b16 %v1062
    %v2028 = vunpack.c.l.b16 %v1063
    %v2029 = vunpack.c.l.b16 %v1064
    %v2030 = vunpack.c.l.b16 %v1065
    %v2031 = vunpack.c.l.b16 %v1066
    %v2032 = vunpack.c.l.b16 %v1067
    %v2033 = vunpack.c.l.b16 %v1068
    %v2034 = vunpack.c.l.b16 %v1069
    %v2035 = vunpack.c.l.b16 %v1070
    %v2036 = vunpack.c.l.b16 %v1071
    %v2037 = vunpack.c.l.b16 %v1072
    %v2038 = vunpack.c.l.b16 %v1073
    %v2039 = vunpack.c.l.b16 %v1074
    %v2040 = vunpack.c.l.b16 %v1075
    %v2041 = vunpack.c.l.b16 %v1076
    %v2042 = vunpack.c.l.b16 %v1077
    %v2043 = vunpack.c.l.b16 %v1078
    %v2044 = vunpack.c.l.b16 %v1079
    %v2045 = vunpack.c.l.b16 %v1080
    %v2046 = vunpack.c.l.b16 %v1081
    %v2047 = vunpack.c.l.b16 %v1082
    %v2048 = vunpack.c.l.b16 %v1083
    %v2049 = vunpack.c.l.b16 %v1084
    %v2050 = vunpack.c.l.b16 %v1085
    %v2051 = vunpack.c.l.b16 %v1086
    %v2052 = vunpack.c.l.b16 %v1087
    %v2053 = vunpack.c.l.b16 %v1088
    %v2054 = vunpack.c.l.b16 %v1089
    %v2055 = vunpack.c.l.b16 %v1090
    %v2056 = vunpack.c.l.b16 %v1091
    %v2057 = vunpack.c.l.b16 %v1092
    %v2058 = vunpack.c.l.b16 %v1093
    %v2059 = vunpack.c.l.b16 %v1094
    %v2060 = vunpack.c.l.b16 %v1095
    %v2061 = vunpack.c.l.b16 %v1096
    %v2062 = vunpack.c.l.b16 %v1097
    %v2063 = vunpack.c.l.b16 %v1098
    %v2064 = vunpack.c.l.b16 %v1099
    %v2065 = vunpack.c.l.b16 %v1100
    %v2066 = vunpack.c.l.b16 %v1101
    %v2067 = vunpack.c.l.b16 %v1102
    %v2068 = vunpack.c.l.b16 %v1103
    %v2069 = vunpack.c.l.b16 %v1104
    %v2070 = vunpack.c.l.b16 %v1105
    %v2071 = vunpack.c.l.b16 %v1106
    %v2072 = vunpack.c.l.b16 %v1107
    %v2073 = vunpack.c.l.b16 %v1108
    %v2074 = vunpack.c.l.b16 %v1109
    %v2075 = vunpack.c.l.b16 %v1110
    %v2076 = vunpack.c.l.b16 %v1111
    %v2077 = vunpack.c.l.b16 %v1112
    %v2078 = vunpack.c.l.b16 %v1113
    %v2079 = vunpack.c.l.b16 %v1114
    %v2080 = vunpack.c.l.b16 %v1115
    %v2081 = vunpack.c.l.b16 %v1116
    %v2082 = vunpack.c.l.b16 %v1117
    %v2083 = vunpack.c.l.b16 %v1118
    %v2084 = vunpack.c.l.b16 %v1119
    %v2085 = vunpack.c.l.b16 %v1120
    %v2086 = vunpack.c.l.b16 %v1121
    %v2087 = vunpack.c.l.b16 %v1122
    %v2088 = vunpack.c.l.b16 %v1123
    %v2089 = vunpack.c.l.b16 %v1124
    %v2090 = vunpack.c.l.b16 %v1125
    %v2091 = vunpack.c.l.b16 %v1126
    %v2092 = vunpack.c.l.b16 %v1127
    %v2093 = vunpack.c.l.b16 %v1128
    %v2094 = vunpack.c.l.b16 %v1129
    %v2095 = vunpack.c.l.b16 %v1130
    %v2096 = vunpack.c.l.b16 %v1131
    %v2097 = vunpack.c.l.b16 %v1132
    %v2098 = vunpack.c.l.b16 %v1133
    %v2099 = vunpack.c.l.b16 %v1134
    %v2100 = vunpack.c.l.b16 %v1135
    %v2101 = vunpack.c.l.b16 %v1136
    %v2102 = vunpack.c.l.b16 %v1137
    %v2103 = vunpack.c.l.b16 %v1138
    %v2104 = vunpack.c.l.b16 %v1139
    %v2105 = vunpack.c.l.b16 %v1140
    %v2106 = vunpack.c.l.b16 %v1141
    %v2107 = vunpack.c.l.b16 %v1142
    %v2108 = vunpack.c.l.b16 %v1143
    %v2109 = vunpack.c.l.b16 %v1144
    %v2110 = vunpack.c.l.b16 %v1145
    %v2111 = vunpack.c.l.b16 %v1146
    %v2112 = vunpack.c.l.b16 %v1147
    %v2113 = vunpack.c.l.b16 %v1148
    %v2114 = vunpack.c.l.b16 %v1149
    %v2115 = vunpack.c.l.b16 %v1150
    %v2116 = vunpack.c.l.b16 %v1151
    %v2117 = vunpack.c.l.b16 %v1152
    %v2118 = vunpack.c.l.b16 %v1153
    %v2119 = vunpack.c.l.b16 %v1154
    %v2120 = vunpack.c.l.b16 %v1155
    %v2121 = vunpack.c.l.b16 %v1156
    %v2122 = vunpack.c.l.b16 %v1157
    %v2123 = vunpack.c.l.b16 %v1158
    %v2124 = vunpack.c.l.b16 %v1159
    %v2125 = vunpack.c.l.b16 %v1160
    %v2126 = vunpack.c.l.b16 %v1161
    %v2127 = vunpack.c.l.b16 %v1162
    %v2128 = vunpack.c.l.b16 %v1163
    %v2129 = vunpack.c.l.b16 %v1164
    %v2130 = vunpack.c.l.b16 %v1165
    %v2131 = vunpack.c.l.b16 %v1166
    %v2132 = vunpack.c.l.b16 %v1167
    %v2133 = vunpack.c.l.b16 %v1168
    %v2134 = vunpack.c.l.b16 %v1169
    %v2135 = vunpack.c.l.b16 %v1170
    %v2136 = vunpack.c.l.b16 %v1171
    %v2137 = vunpack.c.l.b16 %v1172
    %v2138 = vunpack.c.l.b16 %v1173
    %v2139 = vunpack.c.l.b16 %v1174
    %v2140 = vunpack.c.l.b16 %v1175
    %v2141 = vunpack.c.l.b16 %v1176
    %v2142 = vunpack.c.l.b16 %v1177
    %v2143 = vunpack.c.l.b16 %v1178
    %v2144 = vunpack.c.l.b16 %v1179
    %v2145 = vunpack.c.l.b16 %v1180
    %v2146 = vunpack.c.l.b16 %v1181
    %v2147 = vunpack.c.l.b16 %v1182
    %v2148 = vunpack.c.l.b16 %v1183
    %v2149 = vunpack.c.l.b16 %v1184
    %v2150 = vunpack.c.l.b16 %v1185
    %v2151 = vunpack.c.l.b16 %v1186
    %v2152 = vunpack.c.l.b16 %v1187
    %v2153 = vunpack.c.l.b16 %v1188
    %v2154 = vunpack.c.l.b16 %v1189
    %v2155 = vunpack.c.l.b16 %v1190
    %v2156 = vunpack.c.l.b16 %v1191
    %v2157 = vunpack.c.l.b16 %v1192
    %v2158 = vunpack.c.l.b16 %v1193
    %v2159 = vunpack.c.l.b16 %v1194
    %v2160 = vunpack.c.l.b16 %v1195
    %v2161 = vunpack.c.l.b16 %v1196
    %v2162 = vunpack.c.l.b16 %v1197
    %v2163 = vunpack.c.l.b16 %v1198
    %v2164 = vunpack.c.l.b16 %v1199
    %v2165 = vunpack.c.l.b16 %v1200
    %v2166 = vunpack.c.l.b16 %v1201
    %v2167 = vunpack.c.l.b16 %v1202
    %v2168 = vunpack.c.l.b16 %v1203
    %v2169 = vunpack.c.l.b16 %v1204
    %v2170 = vunpack.c.l.b16 %v1205
    %v2171 = vunpack.c.l.b16 %v1206
    %v2172 = vunpack.c.l.b16 %v1207
    %v2173 = vunpack.c.l.b16 %v1208
    %v2174 = vunpack.c.l.b16 %v1209
    %v2175 = vunpack.c.l.b16 %v1210
    %v2176 = vunpack.c.l.b16 %v1211
    %v2177 = vunpack.c.l.b16 %v1212
    %v2178 = vunpack.c.l.b16 %v1213
    %v2179 = vunpack.c.l.b16 %v1214
    %v2180 = vunpack.c.l.b16 %v1215
    %v2181 = vunpack.c.l.b16 %v1216
    %v2182 = vunpack.c.l.b16 %v1217
    %v2183 = vunpack.c.l.b16 %v1218
    %v2184 = vunpack.c.l.b16 %v1219
    %v2185 = vunpack.c.l.b16 %v1220
    %v2186 = vunpack.c.l.b16 %v1221
    %v2187 = vunpack.c.l.b16 %v1222
    %v2188 = vunpack.c.l.b16 %v1223
    %v2189 = vunpack.c.l.b16 %v1224
    %v2190 = vunpack.c.l.b16 %v1225
    %v2191 = vunpack.c.l.b16 %v1226
    %v2192 = vunpack.c.l.b16 %v1227
    %v2193 = vunpack.c.l.b16 %v1228
    %v2194 = vunpack.c.l.b16 %v1229
    %v2195 = vunpack.c.l.b16 %v1230
    %v2196 = vunpack.c.l.b16 %v1231
    %v2197 = vunpack.c.l.b16 %v1232
    %v2198 = vunpack.c.l.b16 %v1233
    %v2199 = vunpack.c.l.b16 %v1234
    %v2200 = vunpack.c.l.b16 %v1235
    %v2201 = vunpack.c.l.b16 %v1236
    %v2202 = vunpack.c.l.b16 %v1237
    %v2203 = vunpack.c.l.b16 %v1238
    %v2204 = vunpack.c.l.b16 %v1239
    %v2205 = vunpack.c.l.b16 %v1240
    %v2206 = vunpack.c.l.b16 %v1241
    %v2207 = vunpack.c.l.b16 %v1242
    %v2208 = vunpack.c.l.b16 %v1243
    %v2209 = vunpack.c.l.b16 %v1244
    %v2210 = vpack.c.b16 %v1731, %v1730
    %v2211 = vpack.c.b16 %v1733, %v1732
    %v2212 = vpack.c.b16 %v1735, %v1734
    %v2213 = vpack.c.b16 %v1737, %v1736
    %v2214 = vpack.c.b16 %v1739, %v1738
    %v2215 = vpack.c.b16 %v1741, %v1740
    %v2216 = vpack.c.b16 %v1743, %v1742
    %v2217 = vpack.c.b16 %v1745, %v1744
    %v2218 = vpack.c.b16 %v1747, %v1746
    %v2219 = vpack.c.b16 %v1749, %v1748
    %v2220 = vpack.c.b16 %v1751, %v1750
    %v2221 = vpack.c.b16 %v1753, %v1752
    %v2222 = vpack.c.b16 %v1755, %v1754
    %v2223 = vpack.c.b16 %v1757, %v1756
    %v2224 = vpack.c.b16 %v1759, %v1758
    %v2225 = vpack.c.b16 %v1761, %v1760
    %v2226 = vpack.c.b16 %v1763, %v1762
    %v2227 = vpack.c.b16 %v1765, %v1764
    %v2228 = vpack.c.b16 %v1767, %v1766
    %v2229 = vpack.c.b16 %v1769, %v1768
    %v2230 = vpack.c.b16 %v1771, %v1770
    %v2231 = vpack.c.b16 %v1773, %v1772
    %v2232 = vpack.c.b16 %v1775, %v1774
    %v2233 = vpack.c.b16 %v1777, %v1776
    %v2234 = vpack.c.b16 %v1779, %v1778
    %v2235 = vpack.c.b16 %v1781, %v1780
    %v2236 = vpack.c.b16 %v1783, %v1782
    %v2237 = vpack.c.b16 %v1785, %v1784
    %v2238 = vpack.c.b16 %v1787, %v1786
    %v2239 = vpack.c.b16 %v1789, %v1788
    %v2240 = vpack.c.b16 %v1791, %v1790
    %v2241 = vpack.c.b16 %v1793, %v1792
    %v2242 = vpack.c.b16 %v1795, %v1794
    %v2243 = vpack.c.b16 %v1797, %v1796
    %v2244 = vpack.c.b16 %v1799, %v1798
    %v2245 = vpack.c.b16 %v1801, %v1800
    %v2246 = vpack.c.b16 %v1803, %v1802
    %v2247 = vpack.c.b16 %v1805, %v1804
    %v2248 = vpack.c.b16 %v1807, %v1806
    %v2249 = vpack.c.b16 %v1809, %v1808
    %v2250 = vpack.c.b16 %v1811, %v1810
    %v2251 = vpack.c.b16 %v1813, %v1812
    %v2252 = vpack.c.b16 %v1815, %v1814
    %v2253 = vpack.c.b16 %v1817, %v1816
    %v2254 = vpack.c.b16 %v1819, %v1818
    %v2255 = vpack.c.b16 %v1821, %v1820
    %v2256 = vpack.c.b16 %v1823, %v1822
    %v2257 = vpack.c.b16 %v1825, %v1824
    %v2258 = vpack.c.b16 %v1827, %v1826
    %v2259 = vpack.c.b16 %v1829, %v1828
    %v2260 = vpack.c.b16 %v1831, %v1830
    %v2261 = vpack.c.b16 %v1833, %v1832
    %v2262 = vpack.c.b16 %v1835, %v1834
    %v2263 = vpack.c.b16 %v1837, %v1836
    %v2264 = vpack.c.b16 %v1839, %v1838
    %v2265 = vpack.c.b16 %v1841, %v1840
    %v2266 = vpack.c.b16 %v1843, %v1842
    %v2267 = vpack.c.b16 %v1845, %v1844
    %v2268 = vpack.c.b16 %v1847, %v1846
    %v2269 = vpack.c.b16 %v1849, %v1848
    %v2270 = vpack.c.b16 %v1851, %v1850
    %v2271 = vpack.c.b16 %v1853, %v1852
    %v2272 = vpack.c.b16 %v1855, %v1854
    %v2273 = vpack.c.b16 %v1857, %v1856
    %v2274 = vpack.c.b16 %v1859, %v1858
    %v2275 = vpack.c.b16 %v1861, %v1860
    %v2276 = vpack.c.b16 %v1863, %v1862
    %v2277 = vpack.c.b16 %v1865, %v1864
    %v2278 = vpack.c.b16 %v1867, %v1866
    %v2279 = vpack.c.b16 %v1869, %v1868
    %v2280 = vpack.c.b16 %v1871, %v1870
    %v2281 = vpack.c.b16 %v1873, %v1872
    %v2282 = vpack.c.b16 %v1875, %v1874
    %v2283 = vpack.c.b16 %v1877, %v1876
    %v2284 = vpack.c.b16 %v1879, %v1878
    %v2285 = vpack.c.b16 %v1881, %v1880
    %v2286 = vpack.c.b16 %v1883, %v1882
    %v2287 = vpack.c.b16 %v1885, %v1884
    %v2288 = vpack.c.b16 %v1887, %v1886
    %v2289 = vpack.c.b16 %v1889, %v1888
    %v2290 = vpack.c.b16 %v1891, %v1890
    %v2291 = vpack.c.b16 %v1893, %v1892
    %v2292 = vpack.c.b16 %v1895, %v1894
    %v2293 = vpack.c.b16 %v1897, %v1896
    %v2294 = vpack.c.b16 %v1899, %v1898
    %v2295 = vpack.c.b16 %v1901, %v1900
    %v2296 = vpack.c.b16 %v1903, %v1902
    %v2297 = vpack.c.b16 %v1905, %v1904
    %v2298 = vpack.c.b16 %v1907, %v1906
    %v2299 = vpack.c.b16 %v1909, %v1908
    %v2300 = vpack.c.b16 %v1911, %v1910
    %v2301 = vpack.c.b16 %v1913, %v1912
    %v2302 = vpack.c.b16 %v1915, %v1914
    %v2303 = vpack.c.b16 %v1917, %v1916
    %v2304 = vpack.c.b16 %v1919, %v1918
    %v2305 = vpack.c.b16 %v1921, %v1920
    %v2306 = vpack.c.b16 %v1923, %v1922
    %v2307 = vpack.c.b16 %v1925, %v1924
    %v2308 = vpack.c.b16 %v1927, %v1926
    %v2309 = vpack.c.b16 %v1929, %v1928
    %v2310 = vpack.c.b16 %v1931, %v1930
    %v2311 = vpack.c.b16 %v1933, %v1932
    %v2312 = vpack.c.b16 %v1935, %v1934
    %v2313 = vpack.c.b16 %v1937, %v1936
    %v2314 = vpack.c.b16 %v1939, %v1938
    %v2315 = vpack.c.b16 %v1941, %v1940
    %v2316 = vpack.c.b16 %v1943, %v1942
    %v2317 = vpack.c.b16 %v1945, %v1944
    %v2318 = vpack.c.b16 %v1947, %v1946
    %v2319 = vpack.c.b16 %v1949, %v1948
    %v2320 = vpack.c.b16 %v1951, %v1950
    %v2321 = vpack.c.b16 %v1953, %v1952
    %v2322 = vpack.c.b16 %v1955, %v1954
    %v2323 = vpack.c.b16 %v1957, %v1956
    %v2324 = vpack.c.b16 %v1959, %v1958
    %v2325 = vpack.c.b16 %v1961, %v1960
    %v2326 = vpack.c.b16 %v1963, %v1962
    %v2327 = vpack.c.b16 %v1965, %v1964
    %v2328 = vpack.c.b16 %v1967, %v1966
    %v2329 = vpack.c.b16 %v1969, %v1968
    %v2330 = vpack.c.b16 %v1971, %v1970
    %v2331 = vpack.c.b16 %v1973, %v1972
    %v2332 = vpack.c.b16 %v1975, %v1974
    %v2333 = vpack.c.b16 %v1977, %v1976
    %v2334 = vpack.c.b16 %v1979, %v1978
    %v2335 = vpack.c.b16 %v1981, %v1980
    %v2336 = vpack.c.b16 %v1983, %v1982
    %v2337 = vpack.c.b16 %v1985, %v1984
    %v2338 = vpack.c.b16 %v1987, %v1986
    %v2339 = vpack.c.b16 %v1989, %v1988
    %v2340 = vpack.c.b16 %v1991, %v1990
    %v2341 = vpack.c.b16 %v1993, %v1992
    %v2342 = vpack.c.b16 %v1995, %v1994
    %v2343 = vpack.c.b16 %v1997, %v1996
    %v2344 = vpack.c.b16 %v1999, %v1998
    %v2345 = vpack.c.b16 %v2001, %v2000
    %v2346 = vpack.c.b16 %v2003, %v2002
    %v2347 = vpack.c.b16 %v2005, %v2004
    %v2348 = vpack.c.b16 %v2007, %v2006
    %v2349 = vpack.c.b16 %v2009, %v2008
    %v2350 = vpack.c.b16 %v2011, %v2010
    %v2351 = vpack.c.b16 %v2013, %v2012
    %v2352 = vpack.c.b16 %v2015, %v2014
    %v2353 = vpack.c.b16 %v2017, %v2016
    %v2354 = vpack.c.b16 %v2019, %v2018
    %v2355 = vpack.c.b16 %v2021, %v2020
    %v2356 = vpack.c.b16 %v2023, %v2022
    %v2357 = vpack.c.b16 %v2025, %v2024
    %v2358 = vpack.c.b16 %v2027, %v2026
    %v2359 = vpack.c.b16 %v2029, %v2028
    %v2360 = vpack.c.b16 %v2031, %v2030
    %v2361 = vpack.c.b16 %v2033, %v2032
    %v2362 = vpack.c.b16 %v2035, %v2034
    %v2363 = vpack.c.b16 %v2037, %v2036
    %v2364 = vpack.c.b16 %v2039, %v2038
    %v2365 = vpack.c.b16 %v2041, %v2040
    %v2366 = vpack.c.b16 %v2043, %v2042
    %v2367 = vpack.c.b16 %v2045, %v2044
    %v2368 = vpack.c.b16 %v2047, %v2046
    %v2369 = vpack.c.b16 %v2049, %v2048
    %v2370 = vpack.c.b16 %v2051, %v2050
    %v2371 = vpack.c.b16 %v2053, %v2052
    %v2372 = vpack.c.b16 %v2055, %v2054
    %v2373 = vpack.c.b16 %v2057, %v2056
    %v2374 = vpack.c.b16 %v2059, %v2058
    %v2375 = vpack.c.b16 %v2061, %v2060
    %v2376 = vpack.c.b16 %v2063, %v2062
    %v2377 = vpack.c.b16 %v2065, %v2064
    %v2378 = vpack.c.b16 %v2067, %v2066
    %v2379 = vpack.c.b16 %v2069, %v2068
    %v2380 = vpack.c.b16 %v2071, %v2070
    %v2381 = vpack.c.b16 %v2073, %v2072
    %v2382 = vpack.c.b16 %v2075, %v2074
    %v2383 = vpack.c.b16 %v2077, %v2076
    %v2384 = vpack.c.b16 %v2079, %v2078
    %v2385 = vpack.c.b16 %v2081, %v2080
    %v2386 = vpack.c.b16 %v2083, %v2082
    %v2387 = vpack.c.b16 %v2085, %v2084
    %v2388 = vpack.c.b16 %v2087, %v2086
    %v2389 = vpack.c.b16 %v2089, %v2088
    %v2390 = vpack.c.b16 %v2091, %v2090
    %v2391 = vpack.c.b16 %v2093, %v2092
    %v2392 = vpack.c.b16 %v2095, %v2094
    %v2393 = vpack.c.b16 %v2097, %v2096
    %v2394 = vpack.c.b16 %v2099, %v2098
    %v2395 = vpack.c.b16 %v2101, %v2100
    %v2396 = vpack.c.b16 %v2103, %v2102
    %v2397 = vpack.c.b16 %v2105, %v2104
    %v2398 = vpack.c.b16 %v2107, %v2106
    %v2399 = vpack.c.b16 %v2109, %v2108
    %v2400 = vpack.c.b16 %v2111, %v2110
    %v2401 = vpack.c.b16 %v2113, %v2112
    %v2402 = vpack.c.b16 %v2115, %v2114
    %v2403 = vpack.c.b16 %v2117, %v2116
    %v2404 = vpack.c.b16 %v2119, %v2118
    %v2405 = vpack.c.b16 %v2121, %v2120
    %v2406 = vpack.c.b16 %v2123, %v2122
    %v2407 = vpack.c.b16 %v2125, %v2124
    %v2408 = vpack.c.b16 %v2127, %v2126
    %v2409 = vpack.c.b16 %v2129, %v2128
    %v2410 = vpack.c.b16 %v2131, %v2130
    %v2411 = vpack.c.b16 %v2133, %v2132
    %v2412 = vpack.c.b16 %v2135, %v2134
    %v2413 = vpack.c.b16 %v2137, %v2136
    %v2414 = vpack.c.b16 %v2139, %v2138
    %v2415 = vpack.c.b16 %v2141, %v2140
    %v2416 = vpack.c.b16 %v2143, %v2142
    %v2417 = vpack.c.b16 %v2145, %v2144
    %v2418 = vpack.c.b16 %v2147, %v2146
    %v2419 = vpack.c.b16 %v2149, %v2148
    %v2420 = vpack.c.b16 %v2151, %v2150
    %v2421 = vpack.c.b16 %v2153, %v2152
    %v2422 = vpack.c.b16 %v2155, %v2154
    %v2423 = vpack.c.b16 %v2157, %v2156
    %v2424 = vpack.c.b16 %v2159, %v2158
    %v2425 = vpack.c.b16 %v2161, %v2160
    %v2426 = vpack.c.b16 %v2163, %v2162
    %v2427 = vpack.c.b16 %v2165, %v2164
    %v2428 = vpack.c.b16 %v2167, %v2166
    %v2429 = vpack.c.b16 %v2169, %v2168
    %v2430 = vpack.c.b16 %v2171, %v2170
    %v2431 = vpack.c.b16 %v2173, %v2172
    %v2432 = vpack.c.b16 %v2175, %v2174
    %v2433 = vpack.c.b16 %v2177, %v2176
    %v2434 = vpack.c.b16 %v2179, %v2178
    %v2435 = vpack.c.b16 %v2181, %v2180
    %v2436 = vpack.c.b16 %v2183, %v2182
    %v2437 = vpack.c.b16 %v2185, %v2184
    %v2438 = vpack.c.b16 %v2187, %v2186
    %v2439 = vpack.c.b16 %v2189, %v2188
    %v2440 = vpack.c.b16 %v2191, %v2190
    %v2441 = vpack.c.b16 %v2193, %v2192
    %v2442 = vpack.c.b16 %v2195, %v2194
    %v2443 = vpack.c.b16 %v2197, %v2196
    %v2444 = vpack.c.b16 %v2199, %v2198
    %v2445 = vpack.c.b16 %v2201, %v2200
    %v2446 = vpack.c.b16 %v2203, %v2202
    %v2447 = vpack.c.b16 %v2205, %v2204
    %v2448 = vpack.c.b16 %v2207, %v2206
    %v2449 = vpack.c.b16 %v2209, %v2208
    %2690 = vmatprep.subr.bf16.mxu0 0
    %2691 = vmatpush1.bf16.msra.mxu0 %v2210
    %2692 = vmatprep.subr.bf16.mxu0 0
    %2693 = vmatpush1.bf16.msra.mxu0 %v2211
    %2694 = vmatprep.subr.bf16.mxu0 0
    %2695 = vmatpush1.bf16.msra.mxu0 %v2212
    %2696 = vmatprep.subr.bf16.mxu0 0
    %2697 = vmatpush1.bf16.msra.mxu0 %v2213
    %2698 = vmatprep.subr.bf16.mxu0 0
    %2699 = vmatpush1.bf16.msra.mxu0 %v2214
    %2700 = vmatprep.subr.bf16.mxu0 0
    %2701 = vmatpush1.bf16.msra.mxu0 %v2215
    %2702 = vmatprep.subr.bf16.mxu0 0
    %2703 = vmatpush1.bf16.msra.mxu0 %v2216
    %2704 = vmatprep.subr.bf16.mxu0 0
    %2705 = vmatpush1.bf16.msra.mxu0 %v2217
    %2706 = vmatprep.subr.bf16.mxu0 0
    %2707 = vmatpush1.bf16.msra.mxu0 %v2218
    %2708 = vmatprep.subr.bf16.mxu0 0
    %2709 = vmatpush1.bf16.msra.mxu0 %v2219
    %2710 = vmatprep.subr.bf16.mxu0 0
    %2711 = vmatpush1.bf16.msra.mxu0 %v2220
    %2712 = vmatprep.subr.bf16.mxu0 0
    %2713 = vmatpush1.bf16.msra.mxu0 %v2221
    %2714 = vmatprep.subr.bf16.mxu0 0
    %2715 = vmatpush1.bf16.msra.mxu0 %v2222
    %2716 = vmatprep.subr.bf16.mxu0 0
    %2717 = vmatpush1.bf16.msra.mxu0 %v2223
    %2718 = vmatprep.subr.bf16.mxu0 0
    %2719 = vmatpush1.bf16.msra.mxu0 %v2224
    %2720 = vmatprep.subr.bf16.mxu0 0
    %2721 = vmatpush1.bf16.msra.mxu0 %v2225
    %2722 = vmatprep.mubr.bf16.mxu0 %v686
    %2723 = vmatmul.mubr.bf16.gmra.mrb[0].mxu0 %v685
    %v2724 = vpop.f32.mrb[0].mxu0
    %v2725 = vadd.f32 %v1249, %v2724
    %v2726 = vpop.f32.mrb[0].mxu0
    %v2727 = vpop.f32.mrb[0].mxu0
    %v2728 = vadd.f32 %v1249, %v2727
    %v2729 = vpop.f32.mrb[0].mxu0
    %2730 = vmatprep.mubr.bf16.mxu0 %v696
    %2731 = vmatmul.mubr.bf16.gmra.mrb[0].mxu0 %v695
    %v2732 = vpop.f32.mrb[0].mxu0
    %v2733 = vadd.f32 %v1249, %v2732
    %v2734 = vpop.f32.mrb[0].mxu0
    %v2735 = vpop.f32.mrb[0].mxu0
    %v2736 = vadd.f32 %v1249, %v2735
    %v2737 = vpop.f32.mrb[0].mxu0
    %2738 = vmatprep.mubr.bf16.mxu0 %v706
    %2739 = vmatmul.mubr.bf16.gmra.mrb[0].mxu0 %v705
    %v2740 = vpop.f32.mrb[0].mxu0
    %v2741 = vadd.f32 %v1249, %v2740
    %v2742 = vpop.f32.mrb[0].mxu0
    %v2743 = vpop.f32.mrb[0].mxu0
    %v2744 = vadd.f32 %v1249, %v2743
    %v2745 = vpop.f32.mrb[0].mxu0
    %2746 = vmatprep.mubr.bf16.mxu0 %v716
    %2747 = vmatmul.mubr.bf16.gmra.mrb[0].mxu0 %v715
    %v2748 = vpop.f32.mrb[0].mxu0
    %v2749 = vadd.f32 %v1249, %v2748
    %v2750 = vpop.f32.mrb[0].mxu0
    %v2751 = vpop.f32.mrb[0].mxu0
    %v2752 = vadd.f32 %v1249, %v2751
    %v2753 = vpop.f32.mrb[0].mxu0
    %2754 = vdwg.mxu0
    %2755 = vmatprep.subr.bf16.mxu0 0
    %2756 = vmatpush1.bf16.msra.mxu0 %v2226
    %2757 = vmatprep.subr.bf16.mxu0 0
    %2758 = vmatpush1.bf16.msra.mxu0 %v2227
    %2759 = vmatprep.subr.bf16.mxu0 0
    %2760 = vmatpush1.bf16.msra.mxu0 %v2228
    %2761 = vmatprep.subr.bf16.mxu0 0
    %2762 = vmatpush1.bf16.msra.mxu0 %v2229
    %2763 = vmatprep.subr.bf16.mxu0 0
    %2764 = vmatpush1.bf16.msra.mxu0 %v2230
    %2765 = vmatprep.subr.bf16.mxu0 0
    %2766 = vmatpush1.bf16.msra.mxu0 %v2231
    %2767 = vmatprep.subr.bf16.mxu0 0
    %2768 = vmatpush1.bf16.msra.mxu0 %v2232
    %2769 = vmatprep.subr.bf16.mxu0 0
    %2770 = vmatpush1.bf16.msra.mxu0 %v2233
    %2771 = vmatprep.subr.bf16.mxu0 0
    %2772 = vmatpush1.bf16.msra.mxu0 %v2234
    %2773 = vmatprep.subr.bf16.mxu0 0
    %2774 = vmatpush1.bf16.msra.mxu0 %v2235
    %2775 = vmatprep.subr.bf16.mxu0 0
    %2776 = vmatpush1.bf16.msra.mxu0 %v2236
    %2777 = vmatprep.subr.bf16.mxu0 0
    %2778 = vmatpush1.bf16.msra.mxu0 %v2237
    %2779 = vmatprep.subr.bf16.mxu0 0
    %2780 = vmatpush1.bf16.msra.mxu0 %v2238
    %2781 = vmatprep.subr.bf16.mxu0 0
    %2782 = vmatpush1.bf16.msra.mxu0 %v2239
    %2783 = vmatprep.subr.bf16.mxu0 0
    %2784 = vmatpush1.bf16.msra.mxu0 %v2240
    %2785 = vmatprep.subr.bf16.mxu0 0
    %2786 = vmatpush1.bf16.msra.mxu0 %v2241
    %2787 = vmatprep.mubr.bf16.mxu0 %v688
    %2788 = vmatmul.mubr.bf16.gmra.mrb[0].mxu0 %v687
    %v2789 = vpop.f32.mrb[0].mxu0
    %v2790 = vadd.f32 %v2725, %v2789
    %v2791 = vpop.f32.mrb[0].mxu0
    %v2792 = vpop.f32.mrb[0].mxu0
    %v2793 = vadd.f32 %v2728, %v2792
    %v2794 = vpop.f32.mrb[0].mxu0
    %2795 = vmatprep.mubr.bf16.mxu0 %v698
    %2796 = vmatmul.mubr.bf16.gmra.mrb[0].mxu0 %v697
    %v2797 = vpop.f32.mrb[0].mxu0
    %v2798 = vadd.f32 %v2733, %v2797
    %v2799 = vpop.f32.mrb[0].mxu0
    %v2800 = vpop.f32.mrb[0].mxu0
    %v2801 = vadd.f32 %v2736, %v2800
    %v2802 = vpop.f32.mrb[0].mxu0
    %2803 = vmatprep.mubr.bf16.mxu0 %v708
    %2804 = vmatmul.mubr.bf16.gmra.mrb[0].mxu0 %v707
    %v2805 = vpop.f32.mrb[0].mxu0
    %v2806 = vadd.f32 %v2741, %v2805
    %v2807 = vpop.f32.mrb[0].mxu0
    %v2808 = vpop.f32.mrb[0].mxu0
    %v2809 = vadd.f32 %v2744, %v2808
    %v2810 = vpop.f32.mrb[0].mxu0
    %2811 = vmatprep.mubr.bf16.mxu0 %v718
    %2812 = vmatmul.mubr.bf16.gmra.mrb[0].mxu0 %v717
    %v2813 = vpop.f32.mrb[0].mxu0
    %v2814 = vadd.f32 %v2749, %v2813
    %v2815 = vpop.f32.mrb[0].mxu0
    %v2816 = vpop.f32.mrb[0].mxu0
    %v2817 = vadd.f32 %v2752, %v2816
    %v2818 = vpop.f32.mrb[0].mxu0
    %2819 = vdwg.mxu0
    %2820 = vmatprep.subr.bf16.mxu0 0
    %2821 = vmatpush1.bf16.msra.mxu0 %v2242
    %2822 = vmatprep.subr.bf16.mxu0 0
    %2823 = vmatpush1.bf16.msra.mxu0 %v2243
    %2824 = vmatprep.subr.bf16.mxu0 0
    %2825 = vmatpush1.bf16.msra.mxu0 %v2244
    %2826 = vmatprep.subr.bf16.mxu0 0
    %2827 = vmatpush1.bf16.msra.mxu0 %v2245
    %2828 = vmatprep.subr.bf16.mxu0 0
    %2829 = vmatpush1.bf16.msra.mxu0 %v2246
    %2830 = vmatprep.subr.bf16.mxu0 0
    %2831 = vmatpush1.bf16.msra.mxu0 %v2247
    %2832 = vmatprep.subr.bf16.mxu0 0
    %2833 = vmatpush1.bf16.msra.mxu0 %v2248
    %2834 = vmatprep.subr.bf16.mxu0 0
    %2835 = vmatpush1.bf16.msra.mxu0 %v2249
    %2836 = vmatprep.subr.bf16.mxu0 0
    %2837 = vmatpush1.bf16.msra.mxu0 %v2250
    %2838 = vmatprep.subr.bf16.mxu0 0
    %2839 = vmatpush1.bf16.msra.mxu0 %v2251
    %2840 = vmatprep.subr.bf16.mxu0 0
    %2841 = vmatpush1.bf16.msra.mxu0 %v2252
    %2842 = vmatprep.subr.bf16.mxu0 0
    %2843 = vmatpush1.bf16.msra.mxu0 %v2253
    %2844 = vmatprep.subr.bf16.mxu0 0
    %2845 = vmatpush1.bf16.msra.mxu0 %v2254
    %2846 = vmatprep.subr.bf16.mxu0 0
    %2847 = vmatpush1.bf16.msra.mxu0 %v2255
    %2848 = vmatprep.subr.bf16.mxu0 0
    %2849 = vmatpush1.bf16.msra.mxu0 %v2256
    %2850 = vmatprep.subr.bf16.mxu0 0
    %2851 = vmatpush1.bf16.msra.mxu0 %v2257
    %2852 = vmatprep.mubr.bf16.mxu0 %v690
    %2853 = vmatmul.mubr.bf16.gmra.mrb[0].mxu0 %v689
    %v2854 = vpop.f32.mrb[0].mxu0
    %v2855 = vadd.f32 %v2790, %v2854
    %v2856 = vpop.f32.mrb[0].mxu0
    %v2857 = vpop.f32.mrb[0].mxu0
    %v2858 = vadd.f32 %v2793, %v2857
    %v2859 = vpop.f32.mrb[0].mxu0
    %2860 = vmatprep.mubr.bf16.mxu0 %v700
    %2861 = vmatmul.mubr.bf16.gmra.mrb[0].mxu0 %v699
    %v2862 = vpop.f32.mrb[0].mxu0
    %v2863 = vadd.f32 %v2798, %v2862
    %v2864 = vpop.f32.mrb[0].mxu0
    %v2865 = vpop.f32.mrb[0].mxu0
    %v2866 = vadd.f32 %v2801, %v2865
    %v2867 = vpop.f32.mrb[0].mxu0
    %2868 = vmatprep.mubr.bf16.mxu0 %v710
    %2869 = vmatmul.mubr.bf16.gmra.mrb[0].mxu0 %v709
    %v2870 = vpop.f32.mrb[0].mxu0
    %v2871 = vadd.f32 %v2806, %v2870
    %v2872 = vpop.f32.mrb[0].mxu0
    %v2873 = vpop.f32.mrb[0].mxu0
    %v2874 = vadd.f32 %v2809, %v2873
    %v2875 = vpop.f32.mrb[0].mxu0
    %2876 = vmatprep.mubr.bf16.mxu0 %v720
    %2877 = vmatmul.mubr.bf16.gmra.mrb[0].mxu0 %v719
    %v2878 = vpop.f32.mrb[0].mxu0
    %v2879 = vadd.f32 %v2814, %v2878
    %v2880 = vpop.f32.mrb[0].mxu0
    %v2881 = vpop.f32.mrb[0].mxu0
    %v2882 = vadd.f32 %v2817, %v2881
    %v2883 = vpop.f32.mrb[0].mxu0
    %2884 = vdwg.mxu0
    %2885 = vmatprep.subr.bf16.mxu0 0
    %2886 = vmatpush1.bf16.msra.mxu0 %v2258
    %2887 = vmatprep.subr.bf16.mxu0 0
    %2888 = vmatpush1.bf16.msra.mxu0 %v2259
    %2889 = vmatprep.subr.bf16.mxu0 0
    %2890 = vmatpush1.bf16.msra.mxu0 %v2260
    %2891 = vmatprep.subr.bf16.mxu0 0
    %2892 = vmatpush1.bf16.msra.mxu0 %v2261
    %2893 = vmatprep.subr.bf16.mxu0 0
    %2894 = vmatpush1.bf16.msra.mxu0 %v2262
    %2895 = vmatprep.subr.bf16.mxu0 0
    %2896 = vmatpush1.bf16.msra.mxu0 %v2263
    %2897 = vmatprep.subr.bf16.mxu0 0
    %2898 = vmatpush1.bf16.msra.mxu0 %v2264
    %2899 = vmatprep.subr.bf16.mxu0 0
    %2900 = vmatpush1.bf16.msra.mxu0 %v2265
    %2901 = vmatprep.subr.bf16.mxu0 0
    %2902 = vmatpush1.bf16.msra.mxu0 %v2266
    %2903 = vmatprep.subr.bf16.mxu0 0
    %2904 = vmatpush1.bf16.msra.mxu0 %v2267
    %2905 = vmatprep.subr.bf16.mxu0 0
    %2906 = vmatpush1.bf16.msra.mxu0 %v2268
    %2907 = vmatprep.subr.bf16.mxu0 0
    %2908 = vmatpush1.bf16.msra.mxu0 %v2269
    %2909 = vmatprep.subr.bf16.mxu0 0
    %2910 = vmatpush1.bf16.msra.mxu0 %v2270
    %2911 = vmatprep.subr.bf16.mxu0 0
    %2912 = vmatpush1.bf16.msra.mxu0 %v2271
    %2913 = vmatprep.subr.bf16.mxu0 0
    %2914 = vmatpush1.bf16.msra.mxu0 %v2272
    %2915 = vmatprep.subr.bf16.mxu0 0
    %2916 = vmatpush1.bf16.msra.mxu0 %v2273
    %2917 = vmatprep.mubr.bf16.mxu0 %v692
    %2918 = vmatmul.mubr.bf16.gmra.mrb[0].mxu0 %v691
    %v2919 = vpop.f32.mrb[0].mxu0
    %v2920 = vadd.f32 %v2855, %v2919
    %v2921 = vpop.f32.mrb[0].mxu0
    %v2922 = vpop.f32.mrb[0].mxu0
    %v2923 = vadd.f32 %v2858, %v2922
    %v2924 = vpop.f32.mrb[0].mxu0
    %2925 = vmatprep.mubr.bf16.mxu0 %v702
    %2926 = vmatmul.mubr.bf16.gmra.mrb[0].mxu0 %v701
    %v2927 = vpop.f32.mrb[0].mxu0
    %v2928 = vadd.f32 %v2863, %v2927
    %v2929 = vpop.f32.mrb[0].mxu0
    %v2930 = vpop.f32.mrb[0].mxu0
    %v2931 = vadd.f32 %v2866, %v2930
    %v2932 = vpop.f32.mrb[0].mxu0
    %2933 = vmatprep.mubr.bf16.mxu0 %v712
    %2934 = vmatmul.mubr.bf16.gmra.mrb[0].mxu0 %v711
    %v2935 = vpop.f32.mrb[0].mxu0
    %v2936 = vadd.f32 %v2871, %v2935
    %v2937 = vpop.f32.mrb[0].mxu0
    %v2938 = vpop.f32.mrb[0].mxu0
    %v2939 = vadd.f32 %v2874, %v2938
    %v2940 = vpop.f32.mrb[0].mxu0
    %2941 = vmatprep.mubr.bf16.mxu0 %v722
    %2942 = vmatmul.mubr.bf16.gmra.mrb[0].mxu0 %v721
    %v2943 = vpop.f32.mrb[0].mxu0
    %v2944 = vadd.f32 %v2879, %v2943
    %v2945 = vpop.f32.mrb[0].mxu0
    %v2946 = vpop.f32.mrb[0].mxu0
    %v2947 = vadd.f32 %v2882, %v2946
    %v2948 = vpop.f32.mrb[0].mxu0
    %2949 = vdwg.mxu0
    %2950 = vmatprep.subr.bf16.mxu0 0
    %2951 = vmatpush1.bf16.msra.mxu0 %v2274
    %2952 = vmatprep.subr.bf16.mxu0 0
    %2953 = vmatpush1.bf16.msra.mxu0 %v2275
    %2954 = vmatprep.subr.bf16.mxu0 0
    %2955 = vmatpush1.bf16.msra.mxu0 %v2276
    %2956 = vmatprep.subr.bf16.mxu0 0
    %2957 = vmatpush1.bf16.msra.mxu0 %v2277
    %2958 = vmatprep.subr.bf16.mxu0 0
    %2959 = vmatpush1.bf16.msra.mxu0 %v2278
    %2960 = vmatprep.subr.bf16.mxu0 0
    %2961 = vmatpush1.bf16.msra.mxu0 %v2279
    %2962 = vmatprep.subr.bf16.mxu0 0
    %2963 = vmatpush1.bf16.msra.mxu0 %v2280
    %2964 = vmatprep.subr.bf16.mxu0 0
    %2965 = vmatpush1.bf16.msra.mxu0 %v2281
    %2966 = vmatprep.subr.bf16.mxu0 0
    %2967 = vmatpush1.bf16.msra.mxu0 %v2282
    %2968 = vmatprep.subr.bf16.mxu0 0
    %2969 = vmatpush1.bf16.msra.mxu0 %v2283
    %2970 = vmatprep.subr.bf16.mxu0 0
    %2971 = vmatpush1.bf16.msra.mxu0 %v2284
    %2972 = vmatprep.subr.bf16.mxu0 0
    %2973 = vmatpush1.bf16.msra.mxu0 %v2285
    %2974 = vmatprep.subr.bf16.mxu0 0
    %2975 = vmatpush1.bf16.msra.mxu0 %v2286
    %2976 = vmatprep.subr.bf16.mxu0 0
    %2977 = vmatpush1.bf16.msra.mxu0 %v2287
    %2978 = vmatprep.subr.bf16.mxu0 0
    %2979 = vmatpush1.bf16.msra.mxu0 %v2288
    %2980 = vmatprep.subr.bf16.mxu0 0
    %2981 = vmatpush1.bf16.msra.mxu0 %v2289
    %2982 = vmatprep.mubr.bf16.mxu0 %v694
    %2983 = vmatmul.mubr.bf16.gmra.mrb[0].mxu0 %v693
    %v2984 = vpop.f32.mrb[0].mxu0
    %v2985 = vadd.f32 %v2920, %v2984
    %v2986 = vpop.f32.mrb[0].mxu0
    %v2987 = vpop.f32.mrb[0].mxu0
    %v2988 = vadd.f32 %v2923, %v2987
    %v2989 = vpop.f32.mrb[0].mxu0
    %2990 = vmatprep.mubr.bf16.mxu0 %v704
    %2991 = vmatmul.mubr.bf16.gmra.mrb[0].mxu0 %v703
    %v2992 = vpop.f32.mrb[0].mxu0
    %v2993 = vadd.f32 %v2928, %v2992
    %v2994 = vpop.f32.mrb[0].mxu0
    %v2995 = vpop.f32.mrb[0].mxu0
    %v2996 = vadd.f32 %v2931, %v2995
    %v2997 = vpop.f32.mrb[0].mxu0
    %2998 = vmatprep.mubr.bf16.mxu0 %v714
    %2999 = vmatmul.mubr.bf16.gmra.mrb[0].mxu0 %v713
    %v3000 = vpop.f32.mrb[0].mxu0
    %v3001 = vadd.f32 %v2936, %v3000
    %v3002 = vpop.f32.mrb[0].mxu0
    %v3003 = vpop.f32.mrb[0].mxu0
    %v3004 = vadd.f32 %v2939, %v3003
    %v3005 = vpop.f32.mrb[0].mxu0
    %3006 = vmatprep.mubr.bf16.mxu0 %v724
    %3007 = vmatmul.mubr.bf16.gmra.mrb[0].mxu0 %v723
    %v3008 = vpop.f32.mrb[0].mxu0
    %v3009 = vadd.f32 %v2944, %v3008
    %v3010 = vpop.f32.mrb[0].mxu0
    %v3011 = vpop.f32.mrb[0].mxu0
    %v3012 = vadd.f32 %v2947, %v3011
    %v3013 = vpop.f32.mrb[0].mxu0
    %3014 = vdwg.mxu0
    %3015 = vmatprep.subr.bf16.mxu0 0
    %3016 = vmatpush1.bf16.msra.mxu0 %v2290
    %3017 = vmatprep.subr.bf16.mxu0 0
    %3018 = vmatpush1.bf16.msra.mxu0 %v2291
    %3019 = vmatprep.subr.bf16.mxu0 0
    %3020 = vmatpush1.bf16.msra.mxu0 %v2292
    %3021 = vmatprep.subr.bf16.mxu0 0
    %3022 = vmatpush1.bf16.msra.mxu0 %v2293
    %3023 = vmatprep.subr.bf16.mxu0 0
    %3024 = vmatpush1.bf16.msra.mxu0 %v2294
    %3025 = vmatprep.subr.bf16.mxu0 0
    %3026 = vmatpush1.bf16.msra.mxu0 %v2295
    %3027 = vmatprep.subr.bf16.mxu0 0
    %3028 = vmatpush1.bf16.msra.mxu0 %v2296
    %3029 = vmatprep.subr.bf16.mxu0 0
    %3030 = vmatpush1.bf16.msra.mxu0 %v2297
    %3031 = vmatprep.subr.bf16.mxu0 0
    %3032 = vmatpush1.bf16.msra.mxu0 %v2298
    %3033 = vmatprep.subr.bf16.mxu0 0
    %3034 = vmatpush1.bf16.msra.mxu0 %v2299
    %3035 = vmatprep.subr.bf16.mxu0 0
    %3036 = vmatpush1.bf16.msra.mxu0 %v2300
    %3037 = vmatprep.subr.bf16.mxu0 0
    %3038 = vmatpush1.bf16.msra.mxu0 %v2301
    %3039 = vmatprep.subr.bf16.mxu0 0
    %3040 = vmatpush1.bf16.msra.mxu0 %v2302
    %3041 = vmatprep.subr.bf16.mxu0 0
    %3042 = vmatpush1.bf16.msra.mxu0 %v2303
    %3043 = vmatprep.subr.bf16.mxu0 0
    %3044 = vmatpush1.bf16.msra.mxu0 %v2304
    %3045 = vmatprep.subr.bf16.mxu0 0
    %3046 = vmatpush1.bf16.msra.mxu0 %v2305
    %3047 = vmatprep.mubr.bf16.mxu0 %v325
    %3048 = vmatmul.mubr.bf16.gmra.mrb[0].mxu0 %v324
    %v3049 = vpop.f32.mrb[0].mxu0
    %v3050 = vadd.f32 %v2985, %v3049
    %v3051 = vpop.f32.mrb[0].mxu0
    %v3052 = vpop.f32.mrb[0].mxu0
    %v3053 = vadd.f32 %v2988, %v3052
    %v3054 = vpop.f32.mrb[0].mxu0
    %3055 = vmatprep.mubr.bf16.mxu0 %v335
    %3056 = vmatmul.mubr.bf16.gmra.mrb[0].mxu0 %v334
    %v3057 = vpop.f32.mrb[0].mxu0
    %v3058 = vadd.f32 %v2993, %v3057
    %v3059 = vpop.f32.mrb[0].mxu0
    %v3060 = vpop.f32.mrb[0].mxu0
    %v3061 = vadd.f32 %v2996, %v3060
    %v3062 = vpop.f32.mrb[0].mxu0
    %3063 = vmatprep.mubr.bf16.mxu0 %v345
    %3064 = vmatmul.mubr.bf16.gmra.mrb[0].mxu0 %v344
    %v3065 = vpop.f32.mrb[0].mxu0
    %v3066 = vadd.f32 %v3001, %v3065
    %v3067 = vpop.f32.mrb[0].mxu0
    %v3068 = vpop.f32.mrb[0].mxu0
    %v3069 = vadd.f32 %v3004, %v3068
    %v3070 = vpop.f32.mrb[0].mxu0
    %3071 = vmatprep.mubr.bf16.mxu0 %v355
    %3072 = vmatmul.mubr.bf16.gmra.mrb[0].mxu0 %v354
    %v3073 = vpop.f32.mrb[0].mxu0
    %v3074 = vadd.f32 %v3009, %v3073
    %v3075 = vpop.f32.mrb[0].mxu0
    %v3076 = vpop.f32.mrb[0].mxu0
    %v3077 = vadd.f32 %v3012, %v3076
    %v3078 = vpop.f32.mrb[0].mxu0
    %3079 = vdwg.mxu0
    %3080 = vmatprep.subr.bf16.mxu0 0
    %3081 = vmatpush1.bf16.msra.mxu0 %v2306
    %3082 = vmatprep.subr.bf16.mxu0 0
    %3083 = vmatpush1.bf16.msra.mxu0 %v2307
    %3084 = vmatprep.subr.bf16.mxu0 0
    %3085 = vmatpush1.bf16.msra.mxu0 %v2308
    %3086 = vmatprep.subr.bf16.mxu0 0
    %3087 = vmatpush1.bf16.msra.mxu0 %v2309
    %3088 = vmatprep.subr.bf16.mxu0 0
    %3089 = vmatpush1.bf16.msra.mxu0 %v2310
    %3090 = vmatprep.subr.bf16.mxu0 0
    %3091 = vmatpush1.bf16.msra.mxu0 %v2311
    %3092 = vmatprep.subr.bf16.mxu0 0
    %3093 = vmatpush1.bf16.msra.mxu0 %v2312
    %3094 = vmatprep.subr.bf16.mxu0 0
    %3095 = vmatpush1.bf16.msra.mxu0 %v2313
    %3096 = vmatprep.subr.bf16.mxu0 0
    %3097 = vmatpush1.bf16.msra.mxu0 %v2314
    %3098 = vmatprep.subr.bf16.mxu0 0
    %3099 = vmatpush1.bf16.msra.mxu0 %v2315
    %3100 = vmatprep.subr.bf16.mxu0 0
    %3101 = vmatpush1.bf16.msra.mxu0 %v2316
    %3102 = vmatprep.subr.bf16.mxu0 0
    %3103 = vmatpush1.bf16.msra.mxu0 %v2317
    %3104 = vmatprep.subr.bf16.mxu0 0
    %3105 = vmatpush1.bf16.msra.mxu0 %v2318
    %3106 = vmatprep.subr.bf16.mxu0 0
    %3107 = vmatpush1.bf16.msra.mxu0 %v2319
    %3108 = vmatprep.subr.bf16.mxu0 0
    %3109 = vmatpush1.bf16.msra.mxu0 %v2320
    %3110 = vmatprep.subr.bf16.mxu0 0
    %3111 = vmatpush1.bf16.msra.mxu0 %v2321
    %3112 = vmatprep.mubr.bf16.mxu0 %v327
    %3113 = vmatmul.mubr.bf16.gmra.mrb[0].mxu0 %v326
    %v3114 = vpop.f32.mrb[0].mxu0
    %v3115 = vadd.f32 %v3050, %v3114
    %v3116 = vpop.f32.mrb[0].mxu0
    %v3117 = vpop.f32.mrb[0].mxu0
    %v3118 = vadd.f32 %v3053, %v3117
    %v3119 = vpop.f32.mrb[0].mxu0
    %3120 = vmatprep.mubr.bf16.mxu0 %v337
    %3121 = vmatmul.mubr.bf16.gmra.mrb[0].mxu0 %v336
    %v3122 = vpop.f32.mrb[0].mxu0
    %v3123 = vadd.f32 %v3058, %v3122
    %v3124 = vpop.f32.mrb[0].mxu0
    %v3125 = vpop.f32.mrb[0].mxu0
    %v3126 = vadd.f32 %v3061, %v3125
    %v3127 = vpop.f32.mrb[0].mxu0
    %3128 = vmatprep.mubr.bf16.mxu0 %v347
    %3129 = vmatmul.mubr.bf16.gmra.mrb[0].mxu0 %v346
    %v3130 = vpop.f32.mrb[0].mxu0
    %v3131 = vadd.f32 %v3066, %v3130
    %v3132 = vpop.f32.mrb[0].mxu0
    %v3133 = vpop.f32.mrb[0].mxu0
    %v3134 = vadd.f32 %v3069, %v3133
    %v3135 = vpop.f32.mrb[0].mxu0
    %3136 = vmatprep.mubr.bf16.mxu0 %v357
    %3137 = vmatmul.mubr.bf16.gmra.mrb[0].mxu0 %v356
    %v3138 = vpop.f32.mrb[0].mxu0
    %v3139 = vadd.f32 %v3074, %v3138
    %v3140 = vpop.f32.mrb[0].mxu0
    %v3141 = vpop.f32.mrb[0].mxu0
    %v3142 = vadd.f32 %v3077, %v3141
    %v3143 = vpop.f32.mrb[0].mxu0
    %3144 = vdwg.mxu0
    %3145 = vmatprep.subr.bf16.mxu0 0
    %3146 = vmatpush1.bf16.msra.mxu0 %v2322
    %3147 = vmatprep.subr.bf16.mxu0 0
    %3148 = vmatpush1.bf16.msra.mxu0 %v2323
    %3149 = vmatprep.subr.bf16.mxu0 0
    %3150 = vmatpush1.bf16.msra.mxu0 %v2324
    %3151 = vmatprep.subr.bf16.mxu0 0
    %3152 = vmatpush1.bf16.msra.mxu0 %v2325
    %3153 = vmatprep.subr.bf16.mxu0 0
    %3154 = vmatpush1.bf16.msra.mxu0 %v2326
    %3155 = vmatprep.subr.bf16.mxu0 0
    %3156 = vmatpush1.bf16.msra.mxu0 %v2327
    %3157 = vmatprep.subr.bf16.mxu0 0
    %3158 = vmatpush1.bf16.msra.mxu0 %v2328
    %3159 = vmatprep.subr.bf16.mxu0 0
    %3160 = vmatpush1.bf16.msra.mxu0 %v2329
    %3161 = vmatprep.subr.bf16.mxu0 0
    %3162 = vmatpush1.bf16.msra.mxu0 %v2330
    %3163 = vmatprep.subr.bf16.mxu0 0
    %3164 = vmatpush1.bf16.msra.mxu0 %v2331
    %3165 = vmatprep.subr.bf16.mxu0 0
    %3166 = vmatpush1.bf16.msra.mxu0 %v2332
    %3167 = vmatprep.subr.bf16.mxu0 0
    %3168 = vmatpush1.bf16.msra.mxu0 %v2333
    %3169 = vmatprep.subr.bf16.mxu0 0
    %3170 = vmatpush1.bf16.msra.mxu0 %v2334
    %3171 = vmatprep.subr.bf16.mxu0 0
    %3172 = vmatpush1.bf16.msra.mxu0 %v2335
    %3173 = vmatprep.subr.bf16.mxu0 0
    %3174 = vmatpush1.bf16.msra.mxu0 %v2336
    %3175 = vmatprep.subr.bf16.mxu0 0
    %3176 = vmatpush1.bf16.msra.mxu0 %v2337
    %3177 = vmatprep.mubr.bf16.mxu0 %v329
    %3178 = vmatmul.mubr.bf16.gmra.mrb[0].mxu0 %v328
    %v3179 = vpop.f32.mrb[0].mxu0
    %v3180 = vadd.f32 %v3115, %v3179
    %v3181 = vpop.f32.mrb[0].mxu0
    %v3182 = vpop.f32.mrb[0].mxu0
    %v3183 = vadd.f32 %v3118, %v3182
    %v3184 = vpop.f32.mrb[0].mxu0
    %3185 = vmatprep.mubr.bf16.mxu0 %v339
    %3186 = vmatmul.mubr.bf16.gmra.mrb[0].mxu0 %v338
    %v3187 = vpop.f32.mrb[0].mxu0
    %v3188 = vadd.f32 %v3123, %v3187
    %v3189 = vpop.f32.mrb[0].mxu0
    %v3190 = vpop.f32.mrb[0].mxu0
    %v3191 = vadd.f32 %v3126, %v3190
    %v3192 = vpop.f32.mrb[0].mxu0
    %3193 = vmatprep.mubr.bf16.mxu0 %v349
    %3194 = vmatmul.mubr.bf16.gmra.mrb[0].mxu0 %v348
    %v3195 = vpop.f32.mrb[0].mxu0
    %v3196 = vadd.f32 %v3131, %v3195
    %v3197 = vpop.f32.mrb[0].mxu0
    %v3198 = vpop.f32.mrb[0].mxu0
    %v3199 = vadd.f32 %v3134, %v3198
    %v3200 = vpop.f32.mrb[0].mxu0
    %3201 = vmatprep.mubr.bf16.mxu0 %v359
    %3202 = vmatmul.mubr.bf16.gmra.mrb[0].mxu0 %v358
    %v3203 = vpop.f32.mrb[0].mxu0
    %v3204 = vadd.f32 %v3139, %v3203
    %v3205 = vpop.f32.mrb[0].mxu0
    %v3206 = vpop.f32.mrb[0].mxu0
    %v3207 = vadd.f32 %v3142, %v3206
    %v3208 = vpop.f32.mrb[0].mxu0
    %3209 = vdwg.mxu0
    %3210 = vmatprep.subr.bf16.mxu0 0
    %3211 = vmatpush1.bf16.msra.mxu0 %v2338
    %3212 = vmatprep.subr.bf16.mxu0 0
    %3213 = vmatpush1.bf16.msra.mxu0 %v2339
    %3214 = vmatprep.subr.bf16.mxu0 0
    %3215 = vmatpush1.bf16.msra.mxu0 %v2340
    %3216 = vmatprep.subr.bf16.mxu0 0
    %3217 = vmatpush1.bf16.msra.mxu0 %v2341
    %3218 = vmatprep.subr.bf16.mxu0 0
    %3219 = vmatpush1.bf16.msra.mxu0 %v2342
    %3220 = vmatprep.subr.bf16.mxu0 0
    %3221 = vmatpush1.bf16.msra.mxu0 %v2343
    %3222 = vmatprep.subr.bf16.mxu0 0
    %3223 = vmatpush1.bf16.msra.mxu0 %v2344
    %3224 = vmatprep.subr.bf16.mxu0 0
    %3225 = vmatpush1.bf16.msra.mxu0 %v2345
    %3226 = vmatprep.subr.bf16.mxu0 0
    %3227 = vmatpush1.bf16.msra.mxu0 %v2346
    %3228 = vmatprep.subr.bf16.mxu0 0
    %3229 = vmatpush1.bf16.msra.mxu0 %v2347
    %3230 = vmatprep.subr.bf16.mxu0 0
    %3231 = vmatpush1.bf16.msra.mxu0 %v2348
    %3232 = vmatprep.subr.bf16.mxu0 0
    %3233 = vmatpush1.bf16.msra.mxu0 %v2349
    %3234 = vmatprep.subr.bf16.mxu0 0
    %3235 = vmatpush1.bf16.msra.mxu0 %v2350
    %3236 = vmatprep.subr.bf16.mxu0 0
    %3237 = vmatpush1.bf16.msra.mxu0 %v2351
    %3238 = vmatprep.subr.bf16.mxu0 0
    %3239 = vmatpush1.bf16.msra.mxu0 %v2352
    %3240 = vmatprep.subr.bf16.mxu0 0
    %3241 = vmatpush1.bf16.msra.mxu0 %v2353
    %3242 = vmatprep.mubr.bf16.mxu0 %v331
    %3243 = vmatmul.mubr.bf16.gmra.mrb[0].mxu0 %v330
    %v3244 = vpop.f32.mrb[0].mxu0
    %v3245 = vadd.f32 %v3180, %v3244
    %v3246 = vpop.f32.mrb[0].mxu0
    %v3247 = vpop.f32.mrb[0].mxu0
    %v3248 = vadd.f32 %v3183, %v3247
    %v3249 = vpop.f32.mrb[0].mxu0
    %3250 = vmatprep.mubr.bf16.mxu0 %v341
    %3251 = vmatmul.mubr.bf16.gmra.mrb[0].mxu0 %v340
    %v3252 = vpop.f32.mrb[0].mxu0
    %v3253 = vadd.f32 %v3188, %v3252
    %v3254 = vpop.f32.mrb[0].mxu0
    %v3255 = vpop.f32.mrb[0].mxu0
    %v3256 = vadd.f32 %v3191, %v3255
    %v3257 = vpop.f32.mrb[0].mxu0
    %3258 = vmatprep.mubr.bf16.mxu0 %v351
    %3259 = vmatmul.mubr.bf16.gmra.mrb[0].mxu0 %v350
    %v3260 = vpop.f32.mrb[0].mxu0
    %v3261 = vadd.f32 %v3196, %v3260
    %v3262 = vpop.f32.mrb[0].mxu0
    %v3263 = vpop.f32.mrb[0].mxu0
    %v3264 = vadd.f32 %v3199, %v3263
    %v3265 = vpop.f32.mrb[0].mxu0
    %3266 = vmatprep.mubr.bf16.mxu0 %v361
    %3267 = vmatmul.mubr.bf16.gmra.mrb[0].mxu0 %v360
    %v3268 = vpop.f32.mrb[0].mxu0
    %v3269 = vadd.f32 %v3204, %v3268
    %v3270 = vpop.f32.mrb[0].mxu0
    %v3271 = vpop.f32.mrb[0].mxu0
    %v3272 = vadd.f32 %v3207, %v3271
    %v3273 = vpop.f32.mrb[0].mxu0
    %3274 = vdwg.mxu0
    %3275 = vmatprep.subr.bf16.mxu0 0
    %3276 = vmatpush1.bf16.msra.mxu0 %v2354
    %3277 = vmatprep.subr.bf16.mxu0 0
    %3278 = vmatpush1.bf16.msra.mxu0 %v2355
    %3279 = vmatprep.subr.bf16.mxu0 0
    %3280 = vmatpush1.bf16.msra.mxu0 %v2356
    %3281 = vmatprep.subr.bf16.mxu0 0
    %3282 = vmatpush1.bf16.msra.mxu0 %v2357
    %3283 = vmatprep.subr.bf16.mxu0 0
    %3284 = vmatpush1.bf16.msra.mxu0 %v2358
    %3285 = vmatprep.subr.bf16.mxu0 0
    %3286 = vmatpush1.bf16.msra.mxu0 %v2359
    %3287 = vmatprep.subr.bf16.mxu0 0
    %3288 = vmatpush1.bf16.msra.mxu0 %v2360
    %3289 = vmatprep.subr.bf16.mxu0 0
    %3290 = vmatpush1.bf16.msra.mxu0 %v2361
    %3291 = vmatprep.subr.bf16.mxu0 0
    %3292 = vmatpush1.bf16.msra.mxu0 %v2362
    %3293 = vmatprep.subr.bf16.mxu0 0
    %3294 = vmatpush1.bf16.msra.mxu0 %v2363
    %3295 = vmatprep.subr.bf16.mxu0 0
    %3296 = vmatpush1.bf16.msra.mxu0 %v2364
    %3297 = vmatprep.subr.bf16.mxu0 0
    %3298 = vmatpush1.bf16.msra.mxu0 %v2365
    %3299 = vmatprep.subr.bf16.mxu0 0
    %3300 = vmatpush1.bf16.msra.mxu0 %v2366
    %3301 = vmatprep.subr.bf16.mxu0 0
    %3302 = vmatpush1.bf16.msra.mxu0 %v2367
    %3303 = vmatprep.subr.bf16.mxu0 0
    %3304 = vmatpush1.bf16.msra.mxu0 %v2368
    %3305 = vmatprep.subr.bf16.mxu0 0
    %3306 = vmatpush1.bf16.msra.mxu0 %v2369
    %3307 = vmatprep.mubr.bf16.mxu0 %v333
    %3308 = vmatmul.mubr.bf16.gmra.mrb[0].mxu0 %v332
    %v3309 = vpop.f32.mrb[0].mxu0
    %v3310 = vadd.f32 %v3245, %v3309
    %v3311 = vpop.f32.mrb[0].mxu0
    %v3312 = vpop.f32.mrb[0].mxu0
    %v3313 = vadd.f32 %v3248, %v3312
    %v3314 = vpop.f32.mrb[0].mxu0
    %3315 = vmatprep.mubr.bf16.mxu0 %v343
    %3316 = vmatmul.mubr.bf16.gmra.mrb[0].mxu0 %v342
    %v3317 = vpop.f32.mrb[0].mxu0
    %v3318 = vadd.f32 %v3253, %v3317
    %v3319 = vpop.f32.mrb[0].mxu0
    %v3320 = vpop.f32.mrb[0].mxu0
    %v3321 = vadd.f32 %v3256, %v3320
    %v3322 = vpop.f32.mrb[0].mxu0
    %3323 = vmatprep.mubr.bf16.mxu0 %v353
    %3324 = vmatmul.mubr.bf16.gmra.mrb[0].mxu0 %v352
    %v3325 = vpop.f32.mrb[0].mxu0
    %v3326 = vadd.f32 %v3261, %v3325
    %v3327 = vpop.f32.mrb[0].mxu0
    %v3328 = vpop.f32.mrb[0].mxu0
    %v3329 = vadd.f32 %v3264, %v3328
    %v3330 = vpop.f32.mrb[0].mxu0
    %3331 = vmatprep.mubr.bf16.mxu0 %v363
    %3332 = vmatmul.mubr.bf16.gmra.mrb[0].mxu0 %v362
    %v3333 = vpop.f32.mrb[0].mxu0
    %v3334 = vadd.f32 %v3269, %v3333
    %v3335 = vpop.f32.mrb[0].mxu0
    %v3336 = vpop.f32.mrb[0].mxu0
    %v3337 = vadd.f32 %v3272, %v3336
    %v3338 = vpop.f32.mrb[0].mxu0
    %3339 = vdwg.mxu0
    %3340 = vmatprep.subr.bf16.mxu0 0
    %3341 = vmatpush1.bf16.msra.mxu0 %v2370
    %3342 = vmatprep.subr.bf16.mxu0 0
    %3343 = vmatpush1.bf16.msra.mxu0 %v2371
    %3344 = vmatprep.subr.bf16.mxu0 0
    %3345 = vmatpush1.bf16.msra.mxu0 %v2372
    %3346 = vmatprep.subr.bf16.mxu0 0
    %3347 = vmatpush1.bf16.msra.mxu0 %v2373
    %3348 = vmatprep.subr.bf16.mxu0 0
    %3349 = vmatpush1.bf16.msra.mxu0 %v2374
    %3350 = vmatprep.subr.bf16.mxu0 0
    %3351 = vmatpush1.bf16.msra.mxu0 %v2375
    %3352 = vmatprep.subr.bf16.mxu0 0
    %3353 = vmatpush1.bf16.msra.mxu0 %v2376
    %3354 = vmatprep.subr.bf16.mxu0 0
    %3355 = vmatpush1.bf16.msra.mxu0 %v2377
    %3356 = vmatprep.subr.bf16.mxu0 0
    %3357 = vmatpush1.bf16.msra.mxu0 %v2378
    %3358 = vmatprep.subr.bf16.mxu0 0
    %3359 = vmatpush1.bf16.msra.mxu0 %v2379
    %3360 = vmatprep.subr.bf16.mxu0 0
    %3361 = vmatpush1.bf16.msra.mxu0 %v2380
    %3362 = vmatprep.subr.bf16.mxu0 0
    %3363 = vmatpush1.bf16.msra.mxu0 %v2381
    %3364 = vmatprep.subr.bf16.mxu0 0
    %3365 = vmatpush1.bf16.msra.mxu0 %v2382
    %3366 = vmatprep.subr.bf16.mxu0 0
    %3367 = vmatpush1.bf16.msra.mxu0 %v2383
    %3368 = vmatprep.subr.bf16.mxu0 0
    %3369 = vmatpush1.bf16.msra.mxu0 %v2384
    %3370 = vmatprep.subr.bf16.mxu0 0
    %3371 = vmatpush1.bf16.msra.mxu0 %v2385
    %3372 = vmatprep.mubr.bf16.mxu0 %v526
    %3373 = vmatmul.mubr.bf16.gmra.mrb[0].mxu0 %v525
    %v3374 = vpop.f32.mrb[0].mxu0
    %v3375 = vadd.f32 %v3310, %v3374
    %v3376 = vpop.f32.mrb[0].mxu0
    %v3377 = vpop.f32.mrb[0].mxu0
    %v3378 = vadd.f32 %v3313, %v3377
    %v3379 = vpop.f32.mrb[0].mxu0
    %3380 = vmatprep.mubr.bf16.mxu0 %v536
    %3381 = vmatmul.mubr.bf16.gmra.mrb[0].mxu0 %v535
    %v3382 = vpop.f32.mrb[0].mxu0
    %v3383 = vadd.f32 %v3318, %v3382
    %v3384 = vpop.f32.mrb[0].mxu0
    %v3385 = vpop.f32.mrb[0].mxu0
    %v3386 = vadd.f32 %v3321, %v3385
    %v3387 = vpop.f32.mrb[0].mxu0
    %3388 = vmatprep.mubr.bf16.mxu0 %v546
    %3389 = vmatmul.mubr.bf16.gmra.mrb[0].mxu0 %v545
    %v3390 = vpop.f32.mrb[0].mxu0
    %v3391 = vadd.f32 %v3326, %v3390
    %v3392 = vpop.f32.mrb[0].mxu0
    %v3393 = vpop.f32.mrb[0].mxu0
    %v3394 = vadd.f32 %v3329, %v3393
    %v3395 = vpop.f32.mrb[0].mxu0
    %3396 = vmatprep.mubr.bf16.mxu0 %v556
    %3397 = vmatmul.mubr.bf16.gmra.mrb[0].mxu0 %v555
    %v3398 = vpop.f32.mrb[0].mxu0
    %v3399 = vadd.f32 %v3334, %v3398
    %v3400 = vpop.f32.mrb[0].mxu0
    %v3401 = vpop.f32.mrb[0].mxu0
    %v3402 = vadd.f32 %v3337, %v3401
    %v3403 = vpop.f32.mrb[0].mxu0
    %3404 = vdwg.mxu0
    %3405 = vmatprep.subr.bf16.mxu0 0
    %3406 = vmatpush1.bf16.msra.mxu0 %v2386
    %3407 = vmatprep.subr.bf16.mxu0 0
    %3408 = vmatpush1.bf16.msra.mxu0 %v2387
    %3409 = vmatprep.subr.bf16.mxu0 0
    %3410 = vmatpush1.bf16.msra.mxu0 %v2388
    %3411 = vmatprep.subr.bf16.mxu0 0
    %3412 = vmatpush1.bf16.msra.mxu0 %v2389
    %3413 = vmatprep.subr.bf16.mxu0 0
    %3414 = vmatpush1.bf16.msra.mxu0 %v2390
    %3415 = vmatprep.subr.bf16.mxu0 0
    %3416 = vmatpush1.bf16.msra.mxu0 %v2391
    %3417 = vmatprep.subr.bf16.mxu0 0
    %3418 = vmatpush1.bf16.msra.mxu0 %v2392
    %3419 = vmatprep.subr.bf16.mxu0 0
    %3420 = vmatpush1.bf16.msra.mxu0 %v2393
    %3421 = vmatprep.subr.bf16.mxu0 0
    %3422 = vmatpush1.bf16.msra.mxu0 %v2394
    %3423 = vmatprep.subr.bf16.mxu0 0
    %3424 = vmatpush1.bf16.msra.mxu0 %v2395
    %3425 = vmatprep.subr.bf16.mxu0 0
    %3426 = vmatpush1.bf16.msra.mxu0 %v2396
    %3427 = vmatprep.subr.bf16.mxu0 0
    %3428 = vmatpush1.bf16.msra.mxu0 %v2397
    %3429 = vmatprep.subr.bf16.mxu0 0
    %3430 = vmatpush1.bf16.msra.mxu0 %v2398
    %3431 = vmatprep.subr.bf16.mxu0 0
    %3432 = vmatpush1.bf16.msra.mxu0 %v2399
    %3433 = vmatprep.subr.bf16.mxu0 0
    %3434 = vmatpush1.bf16.msra.mxu0 %v2400
    %3435 = vmatprep.subr.bf16.mxu0 0
    %3436 = vmatpush1.bf16.msra.mxu0 %v2401
    %3437 = vmatprep.mubr.bf16.mxu0 %v528
    %3438 = vmatmul.mubr.bf16.gmra.mrb[0].mxu0 %v527
    %v3439 = vpop.f32.mrb[0].mxu0
    %v3440 = vadd.f32 %v3375, %v3439
    %v3441 = vpop.f32.mrb[0].mxu0
    %v3442 = vpop.f32.mrb[0].mxu0
    %v3443 = vadd.f32 %v3378, %v3442
    %v3444 = vpop.f32.mrb[0].mxu0
    %3445 = vmatprep.mubr.bf16.mxu0 %v538
    %3446 = vmatmul.mubr.bf16.gmra.mrb[0].mxu0 %v537
    %v3447 = vpop.f32.mrb[0].mxu0
    %v3448 = vadd.f32 %v3383, %v3447
    %v3449 = vpop.f32.mrb[0].mxu0
    %v3450 = vpop.f32.mrb[0].mxu0
    %v3451 = vadd.f32 %v3386, %v3450
    %v3452 = vpop.f32.mrb[0].mxu0
    %3453 = vmatprep.mubr.bf16.mxu0 %v548
    %3454 = vmatmul.mubr.bf16.gmra.mrb[0].mxu0 %v547
    %v3455 = vpop.f32.mrb[0].mxu0
    %v3456 = vadd.f32 %v3391, %v3455
    %v3457 = vpop.f32.mrb[0].mxu0
    %v3458 = vpop.f32.mrb[0].mxu0
    %v3459 = vadd.f32 %v3394, %v3458
    %v3460 = vpop.f32.mrb[0].mxu0
    %3461 = vmatprep.mubr.bf16.mxu0 %v558
    %3462 = vmatmul.mubr.bf16.gmra.mrb[0].mxu0 %v557
    %v3463 = vpop.f32.mrb[0].mxu0
    %v3464 = vadd.f32 %v3399, %v3463
    %v3465 = vpop.f32.mrb[0].mxu0
    %v3466 = vpop.f32.mrb[0].mxu0
    %v3467 = vadd.f32 %v3402, %v3466
    %v3468 = vpop.f32.mrb[0].mxu0
    %3469 = vdwg.mxu0
    %3470 = vmatprep.subr.bf16.mxu0 0
    %3471 = vmatpush1.bf16.msra.mxu0 %v2402
    %3472 = vmatprep.subr.bf16.mxu0 0
    %3473 = vmatpush1.bf16.msra.mxu0 %v2403
    %3474 = vmatprep.subr.bf16.mxu0 0
    %3475 = vmatpush1.bf16.msra.mxu0 %v2404
    %3476 = vmatprep.subr.bf16.mxu0 0
    %3477 = vmatpush1.bf16.msra.mxu0 %v2405
    %3478 = vmatprep.subr.bf16.mxu0 0
    %3479 = vmatpush1.bf16.msra.mxu0 %v2406
    %3480 = vmatprep.subr.bf16.mxu0 0
    %3481 = vmatpush1.bf16.msra.mxu0 %v2407
    %3482 = vmatprep.subr.bf16.mxu0 0
    %3483 = vmatpush1.bf16.msra.mxu0 %v2408
    %3484 = vmatprep.subr.bf16.mxu0 0
    %3485 = vmatpush1.bf16.msra.mxu0 %v2409
    %3486 = vmatprep.subr.bf16.mxu0 0
    %3487 = vmatpush1.bf16.msra.mxu0 %v2410
    %3488 = vmatprep.subr.bf16.mxu0 0
    %3489 = vmatpush1.bf16.msra.mxu0 %v2411
    %3490 = vmatprep.subr.bf16.mxu0 0
    %3491 = vmatpush1.bf16.msra.mxu0 %v2412
    %3492 = vmatprep.subr.bf16.mxu0 0
    %3493 = vmatpush1.bf16.msra.mxu0 %v2413
    %3494 = vmatprep.subr.bf16.mxu0 0
    %3495 = vmatpush1.bf16.msra.mxu0 %v2414
    %3496 = vmatprep.subr.bf16.mxu0 0
    %3497 = vmatpush1.bf16.msra.mxu0 %v2415
    %3498 = vmatprep.subr.bf16.mxu0 0
    %3499 = vmatpush1.bf16.msra.mxu0 %v2416
    %3500 = vmatprep.subr.bf16.mxu0 0
    %3501 = vmatpush1.bf16.msra.mxu0 %v2417
    %3502 = vmatprep.mubr.bf16.mxu0 %v530
    %3503 = vmatmul.mubr.bf16.gmra.mrb[0].mxu0 %v529
    %v3504 = vpop.f32.mrb[0].mxu0
    %v3505 = vadd.f32 %v3440, %v3504
    %v3506 = vpop.f32.mrb[0].mxu0
    %v3507 = vpop.f32.mrb[0].mxu0
    %v3508 = vadd.f32 %v3443, %v3507
    %v3509 = vpop.f32.mrb[0].mxu0
    %3510 = vmatprep.mubr.bf16.mxu0 %v540
    %3511 = vmatmul.mubr.bf16.gmra.mrb[0].mxu0 %v539
    %v3512 = vpop.f32.mrb[0].mxu0
    %v3513 = vadd.f32 %v3448, %v3512
    %v3514 = vpop.f32.mrb[0].mxu0
    %v3515 = vpop.f32.mrb[0].mxu0
    %v3516 = vadd.f32 %v3451, %v3515
    %v3517 = vpop.f32.mrb[0].mxu0
    %3518 = vmatprep.mubr.bf16.mxu0 %v550
    %3519 = vmatmul.mubr.bf16.gmra.mrb[0].mxu0 %v549
    %v3520 = vpop.f32.mrb[0].mxu0
    %v3521 = vadd.f32 %v3456, %v3520
    %v3522 = vpop.f32.mrb[0].mxu0
    %v3523 = vpop.f32.mrb[0].mxu0
    %v3524 = vadd.f32 %v3459, %v3523
    %v3525 = vpop.f32.mrb[0].mxu0
    %3526 = vmatprep.mubr.bf16.mxu0 %v560
    %3527 = vmatmul.mubr.bf16.gmra.mrb[0].mxu0 %v559
    %v3528 = vpop.f32.mrb[0].mxu0
    %v3529 = vadd.f32 %v3464, %v3528
    %v3530 = vpop.f32.mrb[0].mxu0
    %v3531 = vpop.f32.mrb[0].mxu0
    %v3532 = vadd.f32 %v3467, %v3531
    %v3533 = vpop.f32.mrb[0].mxu0
    %3534 = vdwg.mxu0
    %3535 = vmatprep.subr.bf16.mxu0 0
    %3536 = vmatpush1.bf16.msra.mxu0 %v2418
    %3537 = vmatprep.subr.bf16.mxu0 0
    %3538 = vmatpush1.bf16.msra.mxu0 %v2419
    %3539 = vmatprep.subr.bf16.mxu0 0
    %3540 = vmatpush1.bf16.msra.mxu0 %v2420
    %3541 = vmatprep.subr.bf16.mxu0 0
    %3542 = vmatpush1.bf16.msra.mxu0 %v2421
    %3543 = vmatprep.subr.bf16.mxu0 0
    %3544 = vmatpush1.bf16.msra.mxu0 %v2422
    %3545 = vmatprep.subr.bf16.mxu0 0
    %3546 = vmatpush1.bf16.msra.mxu0 %v2423
    %3547 = vmatprep.subr.bf16.mxu0 0
    %3548 = vmatpush1.bf16.msra.mxu0 %v2424
    %3549 = vmatprep.subr.bf16.mxu0 0
    %3550 = vmatpush1.bf16.msra.mxu0 %v2425
    %3551 = vmatprep.subr.bf16.mxu0 0
    %3552 = vmatpush1.bf16.msra.mxu0 %v2426
    %3553 = vmatprep.subr.bf16.mxu0 0
    %3554 = vmatpush1.bf16.msra.mxu0 %v2427
    %3555 = vmatprep.subr.bf16.mxu0 0
    %3556 = vmatpush1.bf16.msra.mxu0 %v2428
    %3557 = vmatprep.subr.bf16.mxu0 0
    %3558 = vmatpush1.bf16.msra.mxu0 %v2429
    %3559 = vmatprep.subr.bf16.mxu0 0
    %3560 = vmatpush1.bf16.msra.mxu0 %v2430
    %3561 = vmatprep.subr.bf16.mxu0 0
    %3562 = vmatpush1.bf16.msra.mxu0 %v2431
    %3563 = vmatprep.subr.bf16.mxu0 0
    %3564 = vmatpush1.bf16.msra.mxu0 %v2432
    %3565 = vmatprep.subr.bf16.mxu0 0
    %3566 = vmatpush1.bf16.msra.mxu0 %v2433
    %3567 = vmatprep.mubr.bf16.mxu0 %v532
    %3568 = vmatmul.mubr.bf16.gmra.mrb[0].mxu0 %v531
    %v3569 = vpop.f32.mrb[0].mxu0
    %v3570 = vadd.f32 %v3505, %v3569
    %v3571 = vpop.f32.mrb[0].mxu0
    %v3572 = vpop.f32.mrb[0].mxu0
    %v3573 = vadd.f32 %v3508, %v3572
    %v3574 = vpop.f32.mrb[0].mxu0
    %3575 = vmatprep.mubr.bf16.mxu0 %v542
    %3576 = vmatmul.mubr.bf16.gmra.mrb[0].mxu0 %v541
    %v3577 = vpop.f32.mrb[0].mxu0
    %v3578 = vadd.f32 %v3513, %v3577
    %v3579 = vpop.f32.mrb[0].mxu0
    %v3580 = vpop.f32.mrb[0].mxu0
    %v3581 = vadd.f32 %v3516, %v3580
    %v3582 = vpop.f32.mrb[0].mxu0
    %3583 = vmatprep.mubr.bf16.mxu0 %v552
    %3584 = vmatmul.mubr.bf16.gmra.mrb[0].mxu0 %v551
    %v3585 = vpop.f32.mrb[0].mxu0
    %v3586 = vadd.f32 %v3521, %v3585
    %v3587 = vpop.f32.mrb[0].mxu0
    %v3588 = vpop.f32.mrb[0].mxu0
    %v3589 = vadd.f32 %v3524, %v3588
    %v3590 = vpop.f32.mrb[0].mxu0
    %3591 = vmatprep.mubr.bf16.mxu0 %v562
    %3592 = vmatmul.mubr.bf16.gmra.mrb[0].mxu0 %v561
    %v3593 = vpop.f32.mrb[0].mxu0
    %v3594 = vadd.f32 %v3529, %v3593
    %v3595 = vpop.f32.mrb[0].mxu0
    %v3596 = vpop.f32.mrb[0].mxu0
    %v3597 = vadd.f32 %v3532, %v3596
    %v3598 = vpop.f32.mrb[0].mxu0
    %3599 = vdwg.mxu0
    %3600 = vmatprep.subr.bf16.mxu0 0
    %3601 = vmatpush1.bf16.msra.mxu0 %v2434
    %3602 = vmatprep.subr.bf16.mxu0 0
    %3603 = vmatpush1.bf16.msra.mxu0 %v2435
    %3604 = vmatprep.subr.bf16.mxu0 0
    %3605 = vmatpush1.bf16.msra.mxu0 %v2436
    %3606 = vmatprep.subr.bf16.mxu0 0
    %3607 = vmatpush1.bf16.msra.mxu0 %v2437
    %3608 = vmatprep.subr.bf16.mxu0 0
    %3609 = vmatpush1.bf16.msra.mxu0 %v2438
    %3610 = vmatprep.subr.bf16.mxu0 0
    %3611 = vmatpush1.bf16.msra.mxu0 %v2439
    %3612 = vmatprep.subr.bf16.mxu0 0
    %3613 = vmatpush1.bf16.msra.mxu0 %v2440
    %3614 = vmatprep.subr.bf16.mxu0 0
    %3615 = vmatpush1.bf16.msra.mxu0 %v2441
    %3616 = vmatprep.subr.bf16.mxu0 0
    %3617 = vmatpush1.bf16.msra.mxu0 %v2442
    %3618 = vmatprep.subr.bf16.mxu0 0
    %3619 = vmatpush1.bf16.msra.mxu0 %v2443
    %3620 = vmatprep.subr.bf16.mxu0 0
    %3621 = vmatpush1.bf16.msra.mxu0 %v2444
    %3622 = vmatprep.subr.bf16.mxu0 0
    %3623 = vmatpush1.bf16.msra.mxu0 %v2445
    %3624 = vmatprep.subr.bf16.mxu0 0
    %3625 = vmatpush1.bf16.msra.mxu0 %v2446
    %3626 = vmatprep.subr.bf16.mxu0 0
    %3627 = vmatpush1.bf16.msra.mxu0 %v2447
    %3628 = vmatprep.subr.bf16.mxu0 0
    %3629 = vmatpush1.bf16.msra.mxu0 %v2448
    %3630 = vmatprep.subr.bf16.mxu0 0
    %3631 = vmatpush1.bf16.msra.mxu0 %v2449
    %3632 = vmatprep.mubr.bf16.mxu0 %v534
    %3633 = vmatmul.mubr.bf16.gmra.mrb[0].mxu0 %v533
    %v3634 = vpop.f32.mrb[0].mxu0
    %v3635 = vadd.f32 %v3570, %v3634
    %v3636 = vpop.f32.mrb[0].mxu0
    %v3637 = vpop.f32.mrb[0].mxu0
    %v3638 = vadd.f32 %v3573, %v3637
    %v3639 = vpop.f32.mrb[0].mxu0
    %3640 = vmatprep.mubr.bf16.mxu0 %v544
    %3641 = vmatmul.mubr.bf16.gmra.mrb[0].mxu0 %v543
    %v3642 = vpop.f32.mrb[0].mxu0
    %v3643 = vadd.f32 %v3578, %v3642
    %v3644 = vpop.f32.mrb[0].mxu0
    %v3645 = vpop.f32.mrb[0].mxu0
    %v3646 = vadd.f32 %v3581, %v3645
    %v3647 = vpop.f32.mrb[0].mxu0
    %3648 = vmatprep.mubr.bf16.mxu0 %v554
    %3649 = vmatmul.mubr.bf16.gmra.mrb[0].mxu0 %v553
    %v3650 = vpop.f32.mrb[0].mxu0
    %v3651 = vadd.f32 %v3586, %v3650
    %v3652 = vpop.f32.mrb[0].mxu0
    %v3653 = vpop.f32.mrb[0].mxu0
    %v3654 = vadd.f32 %v3589, %v3653
    %v3655 = vpop.f32.mrb[0].mxu0
    %3656 = vmatprep.mubr.bf16.mxu0 %v564
    %3657 = vmatmul.mubr.bf16.gmra.mrb[0].mxu0 %v563
    %v3658 = vpop.f32.mrb[0].mxu0
    %v3659 = vadd.f32 %v3594, %v3658
    %v3660 = vpop.f32.mrb[0].mxu0
    %v3661 = vpop.f32.mrb[0].mxu0
    %v3662 = vadd.f32 %v3597, %v3661
    %v3663 = vpop.f32.mrb[0].mxu0
    %3664 = vdwg.mxu0
    %v3665 = vmax.f32 %v3635, 0.0
    %v3666 = vmax.f32 %v3638, 0.0
    %v3667 = vmax.f32 %v3643, 0.0
    %v3668 = vmax.f32 %v3646, 0.0
    %v3669 = vmax.f32 %v3651, 0.0
    %v3670 = vmax.f32 %v3654, 0.0
    %v3671 = vmax.f32 %v3659, 0.0
    %v3672 = vmax.f32 %v3662, 0.0
    %v3673 = vlaneseq
    %v3674 = vshrl.u32 %v3673, 7
    %v3675 = vsub.s32 1, %v3674
    %v3676 = vrot.slane %v1245, %v3675
    %v3677 = vmul.f32 %v3665, %v3676
    %v3678 = vmul.f32 %v3666, %v3676
    %v3679 = vmul.f32 %v3667, %v3676
    %v3680 = vmul.f32 %v3668, %v3676
    %v3681 = vmul.f32 %v3669, %v3676
    %v3682 = vmul.f32 %v3670, %v3676
    %v3683 = vmul.f32 %v3671, %v3676
    %v3684 = vmul.f32 %v3672, %v3676
    %v3685 = vlaneseq
    %v3686 = vshrl.u32 %v3685, 7
    %v3687 = vsub.s32 2, %v3686
    %v3688 = vrot.slane %v1245, %v3687
    %v3689 = vadd.f32 %v3677, %v3688
    %v3690 = vadd.f32 %v3678, %v3688
    %v3691 = vadd.f32 %v3679, %v3688
    %v3692 = vadd.f32 %v3680, %v3688
    %v3693 = vadd.f32 %v3681, %v3688
    %v3694 = vadd.f32 %v3682, %v3688
    %v3695 = vadd.f32 %v3683, %v3688
    %v3696 = vadd.f32 %v3684, %v3688
    %v3697 = vpack.c.bf16 %v3690, %v3689
    %v3698 = vpack.c.bf16 %v3692, %v3691
    %v3699 = vpack.c.bf16 %v3694, %v3693
    %v3700 = vpack.c.bf16 %v3696, %v3695
    %v3701 = vrot.slane %v3689, 1
    %v3702 = vrot.slane %v3690, 1
    %v3703 = vrot.slane %v3691, 1
    %v3704 = vrot.slane %v3692, 1
    %v3705 = vrot.slane %v3693, 1
    %v3706 = vrot.slane %v3694, 1
    %v3707 = vrot.slane %v3695, 1
    %v3708 = vrot.slane %v3696, 1
    %v3709 = vsel %vm243, %v3707, %v3708
    %v3710 = vsel %vm243, %v3706, %v3707
    %v3711 = vsel %vm243, %v3705, %v3706
    %v3712 = vsel %vm243, %v3704, %v3705
    %v3713 = vsel %vm243, %v3703, %v3704
    %v3714 = vsel %vm243, %v3702, %v3703
    %v3715 = vsel %vm243, %v3701, %v3702
    %v3716 = vsel %vm243, %v3708, %v3701
    %v3717 = vpack.c.bf16 %v3714, %v3715
    %v3718 = vpack.c.bf16 %v3712, %v3713
    %v3719 = vpack.c.bf16 %v3710, %v3711
    %v3720 = vpack.c.bf16 %v3716, %v3709
    %v3721 = vrot.slane %v3689, 2
    %v3722 = vrot.slane %v3690, 2
    %v3723 = vrot.slane %v3691, 2
    %v3724 = vrot.slane %v3692, 2
    %v3725 = vrot.slane %v3693, 2
    %v3726 = vrot.slane %v3694, 2
    %v3727 = vrot.slane %v3695, 2
    %v3728 = vrot.slane %v3696, 2
    %v3729 = vsel %vm444, %v3727, %v3728
    %v3730 = vsel %vm444, %v3726, %v3727
    %v3731 = vsel %vm444, %v3725, %v3726
    %v3732 = vsel %vm444, %v3724, %v3725
    %v3733 = vsel %vm444, %v3723, %v3724
    %v3734 = vsel %vm444, %v3722, %v3723
    %v3735 = vsel %vm444, %v3721, %v3722
    %v3736 = vsel %vm444, %v3728, %v3721
    %v3737 = vpack.c.bf16 %v3734, %v3735
    %v3738 = vpack.c.bf16 %v3732, %v3733
    %v3739 = vpack.c.bf16 %v3730, %v3731
    %v3740 = vpack.c.bf16 %v3736, %v3729
    %v3741 = vrot.slane %v3689, 3
    %v3742 = vrot.slane %v3690, 3
    %v3743 = vrot.slane %v3691, 3
    %v3744 = vrot.slane %v3692, 3
    %v3745 = vrot.slane %v3693, 3
    %v3746 = vrot.slane %v3694, 3
    %v3747 = vrot.slane %v3695, 3
    %v3748 = vrot.slane %v3696, 3
    %vm3749 = vcmp.lt.s32.totalorder %v242, 5
    %v3750 = vsel %vm3749, %v3747, %v3748
    %v3751 = vsel %vm3749, %v3746, %v3747
    %v3752 = vsel %vm3749, %v3745, %v3746
    %v3753 = vsel %vm3749, %v3744, %v3745
    %v3754 = vsel %vm3749, %v3743, %v3744
    %v3755 = vsel %vm3749, %v3742, %v3743
    %v3756 = vsel %vm3749, %v3741, %v3742
    %v3757 = vsel %vm3749, %v3748, %v3741
    %v3758 = vpack.c.bf16 %v3755, %v3756
    %v3759 = vpack.c.bf16 %v3753, %v3754
    %v3760 = vpack.c.bf16 %v3751, %v3752
    %v3761 = vpack.c.bf16 %v3757, %v3750
    %v3762 = vrot.slane %v3689, 4
    %v3763 = vrot.slane %v3690, 4
    %v3764 = vrot.slane %v3691, 4
    %v3765 = vrot.slane %v3692, 4
    %v3766 = vrot.slane %v3693, 4
    %v3767 = vrot.slane %v3694, 4
    %v3768 = vrot.slane %v3695, 4
    %v3769 = vrot.slane %v3696, 4
    %vm3770 = vcmp.lt.s32.totalorder %v242, 4
    %v3771 = vsel %vm3770, %v3768, %v3769
    %v3772 = vsel %vm3770, %v3767, %v3768
    %v3773 = vsel %vm3770, %v3766, %v3767
    %v3774 = vsel %vm3770, %v3765, %v3766
    %v3775 = vsel %vm3770, %v3764, %v3765
    %v3776 = vsel %vm3770, %v3763, %v3764
    %v3777 = vsel %vm3770, %v3762, %v3763
    %v3778 = vsel %vm3770, %v3769, %v3762
    %v3779 = vpack.c.bf16 %v3776, %v3777
    %v3780 = vpack.c.bf16 %v3774, %v3775
    %v3781 = vpack.c.bf16 %v3772, %v3773
    %v3782 = vpack.c.bf16 %v3778, %v3771
    %v3783 = vrot.slane %v3689, 5
    %v3784 = vrot.slane %v3690, 5
    %v3785 = vrot.slane %v3691, 5
    %v3786 = vrot.slane %v3692, 5
    %v3787 = vrot.slane %v3693, 5
    %v3788 = vrot.slane %v3694, 5
    %v3789 = vrot.slane %v3695, 5
    %v3790 = vrot.slane %v3696, 5
    %vm3791 = vcmp.lt.s32.totalorder %v242, 3
    %v3792 = vsel %vm3791, %v3789, %v3790
    %v3793 = vsel %vm3791, %v3788, %v3789
    %v3794 = vsel %vm3791, %v3787, %v3788
    %v3795 = vsel %vm3791, %v3786, %v3787
    %v3796 = vsel %vm3791, %v3785, %v3786
    %v3797 = vsel %vm3791, %v3784, %v3785
    %v3798 = vsel %vm3791, %v3783, %v3784
    %v3799 = vsel %vm3791, %v3790, %v3783
    %v3800 = vpack.c.bf16 %v3797, %v3798
    %v3801 = vpack.c.bf16 %v3795, %v3796
    %v3802 = vpack.c.bf16 %v3793, %v3794
    %v3803 = vpack.c.bf16 %v3799, %v3792
    %v3804 = vld [vmem:[%s3] sm:$0xf]
    %v3805 = vld [vmem:[%s3 + $0x4] sm:$0xf]
    %v3806 = vld [vmem:[%s3 + $0x8] sm:$0xf]
    %v3807 = vld [vmem:[%s3 + $0xc] sm:$0xf]
    %v3808 = vld [vmem:[%s3 + $0x10] sm:$0xf]
    %v3809 = vld [vmem:[%s3 + $0x14] sm:$0xf]
    %v3810 = vld [vmem:[%s3 + $0x18] sm:$0xf]
    %v3811 = vld [vmem:[%s3 + $0x1c] sm:$0xf]
    %v3812 = vld [vmem:[%s3 + $0x20] sm:$0xf]
    %v3813 = vld [vmem:[%s3 + $0x24] sm:$0xf]
    %v3814 = vld [vmem:[%s3 + $0x28] sm:$0xf]
    %v3815 = vld [vmem:[%s3 + $0x2c] sm:$0xf]
    %v3816 = vld [vmem:[%s3 + $0x30] sm:$0xf]
    %v3817 = vld [vmem:[%s3 + $0x34] sm:$0xf]
    %v3818 = vld [vmem:[%s3 + $0x38] sm:$0xf]
    %v3819 = vld [vmem:[%s3 + $0x3c] sm:$0xf]
    %v3820 = vld [vmem:[%s3 + $0x40] sm:$0xf]
    %v3821 = vld [vmem:[%s3 + $0x44] sm:$0xf]
    %v3822 = vld [vmem:[%s3 + $0x48] sm:$0xf]
    %v3823 = vld [vmem:[%s3 + $0x4c] sm:$0xf]
    %v3824 = vld [vmem:[%s3 + $0x50] sm:$0xf]
    %v3825 = vld [vmem:[%s3 + $0x54] sm:$0xf]
    %v3826 = vld [vmem:[%s3 + $0x58] sm:$0xf]
    %v3827 = vld [vmem:[%s3 + $0x5c] sm:$0xf]
    %v3828 = vld [vmem:[%s3 + $0x60] sm:$0xf]
    %v3829 = vld [vmem:[%s3 + $0x64] sm:$0xf]
    %v3830 = vld [vmem:[%s3 + $0x68] sm:$0xf]
    %v3831 = vld [vmem:[%s3 + $0x6c] sm:$0xf]
    %v3832 = vld [vmem:[%s3 + $0x70] sm:$0xf]
    %v3833 = vld [vmem:[%s3 + $0x74] sm:$0xf]
    %v3834 = vld [vmem:[%s3 + $0x78] sm:$0xf]
    %v3835 = vld [vmem:[%s3 + $0x7c] sm:$0xf]
    %v3836 = vld [vmem:[%s3 + $0x80] sm:$0xf]
    %v3837 = vld [vmem:[%s3 + $0x84] sm:$0xf]
    %v3838 = vld [vmem:[%s3 + $0x88] sm:$0xf]
    %v3839 = vld [vmem:[%s3 + $0x8c] sm:$0xf]
    %v3840 = vld [vmem:[%s3 + $0x90] sm:$0xf]
    %v3841 = vld [vmem:[%s3 + $0x94] sm:$0xf]
    %v3842 = vld [vmem:[%s3 + $0x98] sm:$0xf]
    %v3843 = vld [vmem:[%s3 + $0x9c] sm:$0xf]
    %v3844 = vld [vmem:[%s3 + $0xa0] sm:$0xf]
    %v3845 = vld [vmem:[%s3 + $0xa4] sm:$0xf]
    %v3846 = vld [vmem:[%s3 + $0xa8] sm:$0xf]
    %v3847 = vld [vmem:[%s3 + $0xac] sm:$0xf]
    %v3848 = vld [vmem:[%s3 + $0xb0] sm:$0xf]
    %v3849 = vld [vmem:[%s3 + $0xb4] sm:$0xf]
    %v3850 = vld [vmem:[%s3 + $0xb8] sm:$0xf]
    %v3851 = vld [vmem:[%s3 + $0xbc] sm:$0xf]
    %v3852 = vld [vmem:[%s3 + $0xc0] sm:$0xf]
    %v3853 = vld [vmem:[%s3 + $0xc4] sm:$0xf]
    %v3854 = vld [vmem:[%s3 + $0xc8] sm:$0xf]
    %v3855 = vld [vmem:[%s3 + $0xcc] sm:$0xf]
    %v3856 = vld [vmem:[%s3 + $0xd0] sm:$0xf]
    %v3857 = vld [vmem:[%s3 + $0xd4] sm:$0xf]
    %v3858 = vld [vmem:[%s3 + $0xd8] sm:$0xf]
    %v3859 = vld [vmem:[%s3 + $0xdc] sm:$0xf]
    %v3860 = vld [vmem:[%s3 + $0xe0] sm:$0xf]
    %v3861 = vld [vmem:[%s3 + $0xe4] sm:$0xf]
    %v3862 = vld [vmem:[%s3 + $0xe8] sm:$0xf]
    %v3863 = vld [vmem:[%s3 + $0xec] sm:$0xf]
    %v3864 = vld [vmem:[%s3 + $0xf0] sm:$0xf]
    %v3865 = vld [vmem:[%s3 + $0xf4] sm:$0xf]
    %v3866 = vld [vmem:[%s3 + $0xf8] sm:$0xf]
    %v3867 = vld [vmem:[%s3 + $0xfc] sm:$0xf]
    %v3868 = vld [vmem:[%s3 + $0x100] sm:$0xf]
    %v3869 = vld [vmem:[%s3 + $0x104] sm:$0xf]
    %v3870 = vld [vmem:[%s3 + $0x108] sm:$0xf]
    %v3871 = vld [vmem:[%s3 + $0x10c] sm:$0xf]
    %v3872 = vld [vmem:[%s3 + $0x110] sm:$0xf]
    %v3873 = vld [vmem:[%s3 + $0x114] sm:$0xf]
    %v3874 = vld [vmem:[%s3 + $0x118] sm:$0xf]
    %v3875 = vld [vmem:[%s3 + $0x11c] sm:$0xf]
    %v3876 = vld [vmem:[%s3 + $0x120] sm:$0xf]
    %v3877 = vld [vmem:[%s3 + $0x124] sm:$0xf]
    %v3878 = vld [vmem:[%s3 + $0x128] sm:$0xf]
    %v3879 = vld [vmem:[%s3 + $0x12c] sm:$0xf]
    %v3880 = vld [vmem:[%s3 + $0x130] sm:$0xf]
    %v3881 = vld [vmem:[%s3 + $0x134] sm:$0xf]
    %v3882 = vld [vmem:[%s3 + $0x138] sm:$0xf]
    %v3883 = vld [vmem:[%s3 + $0x13c] sm:$0xf]
    %v3884 = vld [vmem:[%s3 + $0x140] sm:$0xf]
    %v3885 = vld [vmem:[%s3 + $0x144] sm:$0xf]
    %v3886 = vld [vmem:[%s3 + $0x148] sm:$0xf]
    %v3887 = vld [vmem:[%s3 + $0x14c] sm:$0xf]
    %v3888 = vld [vmem:[%s3 + $0x150] sm:$0xf]
    %v3889 = vld [vmem:[%s3 + $0x154] sm:$0xf]
    %v3890 = vld [vmem:[%s3 + $0x158] sm:$0xf]
    %v3891 = vld [vmem:[%s3 + $0x15c] sm:$0xf]
    %v3892 = vld [vmem:[%s3 + $0x160] sm:$0xf]
    %v3893 = vld [vmem:[%s3 + $0x164] sm:$0xf]
    %v3894 = vld [vmem:[%s3 + $0x168] sm:$0xf]
    %v3895 = vld [vmem:[%s3 + $0x16c] sm:$0xf]
    %v3896 = vld [vmem:[%s3 + $0x170] sm:$0xf]
    %v3897 = vld [vmem:[%s3 + $0x174] sm:$0xf]
    %v3898 = vld [vmem:[%s3 + $0x178] sm:$0xf]
    %v3899 = vld [vmem:[%s3 + $0x17c] sm:$0xf]
    %v3900 = vld [vmem:[%s4] sm:$0x7]
    %v3901 = vlaneseq
    %v3902 = vshrl.u32 %v3901, 7
    %v3903 = vsub.s32 0, %v3902
    %v3904 = vrot.slane %v3900, %v3903
    %v4001 = vunpack.c.l.b16 %v3804
    %v4002 = vunpack.c.l.b16 %v3805
    %v4003 = vunpack.c.l.b16 %v3806
    %v4004 = vunpack.c.l.b16 %v3807
    %v4005 = vunpack.c.l.b16 %v3808
    %v4006 = vunpack.c.l.b16 %v3809
    %v4007 = vunpack.c.l.b16 %v3810
    %v4008 = vunpack.c.l.b16 %v3811
    %v4009 = vunpack.c.l.b16 %v3812
    %v4010 = vunpack.c.l.b16 %v3813
    %v4011 = vunpack.c.l.b16 %v3814
    %v4012 = vunpack.c.l.b16 %v3815
    %v4013 = vunpack.c.l.b16 %v3816
    %v4014 = vunpack.c.l.b16 %v3817
    %v4015 = vunpack.c.l.b16 %v3818
    %v4016 = vunpack.c.l.b16 %v3819
    %v4017 = vunpack.c.l.b16 %v3820
    %v4018 = vunpack.c.l.b16 %v3821
    %v4019 = vunpack.c.l.b16 %v3822
    %v4020 = vunpack.c.l.b16 %v3823
    %v4021 = vunpack.c.l.b16 %v3824
    %v4022 = vunpack.c.l.b16 %v3825
    %v4023 = vunpack.c.l.b16 %v3826
    %v4024 = vunpack.c.l.b16 %v3827
    %v4025 = vunpack.c.l.b16 %v3828
    %v4026 = vunpack.c.l.b16 %v3829
    %v4027 = vunpack.c.l.b16 %v3830
    %v4028 = vunpack.c.l.b16 %v3831
    %v4029 = vunpack.c.l.b16 %v3832
    %v4030 = vunpack.c.l.b16 %v3833
    %v4031 = vunpack.c.l.b16 %v3834
    %v4032 = vunpack.c.l.b16 %v3835
    %v4033 = vunpack.c.l.b16 %v3836
    %v4034 = vunpack.c.l.b16 %v3837
    %v4035 = vunpack.c.l.b16 %v3838
    %v4036 = vunpack.c.l.b16 %v3839
    %v4037 = vunpack.c.l.b16 %v3840
    %v4038 = vunpack.c.l.b16 %v3841
    %v4039 = vunpack.c.l.b16 %v3842
    %v4040 = vunpack.c.l.b16 %v3843
    %v4041 = vunpack.c.l.b16 %v3844
    %v4042 = vunpack.c.l.b16 %v3845
    %v4043 = vunpack.c.l.b16 %v3846
    %v4044 = vunpack.c.l.b16 %v3847
    %v4045 = vunpack.c.l.b16 %v3848
    %v4046 = vunpack.c.l.b16 %v3849
    %v4047 = vunpack.c.l.b16 %v3850
    %v4048 = vunpack.c.l.b16 %v3851
    %v4049 = vunpack.c.l.b16 %v3852
    %v4050 = vunpack.c.l.b16 %v3853
    %v4051 = vunpack.c.l.b16 %v3854
    %v4052 = vunpack.c.l.b16 %v3855
    %v4053 = vunpack.c.l.b16 %v3856
    %v4054 = vunpack.c.l.b16 %v3857
    %v4055 = vunpack.c.l.b16 %v3858
    %v4056 = vunpack.c.l.b16 %v3859
    %v4057 = vunpack.c.l.b16 %v3860
    %v4058 = vunpack.c.l.b16 %v3861
    %v4059 = vunpack.c.l.b16 %v3862
    %v4060 = vunpack.c.l.b16 %v3863
    %v4061 = vunpack.c.l.b16 %v3864
    %v4062 = vunpack.c.l.b16 %v3865
    %v4063 = vunpack.c.l.b16 %v3866
    %v4064 = vunpack.c.l.b16 %v3867
    %v4065 = vunpack.c.l.b16 %v3868
    %v4066 = vunpack.c.l.b16 %v3869
    %v4067 = vunpack.c.l.b16 %v3870
    %v4068 = vunpack.c.l.b16 %v3871
    %v4069 = vunpack.c.l.b16 %v3872
    %v4070 = vunpack.c.l.b16 %v3873
    %v4071 = vunpack.c.l.b16 %v3874
    %v4072 = vunpack.c.l.b16 %v3875
    %v4073 = vunpack.c.l.b16 %v3876
    %v4074 = vunpack.c.l.b16 %v3877
    %v4075 = vunpack.c.l.b16 %v3878
    %v4076 = vunpack.c.l.b16 %v3879
    %v4077 = vunpack.c.l.b16 %v3880
    %v4078 = vunpack.c.l.b16 %v3881
    %v4079 = vunpack.c.l.b16 %v3882
    %v4080 = vunpack.c.l.b16 %v3883
    %v4081 = vunpack.c.l.b16 %v3884
    %v4082 = vunpack.c.l.b16 %v3885
    %v4083 = vunpack.c.l.b16 %v3886
    %v4084 = vunpack.c.l.b16 %v3887
    %v4085 = vunpack.c.l.b16 %v3888
    %v4086 = vunpack.c.l.b16 %v3889
    %v4087 = vunpack.c.l.b16 %v3890
    %v4088 = vunpack.c.l.b16 %v3891
    %v4089 = vunpack.c.l.b16 %v3892
    %v4090 = vunpack.c.l.b16 %v3893
    %v4091 = vunpack.c.l.b16 %v3894
    %v4092 = vunpack.c.l.b16 %v3895
    %v4093 = vunpack.c.l.b16 %v3896
    %v4094 = vunpack.c.l.b16 %v3897
    %v4095 = vunpack.c.l.b16 %v3898
    %v4096 = vunpack.c.l.b16 %v3899
    %v4097 = vpack.c.b16 %v4002, %v4001
    %v4098 = vpack.c.b16 %v4004, %v4003
    %v4099 = vpack.c.b16 %v4006, %v4005
    %v4100 = vpack.c.b16 %v4008, %v4007
    %v4101 = vpack.c.b16 %v4010, %v4009
    %v4102 = vpack.c.b16 %v4012, %v4011
    %v4103 = vpack.c.b16 %v4014, %v4013
    %v4104 = vpack.c.b16 %v4016, %v4015
    %v4105 = vpack.c.b16 %v4018, %v4017
    %v4106 = vpack.c.b16 %v4020, %v4019
    %v4107 = vpack.c.b16 %v4022, %v4021
    %v4108 = vpack.c.b16 %v4024, %v4023
    %v4109 = vpack.c.b16 %v4026, %v4025
    %v4110 = vpack.c.b16 %v4028, %v4027
    %v4111 = vpack.c.b16 %v4030, %v4029
    %v4112 = vpack.c.b16 %v4032, %v4031
    %v4113 = vpack.c.b16 %v4034, %v4033
    %v4114 = vpack.c.b16 %v4036, %v4035
    %v4115 = vpack.c.b16 %v4038, %v4037
    %v4116 = vpack.c.b16 %v4040, %v4039
    %v4117 = vpack.c.b16 %v4042, %v4041
    %v4118 = vpack.c.b16 %v4044, %v4043
    %v4119 = vpack.c.b16 %v4046, %v4045
    %v4120 = vpack.c.b16 %v4048, %v4047
    %v4121 = vpack.c.b16 %v4050, %v4049
    %v4122 = vpack.c.b16 %v4052, %v4051
    %v4123 = vpack.c.b16 %v4054, %v4053
    %v4124 = vpack.c.b16 %v4056, %v4055
    %v4125 = vpack.c.b16 %v4058, %v4057
    %v4126 = vpack.c.b16 %v4060, %v4059
    %v4127 = vpack.c.b16 %v4062, %v4061
    %v4128 = vpack.c.b16 %v4064, %v4063
    %v4129 = vpack.c.b16 %v4066, %v4065
    %v4130 = vpack.c.b16 %v4068, %v4067
    %v4131 = vpack.c.b16 %v4070, %v4069
    %v4132 = vpack.c.b16 %v4072, %v4071
    %v4133 = vpack.c.b16 %v4074, %v4073
    %v4134 = vpack.c.b16 %v4076, %v4075
    %v4135 = vpack.c.b16 %v4078, %v4077
    %v4136 = vpack.c.b16 %v4080, %v4079
    %v4137 = vpack.c.b16 %v4082, %v4081
    %v4138 = vpack.c.b16 %v4084, %v4083
    %v4139 = vpack.c.b16 %v4086, %v4085
    %v4140 = vpack.c.b16 %v4088, %v4087
    %v4141 = vpack.c.b16 %v4090, %v4089
    %v4142 = vpack.c.b16 %v4092, %v4091
    %v4143 = vpack.c.b16 %v4094, %v4093
    %v4144 = vpack.c.b16 %v4096, %v4095
    %4193 = vmatprep.subr.bf16.mxu0 0
    %4194 = vmatpush1.bf16.msra.mxu0 %v4097
    %4195 = vmatprep.subr.bf16.mxu0 0
    %4196 = vmatpush1.bf16.msra.mxu0 %v4098
    %4197 = vmatprep.subr.bf16.mxu0 0
    %4198 = vmatpush1.bf16.msra.mxu0 %v4099
    %4199 = vmatprep.subr.bf16.mxu0 0
    %4200 = vmatpush1.bf16.msra.mxu0 %v4100
    %4201 = vmatprep.subr.bf16.mxu0 0
    %4202 = vmatpush1.bf16.msra.mxu0 %v4101
    %4203 = vmatprep.subr.bf16.mxu0 0
    %4204 = vmatpush1.bf16.msra.mxu0 %v4102
    %4205 = vmatprep.subr.bf16.mxu0 0
    %4206 = vmatpush1.bf16.msra.mxu0 %v4103
    %4207 = vmatprep.subr.bf16.mxu0 0
    %4208 = vmatpush1.bf16.msra.mxu0 %v4104
    %4209 = vmatprep.subr.bf16.mxu0 0
    %4210 = vmatpush1.bf16.msra.mxu0 %v4105
    %4211 = vmatprep.subr.bf16.mxu0 0
    %4212 = vmatpush1.bf16.msra.mxu0 %v4106
    %4213 = vmatprep.subr.bf16.mxu0 0
    %4214 = vmatpush1.bf16.msra.mxu0 %v4107
    %4215 = vmatprep.subr.bf16.mxu0 0
    %4216 = vmatpush1.bf16.msra.mxu0 %v4108
    %4217 = vmatprep.subr.bf16.mxu0 0
    %4218 = vmatpush1.bf16.msra.mxu0 %v4109
    %4219 = vmatprep.subr.bf16.mxu0 0
    %4220 = vmatpush1.bf16.msra.mxu0 %v4110
    %4221 = vmatprep.subr.bf16.mxu0 0
    %4222 = vmatpush1.bf16.msra.mxu0 %v4111
    %4223 = vmatprep.subr.bf16.mxu0 0
    %4224 = vmatpush1.bf16.msra.mxu0 %v4112
    %4225 = vmatprep.mubr.bf16.mxu0 %v3717
    %4226 = vmatmul.mubr.bf16.gmra.mrb[0].mxu0 %v3697
    %v4227 = vpop.f32.mrb[0].mxu0
    %v4228 = vadd.f32 %v3904, %v4227
    %v4229 = vpop.f32.mrb[0].mxu0
    %v4230 = vpop.f32.mrb[0].mxu0
    %v4231 = vadd.f32 %v3904, %v4230
    %v4232 = vpop.f32.mrb[0].mxu0
    %4233 = vmatprep.mubr.bf16.mxu0 %v3718
    %4234 = vmatmul.mubr.bf16.gmra.mrb[0].mxu0 %v3698
    %v4235 = vpop.f32.mrb[0].mxu0
    %v4236 = vadd.f32 %v3904, %v4235
    %v4237 = vpop.f32.mrb[0].mxu0
    %v4238 = vpop.f32.mrb[0].mxu0
    %v4239 = vadd.f32 %v3904, %v4238
    %v4240 = vpop.f32.mrb[0].mxu0
    %4241 = vmatprep.mubr.bf16.mxu0 %v3719
    %4242 = vmatmul.mubr.bf16.gmra.mrb[0].mxu0 %v3699
    %v4243 = vpop.f32.mrb[0].mxu0
    %v4244 = vadd.f32 %v3904, %v4243
    %v4245 = vpop.f32.mrb[0].mxu0
    %v4246 = vpop.f32.mrb[0].mxu0
    %v4247 = vadd.f32 %v3904, %v4246
    %v4248 = vpop.f32.mrb[0].mxu0
    %4249 = vmatprep.mubr.bf16.mxu0 %v3720
    %4250 = vmatmul.mubr.bf16.gmra.mrb[0].mxu0 %v3700
    %v4251 = vpop.f32.mrb[0].mxu0
    %v4252 = vadd.f32 %v3904, %v4251
    %v4253 = vpop.f32.mrb[0].mxu0
    %v4254 = vpop.f32.mrb[0].mxu0
    %v4255 = vadd.f32 %v3904, %v4254
    %v4256 = vpop.f32.mrb[0].mxu0
    %4257 = vdwg.mxu0
    %4258 = vmatprep.subr.bf16.mxu0 0
    %4259 = vmatpush1.bf16.msra.mxu0 %v4113
    %4260 = vmatprep.subr.bf16.mxu0 0
    %4261 = vmatpush1.bf16.msra.mxu0 %v4114
    %4262 = vmatprep.subr.bf16.mxu0 0
    %4263 = vmatpush1.bf16.msra.mxu0 %v4115
    %4264 = vmatprep.subr.bf16.mxu0 0
    %4265 = vmatpush1.bf16.msra.mxu0 %v4116
    %4266 = vmatprep.subr.bf16.mxu0 0
    %4267 = vmatpush1.bf16.msra.mxu0 %v4117
    %4268 = vmatprep.subr.bf16.mxu0 0
    %4269 = vmatpush1.bf16.msra.mxu0 %v4118
    %4270 = vmatprep.subr.bf16.mxu0 0
    %4271 = vmatpush1.bf16.msra.mxu0 %v4119
    %4272 = vmatprep.subr.bf16.mxu0 0
    %4273 = vmatpush1.bf16.msra.mxu0 %v4120
    %4274 = vmatprep.subr.bf16.mxu0 0
    %4275 = vmatpush1.bf16.msra.mxu0 %v4121
    %4276 = vmatprep.subr.bf16.mxu0 0
    %4277 = vmatpush1.bf16.msra.mxu0 %v4122
    %4278 = vmatprep.subr.bf16.mxu0 0
    %4279 = vmatpush1.bf16.msra.mxu0 %v4123
    %4280 = vmatprep.subr.bf16.mxu0 0
    %4281 = vmatpush1.bf16.msra.mxu0 %v4124
    %4282 = vmatprep.subr.bf16.mxu0 0
    %4283 = vmatpush1.bf16.msra.mxu0 %v4125
    %4284 = vmatprep.subr.bf16.mxu0 0
    %4285 = vmatpush1.bf16.msra.mxu0 %v4126
    %4286 = vmatprep.subr.bf16.mxu0 0
    %4287 = vmatpush1.bf16.msra.mxu0 %v4127
    %4288 = vmatprep.subr.bf16.mxu0 0
    %4289 = vmatpush1.bf16.msra.mxu0 %v4128
    %4290 = vmatprep.mubr.bf16.mxu0 %v3758
    %4291 = vmatmul.mubr.bf16.gmra.mrb[0].mxu0 %v3737
    %v4292 = vpop.f32.mrb[0].mxu0
    %v4293 = vadd.f32 %v4228, %v4292
    %v4294 = vpop.f32.mrb[0].mxu0
    %v4295 = vpop.f32.mrb[0].mxu0
    %v4296 = vadd.f32 %v4231, %v4295
    %v4297 = vpop.f32.mrb[0].mxu0
    %4298 = vmatprep.mubr.bf16.mxu0 %v3759
    %4299 = vmatmul.mubr.bf16.gmra.mrb[0].mxu0 %v3738
    %v4300 = vpop.f32.mrb[0].mxu0
    %v4301 = vadd.f32 %v4236, %v4300
    %v4302 = vpop.f32.mrb[0].mxu0
    %v4303 = vpop.f32.mrb[0].mxu0
    %v4304 = vadd.f32 %v4239, %v4303
    %v4305 = vpop.f32.mrb[0].mxu0
    %4306 = vmatprep.mubr.bf16.mxu0 %v3760
    %4307 = vmatmul.mubr.bf16.gmra.mrb[0].mxu0 %v3739
    %v4308 = vpop.f32.mrb[0].mxu0
    %v4309 = vadd.f32 %v4244, %v4308
    %v4310 = vpop.f32.mrb[0].mxu0
    %v4311 = vpop.f32.mrb[0].mxu0
    %v4312 = vadd.f32 %v4247, %v4311
    %v4313 = vpop.f32.mrb[0].mxu0
    %4314 = vmatprep.mubr.bf16.mxu0 %v3761
    %4315 = vmatmul.mubr.bf16.gmra.mrb[0].mxu0 %v3740
    %v4316 = vpop.f32.mrb[0].mxu0
    %v4317 = vadd.f32 %v4252, %v4316
    %v4318 = vpop.f32.mrb[0].mxu0
    %v4319 = vpop.f32.mrb[0].mxu0
    %v4320 = vadd.f32 %v4255, %v4319
    %v4321 = vpop.f32.mrb[0].mxu0
    %4322 = vdwg.mxu0
    %4323 = vmatprep.subr.bf16.mxu0 0
    %4324 = vmatpush1.bf16.msra.mxu0 %v4129
    %4325 = vmatprep.subr.bf16.mxu0 0
    %4326 = vmatpush1.bf16.msra.mxu0 %v4130
    %4327 = vmatprep.subr.bf16.mxu0 0
    %4328 = vmatpush1.bf16.msra.mxu0 %v4131
    %4329 = vmatprep.subr.bf16.mxu0 0
    %4330 = vmatpush1.bf16.msra.mxu0 %v4132
    %4331 = vmatprep.subr.bf16.mxu0 0
    %4332 = vmatpush1.bf16.msra.mxu0 %v4133
    %4333 = vmatprep.subr.bf16.mxu0 0
    %4334 = vmatpush1.bf16.msra.mxu0 %v4134
    %4335 = vmatprep.subr.bf16.mxu0 0
    %4336 = vmatpush1.bf16.msra.mxu0 %v4135
    %4337 = vmatprep.subr.bf16.mxu0 0
    %4338 = vmatpush1.bf16.msra.mxu0 %v4136
    %4339 = vmatprep.subr.bf16.mxu0 0
    %4340 = vmatpush1.bf16.msra.mxu0 %v4137
    %4341 = vmatprep.subr.bf16.mxu0 0
    %4342 = vmatpush1.bf16.msra.mxu0 %v4138
    %4343 = vmatprep.subr.bf16.mxu0 0
    %4344 = vmatpush1.bf16.msra.mxu0 %v4139
    %4345 = vmatprep.subr.bf16.mxu0 0
    %4346 = vmatpush1.bf16.msra.mxu0 %v4140
    %4347 = vmatprep.subr.bf16.mxu0 0
    %4348 = vmatpush1.bf16.msra.mxu0 %v4141
    %4349 = vmatprep.subr.bf16.mxu0 0
    %4350 = vmatpush1.bf16.msra.mxu0 %v4142
    %4351 = vmatprep.subr.bf16.mxu0 0
    %4352 = vmatpush1.bf16.msra.mxu0 %v4143
    %4353 = vmatprep.subr.bf16.mxu0 0
    %4354 = vmatpush1.bf16.msra.mxu0 %v4144
    %4355 = vmatprep.mubr.bf16.mxu0 %v3800
    %4356 = vmatmul.mubr.bf16.gmra.mrb[0].mxu0 %v3779
    %v4357 = vpop.f32.mrb[0].mxu0
    %v4358 = vadd.f32 %v4293, %v4357
    %v4359 = vpop.f32.mrb[0].mxu0
    %v4360 = vpop.f32.mrb[0].mxu0
    %v4361 = vadd.f32 %v4296, %v4360
    %v4362 = vpop.f32.mrb[0].mxu0
    %4363 = vmatprep.mubr.bf16.mxu0 %v3801
    %4364 = vmatmul.mubr.bf16.gmra.mrb[0].mxu0 %v3780
    %v4365 = vpop.f32.mrb[0].mxu0
    %v4366 = vadd.f32 %v4301, %v4365
    %v4367 = vpop.f32.mrb[0].mxu0
    %v4368 = vpop.f32.mrb[0].mxu0
    %v4369 = vadd.f32 %v4304, %v4368
    %v4370 = vpop.f32.mrb[0].mxu0
    %4371 = vmatprep.mubr.bf16.mxu0 %v3802
    %4372 = vmatmul.mubr.bf16.gmra.mrb[0].mxu0 %v3781
    %v4373 = vpop.f32.mrb[0].mxu0
    %v4374 = vadd.f32 %v4309, %v4373
    %v4375 = vpop.f32.mrb[0].mxu0
    %v4376 = vpop.f32.mrb[0].mxu0
    %v4377 = vadd.f32 %v4312, %v4376
    %v4378 = vpop.f32.mrb[0].mxu0
    %4379 = vmatprep.mubr.bf16.mxu0 %v3803
    %4380 = vmatmul.mubr.bf16.gmra.mrb[0].mxu0 %v3782
    %v4381 = vpop.f32.mrb[0].mxu0
    %v4382 = vadd.f32 %v4317, %v4381
    %v4383 = vpop.f32.mrb[0].mxu0
    %v4384 = vpop.f32.mrb[0].mxu0
    %v4385 = vadd.f32 %v4320, %v4384
    %v4386 = vpop.f32.mrb[0].mxu0
    %4387 = vdwg.mxu0
    %v4388 = vmax.f32 %v4358, 0.0
    %v4389 = vmax.f32 %v4361, 0.0
    %v4390 = vmax.f32 %v4366, 0.0
    %v4391 = vmax.f32 %v4369, 0.0
    %v4392 = vmax.f32 %v4374, 0.0
    %v4393 = vmax.f32 %v4377, 0.0
    %v4394 = vmax.f32 %v4382, 0.0
    %v4395 = vmax.f32 %v4385, 0.0
    %v4396 = vlaneseq
    %v4397 = vshrl.u32 %v4396, 7
    %v4398 = vsub.s32 1, %v4397
    %v4399 = vrot.slane %v3900, %v4398
    %v4400 = vmul.f32 %v4388, %v4399
    %v4401 = vmul.f32 %v4389, %v4399
    %v4402 = vmul.f32 %v4390, %v4399
    %v4403 = vmul.f32 %v4391, %v4399
    %v4404 = vmul.f32 %v4392, %v4399
    %v4405 = vmul.f32 %v4393, %v4399
    %v4406 = vmul.f32 %v4394, %v4399
    %v4407 = vmul.f32 %v4395, %v4399
    %v4408 = vlaneseq
    %v4409 = vshrl.u32 %v4408, 7
    %v4410 = vsub.s32 2, %v4409
    %v4411 = vrot.slane %v3900, %v4410
    %v4412 = vadd.f32 %v4400, %v4411
    %v4413 = vadd.f32 %v4401, %v4411
    %v4414 = vadd.f32 %v4402, %v4411
    %v4415 = vadd.f32 %v4403, %v4411
    %v4416 = vadd.f32 %v4404, %v4411
    %v4417 = vadd.f32 %v4405, %v4411
    %v4418 = vadd.f32 %v4406, %v4411
    %v4419 = vadd.f32 %v4407, %v4411
    %v4420 = vpack.c.bf16 %v4413, %v4412
    %v4421 = vpack.c.bf16 %v4415, %v4414
    %v4422 = vpack.c.bf16 %v4417, %v4416
    %v4423 = vpack.c.bf16 %v4419, %v4418
    %v4424 = vrot.slane %v4412, 1
    %v4425 = vrot.slane %v4413, 1
    %v4426 = vrot.slane %v4414, 1
    %v4427 = vrot.slane %v4415, 1
    %v4428 = vrot.slane %v4416, 1
    %v4429 = vrot.slane %v4417, 1
    %v4430 = vrot.slane %v4418, 1
    %v4431 = vrot.slane %v4419, 1
    %v4432 = vsel %vm243, %v4430, %v4431
    %v4433 = vsel %vm243, %v4429, %v4430
    %v4434 = vsel %vm243, %v4428, %v4429
    %v4435 = vsel %vm243, %v4427, %v4428
    %v4436 = vsel %vm243, %v4426, %v4427
    %v4437 = vsel %vm243, %v4425, %v4426
    %v4438 = vsel %vm243, %v4424, %v4425
    %v4439 = vsel %vm243, %v4431, %v4424
    %v4440 = vpack.c.bf16 %v4437, %v4438
    %v4441 = vpack.c.bf16 %v4435, %v4436
    %v4442 = vpack.c.bf16 %v4433, %v4434
    %v4443 = vpack.c.bf16 %v4439, %v4432
    %v4444 = vrot.slane %v4412, 2
    %v4445 = vrot.slane %v4413, 2
    %v4446 = vrot.slane %v4414, 2
    %v4447 = vrot.slane %v4415, 2
    %v4448 = vrot.slane %v4416, 2
    %v4449 = vrot.slane %v4417, 2
    %v4450 = vrot.slane %v4418, 2
    %v4451 = vrot.slane %v4419, 2
    %v4452 = vsel %vm444, %v4450, %v4451
    %v4453 = vsel %vm444, %v4449, %v4450
    %v4454 = vsel %vm444, %v4448, %v4449
    %v4455 = vsel %vm444, %v4447, %v4448
    %v4456 = vsel %vm444, %v4446, %v4447
    %v4457 = vsel %vm444, %v4445, %v4446
    %v4458 = vsel %vm444, %v4444, %v4445
    %v4459 = vsel %vm444, %v4451, %v4444
    %v4460 = vpack.c.bf16 %v4457, %v4458
    %v4461 = vpack.c.bf16 %v4455, %v4456
    %v4462 = vpack.c.bf16 %v4453, %v4454
    %v4463 = vpack.c.bf16 %v4459, %v4452
    %v4464 = vrot.slane %v4412, 3
    %v4465 = vrot.slane %v4413, 3
    %v4466 = vrot.slane %v4414, 3
    %v4467 = vrot.slane %v4415, 3
    %v4468 = vrot.slane %v4416, 3
    %v4469 = vrot.slane %v4417, 3
    %v4470 = vrot.slane %v4418, 3
    %v4471 = vrot.slane %v4419, 3
    %v4472 = vsel %vm3749, %v4470, %v4471
    %v4473 = vsel %vm3749, %v4469, %v4470
    %v4474 = vsel %vm3749, %v4468, %v4469
    %v4475 = vsel %vm3749, %v4467, %v4468
    %v4476 = vsel %vm3749, %v4466, %v4467
    %v4477 = vsel %vm3749, %v4465, %v4466
    %v4478 = vsel %vm3749, %v4464, %v4465
    %v4479 = vsel %vm3749, %v4471, %v4464
    %v4480 = vpack.c.bf16 %v4477, %v4478
    %v4481 = vpack.c.bf16 %v4475, %v4476
    %v4482 = vpack.c.bf16 %v4473, %v4474
    %v4483 = vpack.c.bf16 %v4479, %v4472
    %v4484 = vrot.slane %v4412, 4
    %v4485 = vrot.slane %v4413, 4
    %v4486 = vrot.slane %v4414, 4
    %v4487 = vrot.slane %v4415, 4
    %v4488 = vrot.slane %v4416, 4
    %v4489 = vrot.slane %v4417, 4
    %v4490 = vrot.slane %v4418, 4
    %v4491 = vrot.slane %v4419, 4
    %v4492 = vsel %vm3770, %v4490, %v4491
    %v4493 = vsel %vm3770, %v4489, %v4490
    %v4494 = vsel %vm3770, %v4488, %v4489
    %v4495 = vsel %vm3770, %v4487, %v4488
    %v4496 = vsel %vm3770, %v4486, %v4487
    %v4497 = vsel %vm3770, %v4485, %v4486
    %v4498 = vsel %vm3770, %v4484, %v4485
    %v4499 = vsel %vm3770, %v4491, %v4484
    %v4500 = vpack.c.bf16 %v4497, %v4498
    %v4501 = vpack.c.bf16 %v4495, %v4496
    %v4502 = vpack.c.bf16 %v4493, %v4494
    %v4503 = vpack.c.bf16 %v4499, %v4492
    %v4504 = vrot.slane %v4412, 5
    %v4505 = vrot.slane %v4413, 5
    %v4506 = vrot.slane %v4414, 5
    %v4507 = vrot.slane %v4415, 5
    %v4508 = vrot.slane %v4416, 5
    %v4509 = vrot.slane %v4417, 5
    %v4510 = vrot.slane %v4418, 5
    %v4511 = vrot.slane %v4419, 5
    %v4512 = vsel %vm3791, %v4510, %v4511
    %v4513 = vsel %vm3791, %v4509, %v4510
    %v4514 = vsel %vm3791, %v4508, %v4509
    %v4515 = vsel %vm3791, %v4507, %v4508
    %v4516 = vsel %vm3791, %v4506, %v4507
    %v4517 = vsel %vm3791, %v4505, %v4506
    %v4518 = vsel %vm3791, %v4504, %v4505
    %v4519 = vsel %vm3791, %v4511, %v4504
    %v4520 = vpack.c.bf16 %v4517, %v4518
    %v4521 = vpack.c.bf16 %v4515, %v4516
    %v4522 = vpack.c.bf16 %v4513, %v4514
    %v4523 = vpack.c.bf16 %v4519, %v4512
    %v4524 = vrot.slane %v4412, 6
    %v4525 = vrot.slane %v4413, 6
    %v4526 = vrot.slane %v4414, 6
    %v4527 = vrot.slane %v4415, 6
    %v4528 = vrot.slane %v4416, 6
    %v4529 = vrot.slane %v4417, 6
    %v4530 = vrot.slane %v4418, 6
    %v4531 = vrot.slane %v4419, 6
    %vm4532 = vcmp.lt.s32.totalorder %v242, 2
    %v4533 = vsel %vm4532, %v4530, %v4531
    %v4534 = vsel %vm4532, %v4529, %v4530
    %v4535 = vsel %vm4532, %v4528, %v4529
    %v4536 = vsel %vm4532, %v4527, %v4528
    %v4537 = vsel %vm4532, %v4526, %v4527
    %v4538 = vsel %vm4532, %v4525, %v4526
    %v4539 = vsel %vm4532, %v4524, %v4525
    %v4540 = vsel %vm4532, %v4531, %v4524
    %v4541 = vpack.c.bf16 %v4538, %v4539
    %v4542 = vpack.c.bf16 %v4536, %v4537
    %v4543 = vpack.c.bf16 %v4534, %v4535
    %v4544 = vpack.c.bf16 %v4540, %v4533
    %v4545 = vrot.slane %v4412, 7
    %v4546 = vrot.slane %v4413, 7
    %v4547 = vrot.slane %v4414, 7
    %v4548 = vrot.slane %v4415, 7
    %v4549 = vrot.slane %v4416, 7
    %v4550 = vrot.slane %v4417, 7
    %v4551 = vrot.slane %v4418, 7
    %v4552 = vrot.slane %v4419, 7
    %vm4553 = vcmp.lt.s32.totalorder %v242, 1
    %v4554 = vsel %vm4553, %v4551, %v4552
    %v4555 = vsel %vm4553, %v4550, %v4551
    %v4556 = vsel %vm4553, %v4549, %v4550
    %v4557 = vsel %vm4553, %v4548, %v4549
    %v4558 = vsel %vm4553, %v4547, %v4548
    %v4559 = vsel %vm4553, %v4546, %v4547
    %v4560 = vsel %vm4553, %v4545, %v4546
    %v4561 = vsel %vm4553, %v4552, %v4545
    %v4562 = vpack.c.bf16 %v4559, %v4560
    %v4563 = vpack.c.bf16 %v4557, %v4558
    %v4564 = vpack.c.bf16 %v4555, %v4556
    %v4565 = vpack.c.bf16 %v4561, %v4554
    %v4566 = vpack.c.bf16 %v4414, %v4413
    %v4567 = vpack.c.bf16 %v4416, %v4415
    %v4568 = vpack.c.bf16 %v4418, %v4417
    %v4569 = vpack.c.bf16 %v4412, %v4419
    %v4570 = vld [vmem:[%s5] sm:$0xf]
    %v4571 = vld [vmem:[%s5 + $0x4] sm:$0xf]
    %v4572 = vld [vmem:[%s5 + $0x8] sm:$0xf]
    %v4573 = vld [vmem:[%s5 + $0xc] sm:$0xf]
    %v4574 = vld [vmem:[%s5 + $0x10] sm:$0xf]
    %v4575 = vld [vmem:[%s5 + $0x14] sm:$0xf]
    %v4576 = vld [vmem:[%s5 + $0x18] sm:$0xf]
    %v4577 = vld [vmem:[%s5 + $0x1c] sm:$0xf]
    %v4578 = vld [vmem:[%s5 + $0x20] sm:$0xf]
    %v4579 = vld [vmem:[%s5 + $0x24] sm:$0xf]
    %v4580 = vld [vmem:[%s5 + $0x28] sm:$0xf]
    %v4581 = vld [vmem:[%s5 + $0x2c] sm:$0xf]
    %v4582 = vld [vmem:[%s5 + $0x30] sm:$0xf]
    %v4583 = vld [vmem:[%s5 + $0x34] sm:$0xf]
    %v4584 = vld [vmem:[%s5 + $0x38] sm:$0xf]
    %v4585 = vld [vmem:[%s5 + $0x3c] sm:$0xf]
    %v4586 = vld [vmem:[%s5 + $0x40] sm:$0xf]
    %v4587 = vld [vmem:[%s5 + $0x44] sm:$0xf]
    %v4588 = vld [vmem:[%s5 + $0x48] sm:$0xf]
    %v4589 = vld [vmem:[%s5 + $0x4c] sm:$0xf]
    %v4590 = vld [vmem:[%s5 + $0x50] sm:$0xf]
    %v4591 = vld [vmem:[%s5 + $0x54] sm:$0xf]
    %v4592 = vld [vmem:[%s5 + $0x58] sm:$0xf]
    %v4593 = vld [vmem:[%s5 + $0x5c] sm:$0xf]
    %v4594 = vld [vmem:[%s5 + $0x60] sm:$0xf]
    %v4595 = vld [vmem:[%s5 + $0x64] sm:$0xf]
    %v4596 = vld [vmem:[%s5 + $0x68] sm:$0xf]
    %v4597 = vld [vmem:[%s5 + $0x6c] sm:$0xf]
    %v4598 = vld [vmem:[%s5 + $0x70] sm:$0xf]
    %v4599 = vld [vmem:[%s5 + $0x74] sm:$0xf]
    %v4600 = vld [vmem:[%s5 + $0x78] sm:$0xf]
    %v4601 = vld [vmem:[%s5 + $0x7c] sm:$0xf]
    %v4602 = vld [vmem:[%s5 + $0x80] sm:$0xf]
    %v4603 = vld [vmem:[%s5 + $0x84] sm:$0xf]
    %v4604 = vld [vmem:[%s5 + $0x88] sm:$0xf]
    %v4605 = vld [vmem:[%s5 + $0x8c] sm:$0xf]
    %v4606 = vld [vmem:[%s5 + $0x90] sm:$0xf]
    %v4607 = vld [vmem:[%s5 + $0x94] sm:$0xf]
    %v4608 = vld [vmem:[%s5 + $0x98] sm:$0xf]
    %v4609 = vld [vmem:[%s5 + $0x9c] sm:$0xf]
    %v4610 = vld [vmem:[%s5 + $0xa0] sm:$0xf]
    %v4611 = vld [vmem:[%s5 + $0xa4] sm:$0xf]
    %v4612 = vld [vmem:[%s5 + $0xa8] sm:$0xf]
    %v4613 = vld [vmem:[%s5 + $0xac] sm:$0xf]
    %v4614 = vld [vmem:[%s5 + $0xb0] sm:$0xf]
    %v4615 = vld [vmem:[%s5 + $0xb4] sm:$0xf]
    %v4616 = vld [vmem:[%s5 + $0xb8] sm:$0xf]
    %v4617 = vld [vmem:[%s5 + $0xbc] sm:$0xf]
    %v4618 = vld [vmem:[%s5 + $0xc0] sm:$0xf]
    %v4619 = vld [vmem:[%s5 + $0xc4] sm:$0xf]
    %v4620 = vld [vmem:[%s5 + $0xc8] sm:$0xf]
    %v4621 = vld [vmem:[%s5 + $0xcc] sm:$0xf]
    %v4622 = vld [vmem:[%s5 + $0xd0] sm:$0xf]
    %v4623 = vld [vmem:[%s5 + $0xd4] sm:$0xf]
    %v4624 = vld [vmem:[%s5 + $0xd8] sm:$0xf]
    %v4625 = vld [vmem:[%s5 + $0xdc] sm:$0xf]
    %v4626 = vld [vmem:[%s5 + $0xe0] sm:$0xf]
    %v4627 = vld [vmem:[%s5 + $0xe4] sm:$0xf]
    %v4628 = vld [vmem:[%s5 + $0xe8] sm:$0xf]
    %v4629 = vld [vmem:[%s5 + $0xec] sm:$0xf]
    %v4630 = vld [vmem:[%s5 + $0xf0] sm:$0xf]
    %v4631 = vld [vmem:[%s5 + $0xf4] sm:$0xf]
    %v4632 = vld [vmem:[%s5 + $0xf8] sm:$0xf]
    %v4633 = vld [vmem:[%s5 + $0xfc] sm:$0xf]
    %v4634 = vld [vmem:[%s5 + $0x100] sm:$0xf]
    %v4635 = vld [vmem:[%s5 + $0x104] sm:$0xf]
    %v4636 = vld [vmem:[%s5 + $0x108] sm:$0xf]
    %v4637 = vld [vmem:[%s5 + $0x10c] sm:$0xf]
    %v4638 = vld [vmem:[%s5 + $0x110] sm:$0xf]
    %v4639 = vld [vmem:[%s5 + $0x114] sm:$0xf]
    %v4640 = vld [vmem:[%s5 + $0x118] sm:$0xf]
    %v4641 = vld [vmem:[%s5 + $0x11c] sm:$0xf]
    %v4642 = vld [vmem:[%s5 + $0x120] sm:$0xf]
    %v4643 = vld [vmem:[%s5 + $0x124] sm:$0xf]
    %v4644 = vld [vmem:[%s5 + $0x128] sm:$0xf]
    %v4645 = vld [vmem:[%s5 + $0x12c] sm:$0xf]
    %v4646 = vld [vmem:[%s5 + $0x130] sm:$0xf]
    %v4647 = vld [vmem:[%s5 + $0x134] sm:$0xf]
    %v4648 = vld [vmem:[%s5 + $0x138] sm:$0xf]
    %v4649 = vld [vmem:[%s5 + $0x13c] sm:$0xf]
    %v4650 = vld [vmem:[%s5 + $0x140] sm:$0xf]
    %v4651 = vld [vmem:[%s5 + $0x144] sm:$0xf]
    %v4652 = vld [vmem:[%s5 + $0x148] sm:$0xf]
    %v4653 = vld [vmem:[%s5 + $0x14c] sm:$0xf]
    %v4654 = vld [vmem:[%s5 + $0x150] sm:$0xf]
    %v4655 = vld [vmem:[%s5 + $0x154] sm:$0xf]
    %v4656 = vld [vmem:[%s5 + $0x158] sm:$0xf]
    %v4657 = vld [vmem:[%s5 + $0x15c] sm:$0xf]
    %v4658 = vld [vmem:[%s5 + $0x160] sm:$0xf]
    %v4659 = vld [vmem:[%s5 + $0x164] sm:$0xf]
    %v4660 = vld [vmem:[%s5 + $0x168] sm:$0xf]
    %v4661 = vld [vmem:[%s5 + $0x16c] sm:$0xf]
    %v4662 = vld [vmem:[%s5 + $0x170] sm:$0xf]
    %v4663 = vld [vmem:[%s5 + $0x174] sm:$0xf]
    %v4664 = vld [vmem:[%s5 + $0x178] sm:$0xf]
    %v4665 = vld [vmem:[%s5 + $0x17c] sm:$0xf]
    %v4666 = vld [vmem:[%s5 + $0x180] sm:$0xf]
    %v4667 = vld [vmem:[%s5 + $0x184] sm:$0xf]
    %v4668 = vld [vmem:[%s5 + $0x188] sm:$0xf]
    %v4669 = vld [vmem:[%s5 + $0x18c] sm:$0xf]
    %v4670 = vld [vmem:[%s5 + $0x190] sm:$0xf]
    %v4671 = vld [vmem:[%s5 + $0x194] sm:$0xf]
    %v4672 = vld [vmem:[%s5 + $0x198] sm:$0xf]
    %v4673 = vld [vmem:[%s5 + $0x19c] sm:$0xf]
    %v4674 = vld [vmem:[%s5 + $0x1a0] sm:$0xf]
    %v4675 = vld [vmem:[%s5 + $0x1a4] sm:$0xf]
    %v4676 = vld [vmem:[%s5 + $0x1a8] sm:$0xf]
    %v4677 = vld [vmem:[%s5 + $0x1ac] sm:$0xf]
    %v4678 = vld [vmem:[%s5 + $0x1b0] sm:$0xf]
    %v4679 = vld [vmem:[%s5 + $0x1b4] sm:$0xf]
    %v4680 = vld [vmem:[%s5 + $0x1b8] sm:$0xf]
    %v4681 = vld [vmem:[%s5 + $0x1bc] sm:$0xf]
    %v4682 = vld [vmem:[%s5 + $0x1c0] sm:$0xf]
    %v4683 = vld [vmem:[%s5 + $0x1c4] sm:$0xf]
    %v4684 = vld [vmem:[%s5 + $0x1c8] sm:$0xf]
    %v4685 = vld [vmem:[%s5 + $0x1cc] sm:$0xf]
    %v4686 = vld [vmem:[%s5 + $0x1d0] sm:$0xf]
    %v4687 = vld [vmem:[%s5 + $0x1d4] sm:$0xf]
    %v4688 = vld [vmem:[%s5 + $0x1d8] sm:$0xf]
    %v4689 = vld [vmem:[%s5 + $0x1dc] sm:$0xf]
    %v4690 = vld [vmem:[%s5 + $0x1e0] sm:$0xf]
    %v4691 = vld [vmem:[%s5 + $0x1e4] sm:$0xf]
    %v4692 = vld [vmem:[%s5 + $0x1e8] sm:$0xf]
    %v4693 = vld [vmem:[%s5 + $0x1ec] sm:$0xf]
    %v4694 = vld [vmem:[%s5 + $0x1f0] sm:$0xf]
    %v4695 = vld [vmem:[%s5 + $0x1f4] sm:$0xf]
    %v4696 = vld [vmem:[%s5 + $0x1f8] sm:$0xf]
    %v4697 = vld [vmem:[%s5 + $0x1fc] sm:$0xf]
    %v4698 = vld [vmem:[%s5 + $0x200] sm:$0xf]
    %v4699 = vld [vmem:[%s5 + $0x204] sm:$0xf]
    %v4700 = vld [vmem:[%s5 + $0x208] sm:$0xf]
    %v4701 = vld [vmem:[%s5 + $0x20c] sm:$0xf]
    %v4702 = vld [vmem:[%s5 + $0x210] sm:$0xf]
    %v4703 = vld [vmem:[%s5 + $0x214] sm:$0xf]
    %v4704 = vld [vmem:[%s5 + $0x218] sm:$0xf]
    %v4705 = vld [vmem:[%s5 + $0x21c] sm:$0xf]
    %v4706 = vld [vmem:[%s5 + $0x220] sm:$0xf]
    %v4707 = vld [vmem:[%s5 + $0x224] sm:$0xf]
    %v4708 = vld [vmem:[%s5 + $0x228] sm:$0xf]
    %v4709 = vld [vmem:[%s5 + $0x22c] sm:$0xf]
    %v4710 = vld [vmem:[%s5 + $0x230] sm:$0xf]
    %v4711 = vld [vmem:[%s5 + $0x234] sm:$0xf]
    %v4712 = vld [vmem:[%s5 + $0x238] sm:$0xf]
    %v4713 = vld [vmem:[%s5 + $0x23c] sm:$0xf]
    %v4714 = vld [vmem:[%s6] sm:$0x7]
    %v4715 = vlaneseq
    %v4716 = vshrl.u32 %v4715, 7
    %v4717 = vsub.s32 0, %v4716
    %v4718 = vrot.slane %v4714, %v4717
    %v4863 = vunpack.c.l.b16 %v4570
    %v4864 = vunpack.c.l.b16 %v4571
    %v4865 = vunpack.c.l.b16 %v4572
    %v4866 = vunpack.c.l.b16 %v4573
    %v4867 = vunpack.c.l.b16 %v4574
    %v4868 = vunpack.c.l.b16 %v4575
    %v4869 = vunpack.c.l.b16 %v4576
    %v4870 = vunpack.c.l.b16 %v4577
    %v4871 = vunpack.c.l.b16 %v4578
    %v4872 = vunpack.c.l.b16 %v4579
    %v4873 = vunpack.c.l.b16 %v4580
    %v4874 = vunpack.c.l.b16 %v4581
    %v4875 = vunpack.c.l.b16 %v4582
    %v4876 = vunpack.c.l.b16 %v4583
    %v4877 = vunpack.c.l.b16 %v4584
    %v4878 = vunpack.c.l.b16 %v4585
    %v4879 = vunpack.c.l.b16 %v4586
    %v4880 = vunpack.c.l.b16 %v4587
    %v4881 = vunpack.c.l.b16 %v4588
    %v4882 = vunpack.c.l.b16 %v4589
    %v4883 = vunpack.c.l.b16 %v4590
    %v4884 = vunpack.c.l.b16 %v4591
    %v4885 = vunpack.c.l.b16 %v4592
    %v4886 = vunpack.c.l.b16 %v4593
    %v4887 = vunpack.c.l.b16 %v4594
    %v4888 = vunpack.c.l.b16 %v4595
    %v4889 = vunpack.c.l.b16 %v4596
    %v4890 = vunpack.c.l.b16 %v4597
    %v4891 = vunpack.c.l.b16 %v4598
    %v4892 = vunpack.c.l.b16 %v4599
    %v4893 = vunpack.c.l.b16 %v4600
    %v4894 = vunpack.c.l.b16 %v4601
    %v4895 = vunpack.c.l.b16 %v4602
    %v4896 = vunpack.c.l.b16 %v4603
    %v4897 = vunpack.c.l.b16 %v4604
    %v4898 = vunpack.c.l.b16 %v4605
    %v4899 = vunpack.c.l.b16 %v4606
    %v4900 = vunpack.c.l.b16 %v4607
    %v4901 = vunpack.c.l.b16 %v4608
    %v4902 = vunpack.c.l.b16 %v4609
    %v4903 = vunpack.c.l.b16 %v4610
    %v4904 = vunpack.c.l.b16 %v4611
    %v4905 = vunpack.c.l.b16 %v4612
    %v4906 = vunpack.c.l.b16 %v4613
    %v4907 = vunpack.c.l.b16 %v4614
    %v4908 = vunpack.c.l.b16 %v4615
    %v4909 = vunpack.c.l.b16 %v4616
    %v4910 = vunpack.c.l.b16 %v4617
    %v4911 = vunpack.c.l.b16 %v4618
    %v4912 = vunpack.c.l.b16 %v4619
    %v4913 = vunpack.c.l.b16 %v4620
    %v4914 = vunpack.c.l.b16 %v4621
    %v4915 = vunpack.c.l.b16 %v4622
    %v4916 = vunpack.c.l.b16 %v4623
    %v4917 = vunpack.c.l.b16 %v4624
    %v4918 = vunpack.c.l.b16 %v4625
    %v4919 = vunpack.c.l.b16 %v4626
    %v4920 = vunpack.c.l.b16 %v4627
    %v4921 = vunpack.c.l.b16 %v4628
    %v4922 = vunpack.c.l.b16 %v4629
    %v4923 = vunpack.c.l.b16 %v4630
    %v4924 = vunpack.c.l.b16 %v4631
    %v4925 = vunpack.c.l.b16 %v4632
    %v4926 = vunpack.c.l.b16 %v4633
    %v4927 = vunpack.c.l.b16 %v4634
    %v4928 = vunpack.c.l.b16 %v4635
    %v4929 = vunpack.c.l.b16 %v4636
    %v4930 = vunpack.c.l.b16 %v4637
    %v4931 = vunpack.c.l.b16 %v4638
    %v4932 = vunpack.c.l.b16 %v4639
    %v4933 = vunpack.c.l.b16 %v4640
    %v4934 = vunpack.c.l.b16 %v4641
    %v4935 = vunpack.c.l.b16 %v4642
    %v4936 = vunpack.c.l.b16 %v4643
    %v4937 = vunpack.c.l.b16 %v4644
    %v4938 = vunpack.c.l.b16 %v4645
    %v4939 = vunpack.c.l.b16 %v4646
    %v4940 = vunpack.c.l.b16 %v4647
    %v4941 = vunpack.c.l.b16 %v4648
    %v4942 = vunpack.c.l.b16 %v4649
    %v4943 = vunpack.c.l.b16 %v4650
    %v4944 = vunpack.c.l.b16 %v4651
    %v4945 = vunpack.c.l.b16 %v4652
    %v4946 = vunpack.c.l.b16 %v4653
    %v4947 = vunpack.c.l.b16 %v4654
    %v4948 = vunpack.c.l.b16 %v4655
    %v4949 = vunpack.c.l.b16 %v4656
    %v4950 = vunpack.c.l.b16 %v4657
    %v4951 = vunpack.c.l.b16 %v4658
    %v4952 = vunpack.c.l.b16 %v4659
    %v4953 = vunpack.c.l.b16 %v4660
    %v4954 = vunpack.c.l.b16 %v4661
    %v4955 = vunpack.c.l.b16 %v4662
    %v4956 = vunpack.c.l.b16 %v4663
    %v4957 = vunpack.c.l.b16 %v4664
    %v4958 = vunpack.c.l.b16 %v4665
    %v4959 = vunpack.c.l.b16 %v4666
    %v4960 = vunpack.c.l.b16 %v4667
    %v4961 = vunpack.c.l.b16 %v4668
    %v4962 = vunpack.c.l.b16 %v4669
    %v4963 = vunpack.c.l.b16 %v4670
    %v4964 = vunpack.c.l.b16 %v4671
    %v4965 = vunpack.c.l.b16 %v4672
    %v4966 = vunpack.c.l.b16 %v4673
    %v4967 = vunpack.c.l.b16 %v4674
    %v4968 = vunpack.c.l.b16 %v4675
    %v4969 = vunpack.c.l.b16 %v4676
    %v4970 = vunpack.c.l.b16 %v4677
    %v4971 = vunpack.c.l.b16 %v4678
    %v4972 = vunpack.c.l.b16 %v4679
    %v4973 = vunpack.c.l.b16 %v4680
    %v4974 = vunpack.c.l.b16 %v4681
    %v4975 = vunpack.c.l.b16 %v4682
    %v4976 = vunpack.c.l.b16 %v4683
    %v4977 = vunpack.c.l.b16 %v4684
    %v4978 = vunpack.c.l.b16 %v4685
    %v4979 = vunpack.c.l.b16 %v4686
    %v4980 = vunpack.c.l.b16 %v4687
    %v4981 = vunpack.c.l.b16 %v4688
    %v4982 = vunpack.c.l.b16 %v4689
    %v4983 = vunpack.c.l.b16 %v4690
    %v4984 = vunpack.c.l.b16 %v4691
    %v4985 = vunpack.c.l.b16 %v4692
    %v4986 = vunpack.c.l.b16 %v4693
    %v4987 = vunpack.c.l.b16 %v4694
    %v4988 = vunpack.c.l.b16 %v4695
    %v4989 = vunpack.c.l.b16 %v4696
    %v4990 = vunpack.c.l.b16 %v4697
    %v4991 = vunpack.c.l.b16 %v4698
    %v4992 = vunpack.c.l.b16 %v4699
    %v4993 = vunpack.c.l.b16 %v4700
    %v4994 = vunpack.c.l.b16 %v4701
    %v4995 = vunpack.c.l.b16 %v4702
    %v4996 = vunpack.c.l.b16 %v4703
    %v4997 = vunpack.c.l.b16 %v4704
    %v4998 = vunpack.c.l.b16 %v4705
    %v4999 = vunpack.c.l.b16 %v4706
    %v5000 = vunpack.c.l.b16 %v4707
    %v5001 = vunpack.c.l.b16 %v4708
    %v5002 = vunpack.c.l.b16 %v4709
    %v5003 = vunpack.c.l.b16 %v4710
    %v5004 = vunpack.c.l.b16 %v4711
    %v5005 = vunpack.c.l.b16 %v4712
    %v5006 = vunpack.c.l.b16 %v4713
    %v5007 = vpack.c.b16 %v4864, %v4863
    %v5008 = vpack.c.b16 %v4866, %v4865
    %v5009 = vpack.c.b16 %v4868, %v4867
    %v5010 = vpack.c.b16 %v4870, %v4869
    %v5011 = vpack.c.b16 %v4872, %v4871
    %v5012 = vpack.c.b16 %v4874, %v4873
    %v5013 = vpack.c.b16 %v4876, %v4875
    %v5014 = vpack.c.b16 %v4878, %v4877
    %v5015 = vpack.c.b16 %v4880, %v4879
    %v5016 = vpack.c.b16 %v4882, %v4881
    %v5017 = vpack.c.b16 %v4884, %v4883
    %v5018 = vpack.c.b16 %v4886, %v4885
    %v5019 = vpack.c.b16 %v4888, %v4887
    %v5020 = vpack.c.b16 %v4890, %v4889
    %v5021 = vpack.c.b16 %v4892, %v4891
    %v5022 = vpack.c.b16 %v4894, %v4893
    %v5023 = vpack.c.b16 %v4896, %v4895
    %v5024 = vpack.c.b16 %v4898, %v4897
    %v5025 = vpack.c.b16 %v4900, %v4899
    %v5026 = vpack.c.b16 %v4902, %v4901
    %v5027 = vpack.c.b16 %v4904, %v4903
    %v5028 = vpack.c.b16 %v4906, %v4905
    %v5029 = vpack.c.b16 %v4908, %v4907
    %v5030 = vpack.c.b16 %v4910, %v4909
    %v5031 = vpack.c.b16 %v4912, %v4911
    %v5032 = vpack.c.b16 %v4914, %v4913
    %v5033 = vpack.c.b16 %v4916, %v4915
    %v5034 = vpack.c.b16 %v4918, %v4917
    %v5035 = vpack.c.b16 %v4920, %v4919
    %v5036 = vpack.c.b16 %v4922, %v4921
    %v5037 = vpack.c.b16 %v4924, %v4923
    %v5038 = vpack.c.b16 %v4926, %v4925
    %v5039 = vpack.c.b16 %v4928, %v4927
    %v5040 = vpack.c.b16 %v4930, %v4929
    %v5041 = vpack.c.b16 %v4932, %v4931
    %v5042 = vpack.c.b16 %v4934, %v4933
    %v5043 = vpack.c.b16 %v4936, %v4935
    %v5044 = vpack.c.b16 %v4938, %v4937
    %v5045 = vpack.c.b16 %v4940, %v4939
    %v5046 = vpack.c.b16 %v4942, %v4941
    %v5047 = vpack.c.b16 %v4944, %v4943
    %v5048 = vpack.c.b16 %v4946, %v4945
    %v5049 = vpack.c.b16 %v4948, %v4947
    %v5050 = vpack.c.b16 %v4950, %v4949
    %v5051 = vpack.c.b16 %v4952, %v4951
    %v5052 = vpack.c.b16 %v4954, %v4953
    %v5053 = vpack.c.b16 %v4956, %v4955
    %v5054 = vpack.c.b16 %v4958, %v4957
    %v5055 = vpack.c.b16 %v4960, %v4959
    %v5056 = vpack.c.b16 %v4962, %v4961
    %v5057 = vpack.c.b16 %v4964, %v4963
    %v5058 = vpack.c.b16 %v4966, %v4965
    %v5059 = vpack.c.b16 %v4968, %v4967
    %v5060 = vpack.c.b16 %v4970, %v4969
    %v5061 = vpack.c.b16 %v4972, %v4971
    %v5062 = vpack.c.b16 %v4974, %v4973
    %v5063 = vpack.c.b16 %v4976, %v4975
    %v5064 = vpack.c.b16 %v4978, %v4977
    %v5065 = vpack.c.b16 %v4980, %v4979
    %v5066 = vpack.c.b16 %v4982, %v4981
    %v5067 = vpack.c.b16 %v4984, %v4983
    %v5068 = vpack.c.b16 %v4986, %v4985
    %v5069 = vpack.c.b16 %v4988, %v4987
    %v5070 = vpack.c.b16 %v4990, %v4989
    %v5071 = vpack.c.b16 %v4992, %v4991
    %v5072 = vpack.c.b16 %v4994, %v4993
    %v5073 = vpack.c.b16 %v4996, %v4995
    %v5074 = vpack.c.b16 %v4998, %v4997
    %v5075 = vpack.c.b16 %v5000, %v4999
    %v5076 = vpack.c.b16 %v5002, %v5001
    %v5077 = vpack.c.b16 %v5004, %v5003
    %v5078 = vpack.c.b16 %v5006, %v5005
    %5151 = vmatprep.subr.bf16.mxu0 0
    %5152 = vmatpush1.bf16.msra.mxu0 %v5007
    %5153 = vmatprep.subr.bf16.mxu0 0
    %5154 = vmatpush1.bf16.msra.mxu0 %v5008
    %5155 = vmatprep.subr.bf16.mxu0 0
    %5156 = vmatpush1.bf16.msra.mxu0 %v5009
    %5157 = vmatprep.subr.bf16.mxu0 0
    %5158 = vmatpush1.bf16.msra.mxu0 %v5010
    %5159 = vmatprep.subr.bf16.mxu0 0
    %5160 = vmatpush1.bf16.msra.mxu0 %v5011
    %5161 = vmatprep.subr.bf16.mxu0 0
    %5162 = vmatpush1.bf16.msra.mxu0 %v5012
    %5163 = vmatprep.subr.bf16.mxu0 0
    %5164 = vmatpush1.bf16.msra.mxu0 %v5013
    %5165 = vmatprep.subr.bf16.mxu0 0
    %5166 = vmatpush1.bf16.msra.mxu0 %v5014
    %5167 = vmatprep.subr.bf16.mxu0 0
    %5168 = vmatpush1.bf16.msra.mxu0 %v5015
    %5169 = vmatprep.subr.bf16.mxu0 0
    %5170 = vmatpush1.bf16.msra.mxu0 %v5016
    %5171 = vmatprep.subr.bf16.mxu0 0
    %5172 = vmatpush1.bf16.msra.mxu0 %v5017
    %5173 = vmatprep.subr.bf16.mxu0 0
    %5174 = vmatpush1.bf16.msra.mxu0 %v5018
    %5175 = vmatprep.subr.bf16.mxu0 0
    %5176 = vmatpush1.bf16.msra.mxu0 %v5019
    %5177 = vmatprep.subr.bf16.mxu0 0
    %5178 = vmatpush1.bf16.msra.mxu0 %v5020
    %5179 = vmatprep.subr.bf16.mxu0 0
    %5180 = vmatpush1.bf16.msra.mxu0 %v5021
    %5181 = vmatprep.subr.bf16.mxu0 0
    %5182 = vmatpush1.bf16.msra.mxu0 %v5022
    %5183 = vmatprep.mubr.bf16.mxu0 %v4440
    %5184 = vmatmul.mubr.bf16.gmra.mrb[0].mxu0 %v4420
    %v5185 = vpop.f32.mrb[0].mxu0
    %v5186 = vadd.f32 %v4718, %v5185
    %v5187 = vpop.f32.mrb[0].mxu0
    %v5188 = vpop.f32.mrb[0].mxu0
    %v5189 = vadd.f32 %v4718, %v5188
    %v5190 = vpop.f32.mrb[0].mxu0
    %5191 = vmatprep.mubr.bf16.mxu0 %v4441
    %5192 = vmatmul.mubr.bf16.gmra.mrb[0].mxu0 %v4421
    %v5193 = vpop.f32.mrb[0].mxu0
    %v5194 = vadd.f32 %v4718, %v5193
    %v5195 = vpop.f32.mrb[0].mxu0
    %v5196 = vpop.f32.mrb[0].mxu0
    %v5197 = vadd.f32 %v4718, %v5196
    %v5198 = vpop.f32.mrb[0].mxu0
    %5199 = vmatprep.mubr.bf16.mxu0 %v4442
    %5200 = vmatmul.mubr.bf16.gmra.mrb[0].mxu0 %v4422
    %v5201 = vpop.f32.mrb[0].mxu0
    %v5202 = vadd.f32 %v4718, %v5201
    %v5203 = vpop.f32.mrb[0].mxu0
    %v5204 = vpop.f32.mrb[0].mxu0
    %v5205 = vadd.f32 %v4718, %v5204
    %v5206 = vpop.f32.mrb[0].mxu0
    %5207 = vmatprep.mubr.bf16.mxu0 %v4443
    %5208 = vmatmul.mubr.bf16.gmra.mrb[0].mxu0 %v4423
    %v5209 = vpop.f32.mrb[0].mxu0
    %v5210 = vadd.f32 %v4718, %v5209
    %v5211 = vpop.f32.mrb[0].mxu0
    %v5212 = vpop.f32.mrb[0].mxu0
    %v5213 = vadd.f32 %v4718, %v5212
    %v5214 = vpop.f32.mrb[0].mxu0
    %5215 = vdwg.mxu0
    %5216 = vmatprep.subr.bf16.mxu0 0
    %5217 = vmatpush1.bf16.msra.mxu0 %v5023
    %5218 = vmatprep.subr.bf16.mxu0 0
    %5219 = vmatpush1.bf16.msra.mxu0 %v5024
    %5220 = vmatprep.subr.bf16.mxu0 0
    %5221 = vmatpush1.bf16.msra.mxu0 %v5025
    %5222 = vmatprep.subr.bf16.mxu0 0
    %5223 = vmatpush1.bf16.msra.mxu0 %v5026
    %5224 = vmatprep.subr.bf16.mxu0 0
    %5225 = vmatpush1.bf16.msra.mxu0 %v5027
    %5226 = vmatprep.subr.bf16.mxu0 0
    %5227 = vmatpush1.bf16.msra.mxu0 %v5028
    %5228 = vmatprep.subr.bf16.mxu0 0
    %5229 = vmatpush1.bf16.msra.mxu0 %v5029
    %5230 = vmatprep.subr.bf16.mxu0 0
    %5231 = vmatpush1.bf16.msra.mxu0 %v5030
    %5232 = vmatprep.subr.bf16.mxu0 0
    %5233 = vmatpush1.bf16.msra.mxu0 %v5031
    %5234 = vmatprep.subr.bf16.mxu0 0
    %5235 = vmatpush1.bf16.msra.mxu0 %v5032
    %5236 = vmatprep.subr.bf16.mxu0 0
    %5237 = vmatpush1.bf16.msra.mxu0 %v5033
    %5238 = vmatprep.subr.bf16.mxu0 0
    %5239 = vmatpush1.bf16.msra.mxu0 %v5034
    %5240 = vmatprep.subr.bf16.mxu0 0
    %5241 = vmatpush1.bf16.msra.mxu0 %v5035
    %5242 = vmatprep.subr.bf16.mxu0 0
    %5243 = vmatpush1.bf16.msra.mxu0 %v5036
    %5244 = vmatprep.subr.bf16.mxu0 0
    %5245 = vmatpush1.bf16.msra.mxu0 %v5037
    %5246 = vmatprep.subr.bf16.mxu0 0
    %5247 = vmatpush1.bf16.msra.mxu0 %v5038
    %5248 = vmatprep.mubr.bf16.mxu0 %v4480
    %5249 = vmatmul.mubr.bf16.gmra.mrb[0].mxu0 %v4460
    %v5250 = vpop.f32.mrb[0].mxu0
    %v5251 = vadd.f32 %v5186, %v5250
    %v5252 = vpop.f32.mrb[0].mxu0
    %v5253 = vpop.f32.mrb[0].mxu0
    %v5254 = vadd.f32 %v5189, %v5253
    %v5255 = vpop.f32.mrb[0].mxu0
    %5256 = vmatprep.mubr.bf16.mxu0 %v4481
    %5257 = vmatmul.mubr.bf16.gmra.mrb[0].mxu0 %v4461
    %v5258 = vpop.f32.mrb[0].mxu0
    %v5259 = vadd.f32 %v5194, %v5258
    %v5260 = vpop.f32.mrb[0].mxu0
    %v5261 = vpop.f32.mrb[0].mxu0
    %v5262 = vadd.f32 %v5197, %v5261
    %v5263 = vpop.f32.mrb[0].mxu0
    %5264 = vmatprep.mubr.bf16.mxu0 %v4482
    %5265 = vmatmul.mubr.bf16.gmra.mrb[0].mxu0 %v4462
    %v5266 = vpop.f32.mrb[0].mxu0
    %v5267 = vadd.f32 %v5202, %v5266
    %v5268 = vpop.f32.mrb[0].mxu0
    %v5269 = vpop.f32.mrb[0].mxu0
    %v5270 = vadd.f32 %v5205, %v5269
    %v5271 = vpop.f32.mrb[0].mxu0
    %5272 = vmatprep.mubr.bf16.mxu0 %v4483
    %5273 = vmatmul.mubr.bf16.gmra.mrb[0].mxu0 %v4463
    %v5274 = vpop.f32.mrb[0].mxu0
    %v5275 = vadd.f32 %v5210, %v5274
    %v5276 = vpop.f32.mrb[0].mxu0
    %v5277 = vpop.f32.mrb[0].mxu0
    %v5278 = vadd.f32 %v5213, %v5277
    %v5279 = vpop.f32.mrb[0].mxu0
    %5280 = vdwg.mxu0
    %5281 = vmatprep.subr.bf16.mxu0 0
    %5282 = vmatpush1.bf16.msra.mxu0 %v5039
    %5283 = vmatprep.subr.bf16.mxu0 0
    %5284 = vmatpush1.bf16.msra.mxu0 %v5040
    %5285 = vmatprep.subr.bf16.mxu0 0
    %5286 = vmatpush1.bf16.msra.mxu0 %v5041
    %5287 = vmatprep.subr.bf16.mxu0 0
    %5288 = vmatpush1.bf16.msra.mxu0 %v5042
    %5289 = vmatprep.subr.bf16.mxu0 0
    %5290 = vmatpush1.bf16.msra.mxu0 %v5043
    %5291 = vmatprep.subr.bf16.mxu0 0
    %5292 = vmatpush1.bf16.msra.mxu0 %v5044
    %5293 = vmatprep.subr.bf16.mxu0 0
    %5294 = vmatpush1.bf16.msra.mxu0 %v5045
    %5295 = vmatprep.subr.bf16.mxu0 0
    %5296 = vmatpush1.bf16.msra.mxu0 %v5046
    %5297 = vmatprep.subr.bf16.mxu0 0
    %5298 = vmatpush1.bf16.msra.mxu0 %v5047
    %5299 = vmatprep.subr.bf16.mxu0 0
    %5300 = vmatpush1.bf16.msra.mxu0 %v5048
    %5301 = vmatprep.subr.bf16.mxu0 0
    %5302 = vmatpush1.bf16.msra.mxu0 %v5049
    %5303 = vmatprep.subr.bf16.mxu0 0
    %5304 = vmatpush1.bf16.msra.mxu0 %v5050
    %5305 = vmatprep.subr.bf16.mxu0 0
    %5306 = vmatpush1.bf16.msra.mxu0 %v5051
    %5307 = vmatprep.subr.bf16.mxu0 0
    %5308 = vmatpush1.bf16.msra.mxu0 %v5052
    %5309 = vmatprep.subr.bf16.mxu0 0
    %5310 = vmatpush1.bf16.msra.mxu0 %v5053
    %5311 = vmatprep.subr.bf16.mxu0 0
    %5312 = vmatpush1.bf16.msra.mxu0 %v5054
    %5313 = vmatprep.mubr.bf16.mxu0 %v4520
    %5314 = vmatmul.mubr.bf16.gmra.mrb[0].mxu0 %v4500
    %v5315 = vpop.f32.mrb[0].mxu0
    %v5316 = vadd.f32 %v5251, %v5315
    %v5317 = vpop.f32.mrb[0].mxu0
    %v5318 = vpop.f32.mrb[0].mxu0
    %v5319 = vadd.f32 %v5254, %v5318
    %v5320 = vpop.f32.mrb[0].mxu0
    %5321 = vmatprep.mubr.bf16.mxu0 %v4521
    %5322 = vmatmul.mubr.bf16.gmra.mrb[0].mxu0 %v4501
    %v5323 = vpop.f32.mrb[0].mxu0
    %v5324 = vadd.f32 %v5259, %v5323
    %v5325 = vpop.f32.mrb[0].mxu0
    %v5326 = vpop.f32.mrb[0].mxu0
    %v5327 = vadd.f32 %v5262, %v5326
    %v5328 = vpop.f32.mrb[0].mxu0
    %5329 = vmatprep.mubr.bf16.mxu0 %v4522
    %5330 = vmatmul.mubr.bf16.gmra.mrb[0].mxu0 %v4502
    %v5331 = vpop.f32.mrb[0].mxu0
    %v5332 = vadd.f32 %v5267, %v5331
    %v5333 = vpop.f32.mrb[0].mxu0
    %v5334 = vpop.f32.mrb[0].mxu0
    %v5335 = vadd.f32 %v5270, %v5334
    %v5336 = vpop.f32.mrb[0].mxu0
    %5337 = vmatprep.mubr.bf16.mxu0 %v4523
    %5338 = vmatmul.mubr.bf16.gmra.mrb[0].mxu0 %v4503
    %v5339 = vpop.f32.mrb[0].mxu0
    %v5340 = vadd.f32 %v5275, %v5339
    %v5341 = vpop.f32.mrb[0].mxu0
    %v5342 = vpop.f32.mrb[0].mxu0
    %v5343 = vadd.f32 %v5278, %v5342
    %v5344 = vpop.f32.mrb[0].mxu0
    %5345 = vdwg.mxu0
    %5346 = vmatprep.subr.bf16.mxu0 0
    %5347 = vmatpush1.bf16.msra.mxu0 %v5055
    %5348 = vmatprep.subr.bf16.mxu0 0
    %5349 = vmatpush1.bf16.msra.mxu0 %v5056
    %5350 = vmatprep.subr.bf16.mxu0 0
    %5351 = vmatpush1.bf16.msra.mxu0 %v5057
    %5352 = vmatprep.subr.bf16.mxu0 0
    %5353 = vmatpush1.bf16.msra.mxu0 %v5058
    %5354 = vmatprep.subr.bf16.mxu0 0
    %5355 = vmatpush1.bf16.msra.mxu0 %v5059
    %5356 = vmatprep.subr.bf16.mxu0 0
    %5357 = vmatpush1.bf16.msra.mxu0 %v5060
    %5358 = vmatprep.subr.bf16.mxu0 0
    %5359 = vmatpush1.bf16.msra.mxu0 %v5061
    %5360 = vmatprep.subr.bf16.mxu0 0
    %5361 = vmatpush1.bf16.msra.mxu0 %v5062
    %5362 = vmatprep.subr.bf16.mxu0 0
    %5363 = vmatpush1.bf16.msra.mxu0 %v5063
    %5364 = vmatprep.subr.bf16.mxu0 0
    %5365 = vmatpush1.bf16.msra.mxu0 %v5064
    %5366 = vmatprep.subr.bf16.mxu0 0
    %5367 = vmatpush1.bf16.msra.mxu0 %v5065
    %5368 = vmatprep.subr.bf16.mxu0 0
    %5369 = vmatpush1.bf16.msra.mxu0 %v5066
    %5370 = vmatprep.subr.bf16.mxu0 0
    %5371 = vmatpush1.bf16.msra.mxu0 %v5067
    %5372 = vmatprep.subr.bf16.mxu0 0
    %5373 = vmatpush1.bf16.msra.mxu0 %v5068
    %5374 = vmatprep.subr.bf16.mxu0 0
    %5375 = vmatpush1.bf16.msra.mxu0 %v5069
    %5376 = vmatprep.subr.bf16.mxu0 0
    %5377 = vmatpush1.bf16.msra.mxu0 %v5070
    %5378 = vmatprep.mubr.bf16.mxu0 %v4562
    %5379 = vmatmul.mubr.bf16.gmra.mrb[0].mxu0 %v4541
    %v5380 = vpop.f32.mrb[0].mxu0
    %v5381 = vadd.f32 %v5316, %v5380
    %v5382 = vpop.f32.mrb[0].mxu0
    %v5383 = vpop.f32.mrb[0].mxu0
    %v5384 = vadd.f32 %v5319, %v5383
    %v5385 = vpop.f32.mrb[0].mxu0
    %5386 = vmatprep.mubr.bf16.mxu0 %v4563
    %5387 = vmatmul.mubr.bf16.gmra.mrb[0].mxu0 %v4542
    %v5388 = vpop.f32.mrb[0].mxu0
    %v5389 = vadd.f32 %v5324, %v5388
    %v5390 = vpop.f32.mrb[0].mxu0
    %v5391 = vpop.f32.mrb[0].mxu0
    %v5392 = vadd.f32 %v5327, %v5391
    %v5393 = vpop.f32.mrb[0].mxu0
    %5394 = vmatprep.mubr.bf16.mxu0 %v4564
    %5395 = vmatmul.mubr.bf16.gmra.mrb[0].mxu0 %v4543
    %v5396 = vpop.f32.mrb[0].mxu0
    %v5397 = vadd.f32 %v5332, %v5396
    %v5398 = vpop.f32.mrb[0].mxu0
    %v5399 = vpop.f32.mrb[0].mxu0
    %v5400 = vadd.f32 %v5335, %v5399
    %v5401 = vpop.f32.mrb[0].mxu0
    %5402 = vmatprep.mubr.bf16.mxu0 %v4565
    %5403 = vmatmul.mubr.bf16.gmra.mrb[0].mxu0 %v4544
    %v5404 = vpop.f32.mrb[0].mxu0
    %v5405 = vadd.f32 %v5340, %v5404
    %v5406 = vpop.f32.mrb[0].mxu0
    %v5407 = vpop.f32.mrb[0].mxu0
    %v5408 = vadd.f32 %v5343, %v5407
    %v5409 = vpop.f32.mrb[0].mxu0
    %5410 = vdwg.mxu0
    %5411 = vmatprep.subr.bf16.mxu0 0
    %5412 = vmatpush1.bf16.msra.mxu0 %v5071
    %5413 = vmatprep.subr.bf16.mxu0 0
    %5414 = vmatpush1.bf16.msra.mxu0 %v5072
    %5415 = vmatprep.subr.bf16.mxu0 0
    %5416 = vmatpush1.bf16.msra.mxu0 %v5073
    %5417 = vmatprep.subr.bf16.mxu0 0
    %5418 = vmatpush1.bf16.msra.mxu0 %v5074
    %5419 = vmatprep.subr.bf16.mxu0 0
    %5420 = vmatpush1.bf16.msra.mxu0 %v5075
    %5421 = vmatprep.subr.bf16.mxu0 0
    %5422 = vmatpush1.bf16.msra.mxu0 %v5076
    %5423 = vmatprep.subr.bf16.mxu0 0
    %5424 = vmatpush1.bf16.msra.mxu0 %v5077
    %5425 = vmatprep.subr.bf16.mxu0 0
    %5426 = vmatpush1.bf16.msra.mxu0 %v5078
    %5427 = vmatprep.subr.bf16.mxu0 0
    %5428 = vmatpush1.bf16.msra.mxu0 0
    %5429 = vmatprep.subr.bf16.mxu0 0
    %5430 = vmatpush1.bf16.msra.mxu0 0
    %5431 = vmatprep.subr.bf16.mxu0 0
    %5432 = vmatpush1.bf16.msra.mxu0 0
    %5433 = vmatprep.subr.bf16.mxu0 0
    %5434 = vmatpush1.bf16.msra.mxu0 0
    %5435 = vmatprep.subr.bf16.mxu0 0
    %5436 = vmatpush1.bf16.msra.mxu0 0
    %5437 = vmatprep.subr.bf16.mxu0 0
    %5438 = vmatpush1.bf16.msra.mxu0 0
    %5439 = vmatprep.subr.bf16.mxu0 0
    %5440 = vmatpush1.bf16.msra.mxu0 0
    %5441 = vmatprep.subr.bf16.mxu0 0
    %5442 = vmatpush1.bf16.msra.mxu0 0
    %5443 = vmatprep.mubr.bf16.mxu0 0
    %5444 = vmatmul.mubr.bf16.gmra.mrb[0].mxu0 %v4566
    %v5445 = vpop.f32.mrb[0].mxu0
    %v5446 = vadd.f32 %v5381, %v5445
    %v5447 = vpop.f32.mrb[0].mxu0
    %v5448 = vpop.f32.mrb[0].mxu0
    %v5449 = vadd.f32 %v5384, %v5448
    %v5450 = vpop.f32.mrb[0].mxu0
    %5451 = vmatprep.mubr.bf16.mxu0 0
    %5452 = vmatmul.mubr.bf16.gmra.mrb[0].mxu0 %v4567
    %v5453 = vpop.f32.mrb[0].mxu0
    %v5454 = vadd.f32 %v5389, %v5453
    %v5455 = vpop.f32.mrb[0].mxu0
    %v5456 = vpop.f32.mrb[0].mxu0
    %v5457 = vadd.f32 %v5392, %v5456
    %v5458 = vpop.f32.mrb[0].mxu0
    %5459 = vmatprep.mubr.bf16.mxu0 0
    %5460 = vmatmul.mubr.bf16.gmra.mrb[0].mxu0 %v4568
    %v5461 = vpop.f32.mrb[0].mxu0
    %v5462 = vadd.f32 %v5397, %v5461
    %v5463 = vpop.f32.mrb[0].mxu0
    %v5464 = vpop.f32.mrb[0].mxu0
    %v5465 = vadd.f32 %v5400, %v5464
    %v5466 = vpop.f32.mrb[0].mxu0
    %5467 = vmatprep.mubr.bf16.mxu0 0
    %5468 = vmatmul.mubr.bf16.gmra.mrb[0].mxu0 %v4569
    %v5469 = vpop.f32.mrb[0].mxu0
    %v5470 = vadd.f32 %v5405, %v5469
    %v5471 = vpop.f32.mrb[0].mxu0
    %v5472 = vpop.f32.mrb[0].mxu0
    %v5473 = vadd.f32 %v5408, %v5472
    %v5474 = vpop.f32.mrb[0].mxu0
    %5475 = vdwg.mxu0
    %v5476 = vmax.f32 %v5446, 0.0
    %v5477 = vmax.f32 %v5449, 0.0
    %v5478 = vmax.f32 %v5454, 0.0
    %v5479 = vmax.f32 %v5457, 0.0
    %v5480 = vmax.f32 %v5462, 0.0
    %v5481 = vmax.f32 %v5465, 0.0
    %v5482 = vmax.f32 %v5470, 0.0
    %v5483 = vmax.f32 %v5473, 0.0
    %v5484 = vlaneseq
    %v5485 = vshrl.u32 %v5484, 7
    %v5486 = vsub.s32 1, %v5485
    %v5487 = vrot.slane %v4714, %v5486
    %v5488 = vmul.f32 %v5476, %v5487
    %v5489 = vmul.f32 %v5477, %v5487
    %v5490 = vmul.f32 %v5478, %v5487
    %v5491 = vmul.f32 %v5479, %v5487
    %v5492 = vmul.f32 %v5480, %v5487
    %v5493 = vmul.f32 %v5481, %v5487
    %v5494 = vmul.f32 %v5482, %v5487
    %v5495 = vmul.f32 %v5483, %v5487
    %v5496 = vlaneseq
    %v5497 = vshrl.u32 %v5496, 7
    %v5498 = vsub.s32 2, %v5497
    %v5499 = vrot.slane %v4714, %v5498
    %v5500 = vadd.f32 %v5488, %v5499
    %v5501 = vadd.f32 %v5489, %v5499
    %v5502 = vadd.f32 %v5490, %v5499
    %v5503 = vadd.f32 %v5491, %v5499
    %v5504 = vadd.f32 %v5492, %v5499
    %v5505 = vadd.f32 %v5493, %v5499
    %v5506 = vadd.f32 %v5494, %v5499
    %v5507 = vadd.f32 %v5495, %v5499
    %5508 = vst [vmem:[%s7] sm:$0xff] %v5500
    %5509 = vst [vmem:[%s7 + $0x8] sm:$0xff] %v5501
    %5510 = vst [vmem:[%s7 + $0x10] sm:$0xff] %v5502
    %5511 = vst [vmem:[%s7 + $0x18] sm:$0xff] %v5503
    %5512 = vst [vmem:[%s7 + $0x20] sm:$0xff] %v5504
    %5513 = vst [vmem:[%s7 + $0x28] sm:$0xff] %v5505
    %5514 = vst [vmem:[%s7 + $0x30] sm:$0xff] %v5506
    %5515 = vst [vmem:[%s7 + $0x38] sm:$0xff] %v5507
    // Predicated region
    $region34: #{protein_cnn_forward.1} parent=1 // pred_check
      _
    $region35: #{protein_cnn_forward.1} parent=1 // pred_check_branch
      %5517 = sbr.rel (0) target = $region37
    $region36: #{protein_cnn_forward.1} parent=1 // pred_region
      _
    $region37: #{protein_cnn_forward.1} parent=1 // pred_fallthru
      _
    // Predicated region
    $region38: #{protein_cnn_forward.1} parent=1 // pred_check
      _
    $region39: #{protein_cnn_forward.1} parent=1 // pred_check_branch
      %5519 = sbr.rel (0) target = $region41
    $region40: #{protein_cnn_forward.1} parent=1 // pred_region
      _
    $region41: #{protein_cnn_forward.1} parent=1 // pred_fallthru
      _
    %5520 = vsyncpa [#allocation3], 1

</llo_original>
